<compile_context>
chip_gen: v7x
topology: tpu7x:2x2x1
jax: 0.10.0
libtpu: 0.0.40
codegen_flags: <defaults>
</compile_context>

<pallas_src>
from functools import partial

import jax
import jax.numpy as jnp
from jax import lax
from jax.experimental import pallas as pl
from jax.experimental.pallas import tpu as pltpu


def _attention_kernel(*refs, num_heads, has_qkv_bias):
    if has_qkv_bias:
        (xq_ref, xkv_ref, wq_ref, wk_ref, wv_ref,
         bq_ref, bk_ref, bv_ref, wp_ref, bp_ref, o_ref) = refs
    else:
        (xq_ref, xkv_ref, wq_ref, wk_ref, wv_ref,
         wp_ref, bp_ref, o_ref) = refs
        bq_ref = bk_ref = bv_ref = None

    xq = xq_ref[0]            # (tq, C)  bf16 query-tile rows
    xkv = xkv_ref[0]          # (N,  C)  bf16 full sequence (for K/V)
    tq, c = xq.shape

    acc = jnp.zeros((tq, c), jnp.float32)   # fused context + output projection

    for h in range(num_heads):              # H is small & static -> unrolled
        # Per-head projections: bf16 operands, f32 accumulation. Scale is already
        # folded into wq / bq host-side.
        q = jnp.dot(xq, wq_ref[h], preferred_element_type=jnp.float32)    # (tq, D)
        k = jnp.dot(xkv, wk_ref[h], preferred_element_type=jnp.float32)   # (N, D)
        v = jnp.dot(xkv, wv_ref[h], preferred_element_type=jnp.float32)   # (N, D)
        if has_qkv_bias:
            q = q + bq_ref[h]
            k = k + bk_ref[h]
            v = v + bv_ref[h]

        # Scores: contract the last axes directly (no k.T materialization).
        s = lax.dot_general(
            q.astype(jnp.bfloat16), k.astype(jnp.bfloat16),
            dimension_numbers=(((1,), (1,)), ((), ())),
            preferred_element_type=jnp.float32)                           # (tq, N)

        # Softmax in f32; reciprocal goes to the EUP slot.
        s = s - jnp.max(s, axis=-1, keepdims=True)
        p = jnp.exp(s)
        denom = jnp.sum(p, axis=-1, keepdims=True)
        p = p * pl.reciprocal(denom, approx=True)
        # TODO(synk): attn_drop omitted (p=0.0 default / eval mode => identity).

        ctx = jnp.dot(p.astype(jnp.bfloat16), v.astype(jnp.bfloat16),
                      preferred_element_type=jnp.float32)                 # (tq, D)

        # Fold this head straight into the output projection:
        #   y = concat_h(ctx_h) @ W_proj == sum_h ctx_h @ W_proj[h*D:(h+1)*D, :]
        acc = acc + jnp.dot(ctx.astype(jnp.bfloat16), wp_ref[h],
                            preferred_element_type=jnp.float32)           # (tq, C)

    # TODO(synk): proj_drop omitted (p=0.0 default / eval mode => identity).
    o_ref[0] = (acc + bp_ref[...]).astype(o_ref.dtype)                    # single aligned store


def _pick_query_tile(n):
    if n <= 256:
        return n
    for t in (256, 128):
        if n % t == 0:
            return t
    return n


def attention(x, w_qkv, b_qkv, w_proj, b_proj, num_heads, qk_scale=None):
    """x: (B, N, C). w_qkv: (C, 3C), w_proj: (C, C) in matmul form (PyTorch weight.T).
    b_qkv=None means qkv_bias=False (module default)."""
    B, N, C = x.shape
    H = num_heads
    D = C // H
    scale = qk_scale if qk_scale is not None else D ** (-0.5)
    has_qkv_bias = b_qkv is not None

    f32, bf16 = jnp.float32, jnp.bfloat16

    # Head-major weight layout so the kernel never lane-slices a wide (N, 3C) slab:
    # per-head (C, D) projection blocks and per-head (D, C) output-projection rows.
    w_q = w_qkv[:, :C].astype(f32).reshape(C, H, D).transpose(1, 0, 2) * scale
    w_k = w_qkv[:, C:2 * C].astype(f32).reshape(C, H, D).transpose(1, 0, 2)
    w_v = w_qkv[:, 2 * C:].astype(f32).reshape(C, H, D).transpose(1, 0, 2)
    w_p = w_proj.astype(f32).reshape(H, D, C)

    tq = _pick_query_tile(N)
    nq = N // tq

    args = [x.astype(bf16), x.astype(bf16),
            w_q.astype(bf16), w_k.astype(bf16), w_v.astype(bf16)]
    in_specs = [
        pl.BlockSpec((1, tq, C), lambda b, qi: (b, qi, 0)),   # query tile
        pl.BlockSpec((1, N, C), lambda b, qi: (b, 0, 0)),     # full sequence for K/V
        pl.BlockSpec((H, C, D), lambda b, qi: (0, 0, 0)),     # constant -> VMEM-resident
        pl.BlockSpec((H, C, D), lambda b, qi: (0, 0, 0)),
        pl.BlockSpec((H, C, D), lambda b, qi: (0, 0, 0)),
    ]
    if has_qkv_bias:
        args += [(b_qkv[:C].astype(f32) * scale).reshape(H, 1, D),
                 b_qkv[C:2 * C].astype(f32).reshape(H, 1, D),
                 b_qkv[2 * C:].astype(f32).reshape(H, 1, D)]
        in_specs += [pl.BlockSpec((H, 1, D), lambda b, qi: (0, 0, 0))] * 3
    args += [w_p.astype(bf16), b_proj.astype(f32).reshape(1, C)]
    in_specs += [
        pl.BlockSpec((H, D, C), lambda b, qi: (0, 0, 0)),
        pl.BlockSpec((1, C), lambda b, qi: (0, 0)),
    ]

    kernel = partial(_attention_kernel, num_heads=H, has_qkv_bias=has_qkv_bias)

    return pl.pallas_call(
        kernel,
        out_shape=jax.ShapeDtypeStruct((B, N, C), jnp.float32),
        grid=(B, nq),
        in_specs=in_specs,
        out_specs=pl.BlockSpec((1, tq, C), lambda b, qi: (b, qi, 0)),
        compiler_params=pltpu.CompilerParams(
            dimension_semantics=("parallel", "parallel")),
    )(*args)


def _reference(x, w_qkv, b_qkv, w_proj, b_proj, num_heads):
    """Pure-JAX f32 mirror of the PyTorch forward, for validation."""
    B, N, C = x.shape
    D = C // num_heads
    scale = D ** (-0.5)
    qkv = x @ w_qkv + b_qkv
    qkv = qkv.reshape(B, N, 3, num_heads, D).transpose(2, 0, 3, 1, 4)
    q, k, v = qkv[0], qkv[1], qkv[2]
    attn = jnp.einsum("bhnd,bhmd->bhnm", q, k) * scale
    attn = jax.nn.softmax(attn, axis=-1)
    out = jnp.einsum("bhnm,bhmd->bhnd", attn, v)
    out = out.transpose(0, 2, 1, 3).reshape(B, N, C)
    return out @ w_proj + b_proj


if __name__ == "__main__":
    B, N, C, H = 2, 8, 32, 8    # batch=2, seq=8, hidden=32, heads=8 -> head_dim=4

    key = jax.random.PRNGKey(0)
    k_x, k_wq, k_wp, k_bp = jax.random.split(key, 4)

    x = jax.random.normal(k_x, (B, N, C), dtype=jnp.float32)
    # Weights in matmul form (equivalent to PyTorch nn.Linear weight transposed).
    w_qkv = jax.random.normal(k_wq, (C, 3 * C), dtype=jnp.float32) * 0.1
    w_proj = jax.random.normal(k_wp, (C, C), dtype=jnp.float32) * 0.1
    b_proj = jax.random.normal(k_bp, (C,), dtype=jnp.float32) * 0.1

    # qkv_bias=False (module default) -> no qkv bias passed to the kernel.
    out = attention(x, w_qkv, None, w_proj, b_proj, num_heads=H)
    out = jax.block_until_ready(out)

    ref = _reference(x, w_qkv, jnp.zeros((3 * C,), jnp.float32), w_proj, b_proj, H)
    assert out.shape == (B, N, C), out.shape
    # bf16 MXU operands + approx reciprocal => looser tolerance vs f32 reference.
    assert jnp.allclose(out, ref, atol=5e-2, rtol=5e-2), float(jnp.abs(out - ref).max())

    print("KERNEL_OK")
</pallas_src>

<mosaic_0001>
module attributes {stable_mosaic.version = 11 : i64} {
  func.func @_attention_kernel(%arg0: i32, %arg1: i32, %arg2: memref<1x8x32xbf16, #tpu.memory_space<vmem>>, %arg3: memref<1x8x32xbf16, #tpu.memory_space<vmem>>, %arg4: memref<8x32x4xbf16, #tpu.memory_space<vmem>>, %arg5: memref<8x32x4xbf16, #tpu.memory_space<vmem>>, %arg6: memref<8x32x4xbf16, #tpu.memory_space<vmem>>, %arg7: memref<8x4x32xbf16, #tpu.memory_space<vmem>>, %arg8: memref<1x32xf32, #tpu.memory_space<vmem>>, %arg9: memref<1x8x32xf32, #tpu.memory_space<vmem>>) attributes {dimension_semantics = [#tpu.dimension_semantics<parallel>, #tpu.dimension_semantics<parallel>], iteration_bounds = array<i64: 2, 1>, scalar_prefetch = 0 : i64, scratch_operands = 0 : i64, tpu.core_type = #tpu.core_type<tc>, window_params = [{transform_indices = @transform_0, window_bounds = array<i64: 1, 8, 32>}, {transform_indices = @transform_1, window_bounds = array<i64: 1, 8, 32>}, {pipeline_mode = #tpu.pipeline_mode<synchronous>, transform_indices = @transform_2, window_bounds = array<i64: 8, 32, 4>}, {pipeline_mode = #tpu.pipeline_mode<synchronous>, transform_indices = @transform_3, window_bounds = array<i64: 8, 32, 4>}, {pipeline_mode = #tpu.pipeline_mode<synchronous>, transform_indices = @transform_4, window_bounds = array<i64: 8, 32, 4>}, {pipeline_mode = #tpu.pipeline_mode<synchronous>, transform_indices = @transform_5, window_bounds = array<i64: 8, 4, 32>}, {pipeline_mode = #tpu.pipeline_mode<synchronous>, transform_indices = @transform_6, window_bounds = array<i64: 1, 32>}, {transform_indices = @transform_7, window_bounds = array<i64: 1, 8, 32>}]} {
    %c0 = arith.constant 0 : index
    %c0_0 = arith.constant 0 : index
    %c0_1 = arith.constant 0 : index
    %0 = vector.load %arg2[%c0, %c0_0, %c0_1] : memref<1x8x32xbf16, #tpu.memory_space<vmem>>, vector<1x8x32xbf16>
    %1 = vector.shape_cast %0 : vector<1x8x32xbf16> to vector<8x32xbf16>
    %c0_2 = arith.constant 0 : index
    %c0_3 = arith.constant 0 : index
    %c0_4 = arith.constant 0 : index
    %2 = vector.load %arg3[%c0_2, %c0_3, %c0_4] : memref<1x8x32xbf16, #tpu.memory_space<vmem>>, vector<1x8x32xbf16>
    %3 = vector.shape_cast %2 : vector<1x8x32xbf16> to vector<8x32xbf16>
    %cst = arith.constant 0.000000e+00 : f32
    %4 = vector.broadcast %cst : f32 to vector<8x32xf32>
    %c0_5 = arith.constant 0 : index
    %c0_6 = arith.constant 0 : index
    %c0_7 = arith.constant 0 : index
    %5 = vector.load %arg4[%c0_5, %c0_6, %c0_7] : memref<8x32x4xbf16, #tpu.memory_space<vmem>>, vector<1x32x4xbf16>
    %6 = vector.shape_cast %5 : vector<1x32x4xbf16> to vector<32x4xbf16>
    %cst_8 = arith.constant dense<0.000000e+00> : vector<8x4xf32>
    %7 = tpu.matmul %1, %6, %cst_8 {dimension_numbers = #tpu.dot_dimension_numbers<[1], [0], [0], [1], [0, 0, 1, 1], [], []>} : vector<8x32xbf16>, vector<32x4xbf16>, vector<8x4xf32> -> vector<8x4xf32>
    %c0_9 = arith.constant 0 : index
    %c0_10 = arith.constant 0 : index
    %c0_11 = arith.constant 0 : index
    %8 = vector.load %arg5[%c0_9, %c0_10, %c0_11] : memref<8x32x4xbf16, #tpu.memory_space<vmem>>, vector<1x32x4xbf16>
    %9 = vector.shape_cast %8 : vector<1x32x4xbf16> to vector<32x4xbf16>
    %cst_12 = arith.constant dense<0.000000e+00> : vector<8x4xf32>
    %10 = tpu.matmul %3, %9, %cst_12 {dimension_numbers = #tpu.dot_dimension_numbers<[1], [0], [0], [1], [0, 0, 1, 1], [], []>} : vector<8x32xbf16>, vector<32x4xbf16>, vector<8x4xf32> -> vector<8x4xf32>
    %c0_13 = arith.constant 0 : index
    %c0_14 = arith.constant 0 : index
    %c0_15 = arith.constant 0 : index
    %11 = vector.load %arg6[%c0_13, %c0_14, %c0_15] : memref<8x32x4xbf16, #tpu.memory_space<vmem>>, vector<1x32x4xbf16>
    %12 = vector.shape_cast %11 : vector<1x32x4xbf16> to vector<32x4xbf16>
    %cst_16 = arith.constant dense<0.000000e+00> : vector<8x4xf32>
    %13 = tpu.matmul %3, %12, %cst_16 {dimension_numbers = #tpu.dot_dimension_numbers<[1], [0], [0], [1], [0, 0, 1, 1], [], []>} : vector<8x32xbf16>, vector<32x4xbf16>, vector<8x4xf32> -> vector<8x4xf32>
    %14 = arith.truncf %7 : vector<8x4xf32> to vector<8x4xbf16>
    %15 = arith.truncf %10 : vector<8x4xf32> to vector<8x4xbf16>
    %cst_17 = arith.constant dense<0.000000e+00> : vector<8x8xf32>
    %16 = tpu.matmul %14, %15, %cst_17 {dimension_numbers = #tpu.dot_dimension_numbers<[1], [1], [0], [0], [0, 0, 1, 0], [], []>} : vector<8x4xbf16>, vector<8x4xbf16>, vector<8x8xf32> -> vector<8x8xf32>
    %cst_18 = arith.constant dense<0xFF800000> : vector<8xf32>
    %17 = vector.multi_reduction <maximumf>, %16, %cst_18 [1] : vector<8x8xf32> to vector<8xf32>
    %18 = vector.shape_cast %17 : vector<8xf32> to vector<8x1xf32>
    %19 = vector.broadcast %18 : vector<8x1xf32> to vector<8x8xf32>
    %20 = arith.subf %16, %19 : vector<8x8xf32>
    %21 = math.exp %20 : vector<8x8xf32>
    %cst_19 = arith.constant dense<0.000000e+00> : vector<8xf32>
    %22 = vector.multi_reduction <add>, %21, %cst_19 [1] : vector<8x8xf32> to vector<8xf32>
    %23 = vector.shape_cast %22 : vector<8xf32> to vector<8x1xf32>
    %24 = tpu.reciprocal %23 {approx = true} : vector<8x1xf32> -> vector<8x1xf32>
    %25 = vector.broadcast %24 : vector<8x1xf32> to vector<8x8xf32>
    %26 = arith.mulf %21, %25 : vector<8x8xf32>
    %27 = arith.truncf %26 : vector<8x8xf32> to vector<8x8xbf16>
    %28 = arith.truncf %13 : vector<8x4xf32> to vector<8x4xbf16>
    %cst_20 = arith.constant dense<0.000000e+00> : vector<8x4xf32>
    %29 = tpu.matmul %27, %28, %cst_20 {dimension_numbers = #tpu.dot_dimension_numbers<[1], [0], [0], [1], [0, 0, 1, 1], [], []>} : vector<8x8xbf16>, vector<8x4xbf16>, vector<8x4xf32> -> vector<8x4xf32>
    %30 = arith.truncf %29 : vector<8x4xf32> to vector<8x4xbf16>
    %c0_21 = arith.constant 0 : index
    %c0_22 = arith.constant 0 : index
    %c0_23 = arith.constant 0 : index
    %31 = vector.load %arg7[%c0_21, %c0_22, %c0_23] : memref<8x4x32xbf16, #tpu.memory_space<vmem>>, vector<1x4x32xbf16>
    %32 = vector.shape_cast %31 : vector<1x4x32xbf16> to vector<4x32xbf16>
    %cst_24 = arith.constant dense<0.000000e+00> : vector<8x32xf32>
    %33 = tpu.matmul %30, %32, %cst_24 {dimension_numbers = #tpu.dot_dimension_numbers<[1], [0], [0], [1], [0, 0, 1, 1], [], []>} : vector<8x4xbf16>, vector<4x32xbf16>, vector<8x32xf32> -> vector<8x32xf32>
    %34 = arith.addf %4, %33 : vector<8x32xf32>
    %c1 = arith.constant 1 : index
    %c0_25 = arith.constant 0 : index
    %c0_26 = arith.constant 0 : index
    %35 = vector.load %arg4[%c1, %c0_25, %c0_26] : memref<8x32x4xbf16, #tpu.memory_space<vmem>>, vector<1x32x4xbf16>
    %36 = vector.shape_cast %35 : vector<1x32x4xbf16> to vector<32x4xbf16>
    %cst_27 = arith.constant dense<0.000000e+00> : vector<8x4xf32>
    %37 = tpu.matmul %1, %36, %cst_27 {dimension_numbers = #tpu.dot_dimension_numbers<[1], [0], [0], [1], [0, 0, 1, 1], [], []>} : vector<8x32xbf16>, vector<32x4xbf16>, vector<8x4xf32> -> vector<8x4xf32>
    %c1_28 = arith.constant 1 : index
    %c0_29 = arith.constant 0 : index
    %c0_30 = arith.constant 0 : index
    %38 = vector.load %arg5[%c1_28, %c0_29, %c0_30] : memref<8x32x4xbf16, #tpu.memory_space<vmem>>, vector<1x32x4xbf16>
    %39 = vector.shape_cast %38 : vector<1x32x4xbf16> to vector<32x4xbf16>
    %cst_31 = arith.constant dense<0.000000e+00> : vector<8x4xf32>
    %40 = tpu.matmul %3, %39, %cst_31 {dimension_numbers = #tpu.dot_dimension_numbers<[1], [0], [0], [1], [0, 0, 1, 1], [], []>} : vector<8x32xbf16>, vector<32x4xbf16>, vector<8x4xf32> -> vector<8x4xf32>
    %c1_32 = arith.constant 1 : index
    %c0_33 = arith.constant 0 : index
    %c0_34 = arith.constant 0 : index
    %41 = vector.load %arg6[%c1_32, %c0_33, %c0_34] : memref<8x32x4xbf16, #tpu.memory_space<vmem>>, vector<1x32x4xbf16>
    %42 = vector.shape_cast %41 : vector<1x32x4xbf16> to vector<32x4xbf16>
    %cst_35 = arith.constant dense<0.000000e+00> : vector<8x4xf32>
    %43 = tpu.matmul %3, %42, %cst_35 {dimension_numbers = #tpu.dot_dimension_numbers<[1], [0], [0], [1], [0, 0, 1, 1], [], []>} : vector<8x32xbf16>, vector<32x4xbf16>, vector<8x4xf32> -> vector<8x4xf32>
    %44 = arith.truncf %37 : vector<8x4xf32> to vector<8x4xbf16>
    %45 = arith.truncf %40 : vector<8x4xf32> to vector<8x4xbf16>
    %cst_36 = arith.constant dense<0.000000e+00> : vector<8x8xf32>
    %46 = tpu.matmul %44, %45, %cst_36 {dimension_numbers = #tpu.dot_dimension_numbers<[1], [1], [0], [0], [0, 0, 1, 0], [], []>} : vector<8x4xbf16>, vector<8x4xbf16>, vector<8x8xf32> -> vector<8x8xf32>
    %cst_37 = arith.constant dense<0xFF800000> : vector<8xf32>
    %47 = vector.multi_reduction <maximumf>, %46, %cst_37 [1] : vector<8x8xf32> to vector<8xf32>
    %48 = vector.shape_cast %47 : vector<8xf32> to vector<8x1xf32>
    %49 = vector.broadcast %48 : vector<8x1xf32> to vector<8x8xf32>
    %50 = arith.subf %46, %49 : vector<8x8xf32>
    %51 = math.exp %50 : vector<8x8xf32>
    %cst_38 = arith.constant dense<0.000000e+00> : vector<8xf32>
    %52 = vector.multi_reduction <add>, %51, %cst_38 [1] : vector<8x8xf32> to vector<8xf32>
    %53 = vector.shape_cast %52 : vector<8xf32> to vector<8x1xf32>
    %54 = tpu.reciprocal %53 {approx = true} : vector<8x1xf32> -> vector<8x1xf32>
    %55 = vector.broadcast %54 : vector<8x1xf32> to vector<8x8xf32>
    %56 = arith.mulf %51, %55 : vector<8x8xf32>
    %57 = arith.truncf %56 : vector<8x8xf32> to vector<8x8xbf16>
    %58 = arith.truncf %43 : vector<8x4xf32> to vector<8x4xbf16>
    %cst_39 = arith.constant dense<0.000000e+00> : vector<8x4xf32>
    %59 = tpu.matmul %57, %58, %cst_39 {dimension_numbers = #tpu.dot_dimension_numbers<[1], [0], [0], [1], [0, 0, 1, 1], [], []>} : vector<8x8xbf16>, vector<8x4xbf16>, vector<8x4xf32> -> vector<8x4xf32>
    %60 = arith.truncf %59 : vector<8x4xf32> to vector<8x4xbf16>
    %c1_40 = arith.constant 1 : index
    %c0_41 = arith.constant 0 : index
    %c0_42 = arith.constant 0 : index
    %61 = vector.load %arg7[%c1_40, %c0_41, %c0_42] : memref<8x4x32xbf16, #tpu.memory_space<vmem>>, vector<1x4x32xbf16>
    %62 = vector.shape_cast %61 : vector<1x4x32xbf16> to vector<4x32xbf16>
    %cst_43 = arith.constant dense<0.000000e+00> : vector<8x32xf32>
    %63 = tpu.matmul %60, %62, %cst_43 {dimension_numbers = #tpu.dot_dimension_numbers<[1], [0], [0], [1], [0, 0, 1, 1], [], []>} : vector<8x4xbf16>, vector<4x32xbf16>, vector<8x32xf32> -> vector<8x32xf32>
    %64 = arith.addf %34, %63 : vector<8x32xf32>
    %c2 = arith.constant 2 : index
    %c0_44 = arith.constant 0 : index
    %c0_45 = arith.constant 0 : index
    %65 = vector.load %arg4[%c2, %c0_44, %c0_45] : memref<8x32x4xbf16, #tpu.memory_space<vmem>>, vector<1x32x4xbf16>
    %66 = vector.shape_cast %65 : vector<1x32x4xbf16> to vector<32x4xbf16>
    %cst_46 = arith.constant dense<0.000000e+00> : vector<8x4xf32>
    %67 = tpu.matmul %1, %66, %cst_46 {dimension_numbers = #tpu.dot_dimension_numbers<[1], [0], [0], [1], [0, 0, 1, 1], [], []>} : vector<8x32xbf16>, vector<32x4xbf16>, vector<8x4xf32> -> vector<8x4xf32>
    %c2_47 = arith.constant 2 : index
    %c0_48 = arith.constant 0 : index
    %c0_49 = arith.constant 0 : index
    %68 = vector.load %arg5[%c2_47, %c0_48, %c0_49] : memref<8x32x4xbf16, #tpu.memory_space<vmem>>, vector<1x32x4xbf16>
    %69 = vector.shape_cast %68 : vector<1x32x4xbf16> to vector<32x4xbf16>
    %cst_50 = arith.constant dense<0.000000e+00> : vector<8x4xf32>
    %70 = tpu.matmul %3, %69, %cst_50 {dimension_numbers = #tpu.dot_dimension_numbers<[1], [0], [0], [1], [0, 0, 1, 1], [], []>} : vector<8x32xbf16>, vector<32x4xbf16>, vector<8x4xf32> -> vector<8x4xf32>
    %c2_51 = arith.constant 2 : index
    %c0_52 = arith.constant 0 : index
    %c0_53 = arith.constant 0 : index
    %71 = vector.load %arg6[%c2_51, %c0_52, %c0_53] : memref<8x32x4xbf16, #tpu.memory_space<vmem>>, vector<1x32x4xbf16>
    %72 = vector.shape_cast %71 : vector<1x32x4xbf16> to vector<32x4xbf16>
    %cst_54 = arith.constant dense<0.000000e+00> : vector<8x4xf32>
    %73 = tpu.matmul %3, %72, %cst_54 {dimension_numbers = #tpu.dot_dimension_numbers<[1], [0], [0], [1], [0, 0, 1, 1], [], []>} : vector<8x32xbf16>, vector<32x4xbf16>, vector<8x4xf32> -> vector<8x4xf32>
    %74 = arith.truncf %67 : vector<8x4xf32> to vector<8x4xbf16>
    %75 = arith.truncf %70 : vector<8x4xf32> to vector<8x4xbf16>
    %cst_55 = arith.constant dense<0.000000e+00> : vector<8x8xf32>
    %76 = tpu.matmul %74, %75, %cst_55 {dimension_numbers = #tpu.dot_dimension_numbers<[1], [1], [0], [0], [0, 0, 1, 0], [], []>} : vector<8x4xbf16>, vector<8x4xbf16>, vector<8x8xf32> -> vector<8x8xf32>
    %cst_56 = arith.constant dense<0xFF800000> : vector<8xf32>
    %77 = vector.multi_reduction <maximumf>, %76, %cst_56 [1] : vector<8x8xf32> to vector<8xf32>
    %78 = vector.shape_cast %77 : vector<8xf32> to vector<8x1xf32>
    %79 = vector.broadcast %78 : vector<8x1xf32> to vector<8x8xf32>
    %80 = arith.subf %76, %79 : vector<8x8xf32>
    %81 = math.exp %80 : vector<8x8xf32>
    %cst_57 = arith.constant dense<0.000000e+00> : vector<8xf32>
    %82 = vector.multi_reduction <add>, %81, %cst_57 [1] : vector<8x8xf32> to vector<8xf32>
    %83 = vector.shape_cast %82 : vector<8xf32> to vector<8x1xf32>
    %84 = tpu.reciprocal %83 {approx = true} : vector<8x1xf32> -> vector<8x1xf32>
    %85 = vector.broadcast %84 : vector<8x1xf32> to vector<8x8xf32>
    %86 = arith.mulf %81, %85 : vector<8x8xf32>
    %87 = arith.truncf %86 : vector<8x8xf32> to vector<8x8xbf16>
    %88 = arith.truncf %73 : vector<8x4xf32> to vector<8x4xbf16>
    %cst_58 = arith.constant dense<0.000000e+00> : vector<8x4xf32>
    %89 = tpu.matmul %87, %88, %cst_58 {dimension_numbers = #tpu.dot_dimension_numbers<[1], [0], [0], [1], [0, 0, 1, 1], [], []>} : vector<8x8xbf16>, vector<8x4xbf16>, vector<8x4xf32> -> vector<8x4xf32>
    %90 = arith.truncf %89 : vector<8x4xf32> to vector<8x4xbf16>
    %c2_59 = arith.constant 2 : index
    %c0_60 = arith.constant 0 : index
    %c0_61 = arith.constant 0 : index
    %91 = vector.load %arg7[%c2_59, %c0_60, %c0_61] : memref<8x4x32xbf16, #tpu.memory_space<vmem>>, vector<1x4x32xbf16>
    %92 = vector.shape_cast %91 : vector<1x4x32xbf16> to vector<4x32xbf16>
    %cst_62 = arith.constant dense<0.000000e+00> : vector<8x32xf32>
    %93 = tpu.matmul %90, %92, %cst_62 {dimension_numbers = #tpu.dot_dimension_numbers<[1], [0], [0], [1], [0, 0, 1, 1], [], []>} : vector<8x4xbf16>, vector<4x32xbf16>, vector<8x32xf32> -> vector<8x32xf32>
    %94 = arith.addf %64, %93 : vector<8x32xf32>
    %c3 = arith.constant 3 : index
    %c0_63 = arith.constant 0 : index
    %c0_64 = arith.constant 0 : index
    %95 = vector.load %arg4[%c3, %c0_63, %c0_64] : memref<8x32x4xbf16, #tpu.memory_space<vmem>>, vector<1x32x4xbf16>
    %96 = vector.shape_cast %95 : vector<1x32x4xbf16> to vector<32x4xbf16>
    %cst_65 = arith.constant dense<0.000000e+00> : vector<8x4xf32>
    %97 = tpu.matmul %1, %96, %cst_65 {dimension_numbers = #tpu.dot_dimension_numbers<[1], [0], [0], [1], [0, 0, 1, 1], [], []>} : vector<8x32xbf16>, vector<32x4xbf16>, vector<8x4xf32> -> vector<8x4xf32>
    %c3_66 = arith.constant 3 : index
    %c0_67 = arith.constant 0 : index
    %c0_68 = arith.constant 0 : index
    %98 = vector.load %arg5[%c3_66, %c0_67, %c0_68] : memref<8x32x4xbf16, #tpu.memory_space<vmem>>, vector<1x32x4xbf16>
    %99 = vector.shape_cast %98 : vector<1x32x4xbf16> to vector<32x4xbf16>
    %cst_69 = arith.constant dense<0.000000e+00> : vector<8x4xf32>
    %100 = tpu.matmul %3, %99, %cst_69 {dimension_numbers = #tpu.dot_dimension_numbers<[1], [0], [0], [1], [0, 0, 1, 1], [], []>} : vector<8x32xbf16>, vector<32x4xbf16>, vector<8x4xf32> -> vector<8x4xf32>
    %c3_70 = arith.constant 3 : index
    %c0_71 = arith.constant 0 : index
    %c0_72 = arith.constant 0 : index
    %101 = vector.load %arg6[%c3_70, %c0_71, %c0_72] : memref<8x32x4xbf16, #tpu.memory_space<vmem>>, vector<1x32x4xbf16>
    %102 = vector.shape_cast %101 : vector<1x32x4xbf16> to vector<32x4xbf16>
    %cst_73 = arith.constant dense<0.000000e+00> : vector<8x4xf32>
    %103 = tpu.matmul %3, %102, %cst_73 {dimension_numbers = #tpu.dot_dimension_numbers<[1], [0], [0], [1], [0, 0, 1, 1], [], []>} : vector<8x32xbf16>, vector<32x4xbf16>, vector<8x4xf32> -> vector<8x4xf32>
    %104 = arith.truncf %97 : vector<8x4xf32> to vector<8x4xbf16>
    %105 = arith.truncf %100 : vector<8x4xf32> to vector<8x4xbf16>
    %cst_74 = arith.constant dense<0.000000e+00> : vector<8x8xf32>
    %106 = tpu.matmul %104, %105, %cst_74 {dimension_numbers = #tpu.dot_dimension_numbers<[1], [1], [0], [0], [0, 0, 1, 0], [], []>} : vector<8x4xbf16>, vector<8x4xbf16>, vector<8x8xf32> -> vector<8x8xf32>
    %cst_75 = arith.constant dense<0xFF800000> : vector<8xf32>
    %107 = vector.multi_reduction <maximumf>, %106, %cst_75 [1] : vector<8x8xf32> to vector<8xf32>
    %108 = vector.shape_cast %107 : vector<8xf32> to vector<8x1xf32>
    %109 = vector.broadcast %108 : vector<8x1xf32> to vector<8x8xf32>
    %110 = arith.subf %106, %109 : vector<8x8xf32>
    %111 = math.exp %110 : vector<8x8xf32>
    %cst_76 = arith.constant dense<0.000000e+00> : vector<8xf32>
    %112 = vector.multi_reduction <add>, %111, %cst_76 [1] : vector<8x8xf32> to vector<8xf32>
    %113 = vector.shape_cast %112 : vector<8xf32> to vector<8x1xf32>
    %114 = tpu.reciprocal %113 {approx = true} : vector<8x1xf32> -> vector<8x1xf32>
    %115 = vector.broadcast %114 : vector<8x1xf32> to vector<8x8xf32>
    %116 = arith.mulf %111, %115 : vector<8x8xf32>
    %117 = arith.truncf %116 : vector<8x8xf32> to vector<8x8xbf16>
    %118 = arith.truncf %103 : vector<8x4xf32> to vector<8x4xbf16>
    %cst_77 = arith.constant dense<0.000000e+00> : vector<8x4xf32>
    %119 = tpu.matmul %117, %118, %cst_77 {dimension_numbers = #tpu.dot_dimension_numbers<[1], [0], [0], [1], [0, 0, 1, 1], [], []>} : vector<8x8xbf16>, vector<8x4xbf16>, vector<8x4xf32> -> vector<8x4xf32>
    %120 = arith.truncf %119 : vector<8x4xf32> to vector<8x4xbf16>
    %c3_78 = arith.constant 3 : index
    %c0_79 = arith.constant 0 : index
    %c0_80 = arith.constant 0 : index
    %121 = vector.load %arg7[%c3_78, %c0_79, %c0_80] : memref<8x4x32xbf16, #tpu.memory_space<vmem>>, vector<1x4x32xbf16>
    %122 = vector.shape_cast %121 : vector<1x4x32xbf16> to vector<4x32xbf16>
    %cst_81 = arith.constant dense<0.000000e+00> : vector<8x32xf32>
    %123 = tpu.matmul %120, %122, %cst_81 {dimension_numbers = #tpu.dot_dimension_numbers<[1], [0], [0], [1], [0, 0, 1, 1], [], []>} : vector<8x4xbf16>, vector<4x32xbf16>, vector<8x32xf32> -> vector<8x32xf32>
    %124 = arith.addf %94, %123 : vector<8x32xf32>
    %c4 = arith.constant 4 : index
    %c0_82 = arith.constant 0 : index
    %c0_83 = arith.constant 0 : index
    %125 = vector.load %arg4[%c4, %c0_82, %c0_83] : memref<8x32x4xbf16, #tpu.memory_space<vmem>>, vector<1x32x4xbf16>
    %126 = vector.shape_cast %125 : vector<1x32x4xbf16> to vector<32x4xbf16>
    %cst_84 = arith.constant dense<0.000000e+00> : vector<8x4xf32>
    %127 = tpu.matmul %1, %126, %cst_84 {dimension_numbers = #tpu.dot_dimension_numbers<[1], [0], [0], [1], [0, 0, 1, 1], [], []>} : vector<8x32xbf16>, vector<32x4xbf16>, vector<8x4xf32> -> vector<8x4xf32>
    %c4_85 = arith.constant 4 : index
    %c0_86 = arith.constant 0 : index
    %c0_87 = arith.constant 0 : index
    %128 = vector.load %arg5[%c4_85, %c0_86, %c0_87] : memref<8x32x4xbf16, #tpu.memory_space<vmem>>, vector<1x32x4xbf16>
    %129 = vector.shape_cast %128 : vector<1x32x4xbf16> to vector<32x4xbf16>
    %cst_88 = arith.constant dense<0.000000e+00> : vector<8x4xf32>
    %130 = tpu.matmul %3, %129, %cst_88 {dimension_numbers = #tpu.dot_dimension_numbers<[1], [0], [0], [1], [0, 0, 1, 1], [], []>} : vector<8x32xbf16>, vector<32x4xbf16>, vector<8x4xf32> -> vector<8x4xf32>
    %c4_89 = arith.constant 4 : index
    %c0_90 = arith.constant 0 : index
    %c0_91 = arith.constant 0 : index
    %131 = vector.load %arg6[%c4_89, %c0_90, %c0_91] : memref<8x32x4xbf16, #tpu.memory_space<vmem>>, vector<1x32x4xbf16>
    %132 = vector.shape_cast %131 : vector<1x32x4xbf16> to vector<32x4xbf16>
    %cst_92 = arith.constant dense<0.000000e+00> : vector<8x4xf32>
    %133 = tpu.matmul %3, %132, %cst_92 {dimension_numbers = #tpu.dot_dimension_numbers<[1], [0], [0], [1], [0, 0, 1, 1], [], []>} : vector<8x32xbf16>, vector<32x4xbf16>, vector<8x4xf32> -> vector<8x4xf32>
    %134 = arith.truncf %127 : vector<8x4xf32> to vector<8x4xbf16>
    %135 = arith.truncf %130 : vector<8x4xf32> to vector<8x4xbf16>
    %cst_93 = arith.constant dense<0.000000e+00> : vector<8x8xf32>
    %136 = tpu.matmul %134, %135, %cst_93 {dimension_numbers = #tpu.dot_dimension_numbers<[1], [1], [0], [0], [0, 0, 1, 0], [], []>} : vector<8x4xbf16>, vector<8x4xbf16>, vector<8x8xf32> -> vector<8x8xf32>
    %cst_94 = arith.constant dense<0xFF800000> : vector<8xf32>
    %137 = vector.multi_reduction <maximumf>, %136, %cst_94 [1] : vector<8x8xf32> to vector<8xf32>
    %138 = vector.shape_cast %137 : vector<8xf32> to vector<8x1xf32>
    %139 = vector.broadcast %138 : vector<8x1xf32> to vector<8x8xf32>
    %140 = arith.subf %136, %139 : vector<8x8xf32>
    %141 = math.exp %140 : vector<8x8xf32>
    %cst_95 = arith.constant dense<0.000000e+00> : vector<8xf32>
    %142 = vector.multi_reduction <add>, %141, %cst_95 [1] : vector<8x8xf32> to vector<8xf32>
    %143 = vector.shape_cast %142 : vector<8xf32> to vector<8x1xf32>
    %144 = tpu.reciprocal %143 {approx = true} : vector<8x1xf32> -> vector<8x1xf32>
    %145 = vector.broadcast %144 : vector<8x1xf32> to vector<8x8xf32>
    %146 = arith.mulf %141, %145 : vector<8x8xf32>
    %147 = arith.truncf %146 : vector<8x8xf32> to vector<8x8xbf16>
    %148 = arith.truncf %133 : vector<8x4xf32> to vector<8x4xbf16>
    %cst_96 = arith.constant dense<0.000000e+00> : vector<8x4xf32>
    %149 = tpu.matmul %147, %148, %cst_96 {dimension_numbers = #tpu.dot_dimension_numbers<[1], [0], [0], [1], [0, 0, 1, 1], [], []>} : vector<8x8xbf16>, vector<8x4xbf16>, vector<8x4xf32> -> vector<8x4xf32>
    %150 = arith.truncf %149 : vector<8x4xf32> to vector<8x4xbf16>
    %c4_97 = arith.constant 4 : index
    %c0_98 = arith.constant 0 : index
    %c0_99 = arith.constant 0 : index
    %151 = vector.load %arg7[%c4_97, %c0_98, %c0_99] : memref<8x4x32xbf16, #tpu.memory_space<vmem>>, vector<1x4x32xbf16>
    %152 = vector.shape_cast %151 : vector<1x4x32xbf16> to vector<4x32xbf16>
    %cst_100 = arith.constant dense<0.000000e+00> : vector<8x32xf32>
    %153 = tpu.matmul %150, %152, %cst_100 {dimension_numbers = #tpu.dot_dimension_numbers<[1], [0], [0], [1], [0, 0, 1, 1], [], []>} : vector<8x4xbf16>, vector<4x32xbf16>, vector<8x32xf32> -> vector<8x32xf32>
    %154 = arith.addf %124, %153 : vector<8x32xf32>
    %c5 = arith.constant 5 : index
    %c0_101 = arith.constant 0 : index
    %c0_102 = arith.constant 0 : index
    %155 = vector.load %arg4[%c5, %c0_101, %c0_102] : memref<8x32x4xbf16, #tpu.memory_space<vmem>>, vector<1x32x4xbf16>
    %156 = vector.shape_cast %155 : vector<1x32x4xbf16> to vector<32x4xbf16>
    %cst_103 = arith.constant dense<0.000000e+00> : vector<8x4xf32>
    %157 = tpu.matmul %1, %156, %cst_103 {dimension_numbers = #tpu.dot_dimension_numbers<[1], [0], [0], [1], [0, 0, 1, 1], [], []>} : vector<8x32xbf16>, vector<32x4xbf16>, vector<8x4xf32> -> vector<8x4xf32>
    %c5_104 = arith.constant 5 : index
    %c0_105 = arith.constant 0 : index
    %c0_106 = arith.constant 0 : index
    %158 = vector.load %arg5[%c5_104, %c0_105, %c0_106] : memref<8x32x4xbf16, #tpu.memory_space<vmem>>, vector<1x32x4xbf16>
    %159 = vector.shape_cast %158 : vector<1x32x4xbf16> to vector<32x4xbf16>
    %cst_107 = arith.constant dense<0.000000e+00> : vector<8x4xf32>
    %160 = tpu.matmul %3, %159, %cst_107 {dimension_numbers = #tpu.dot_dimension_numbers<[1], [0], [0], [1], [0, 0, 1, 1], [], []>} : vector<8x32xbf16>, vector<32x4xbf16>, vector<8x4xf32> -> vector<8x4xf32>
    %c5_108 = arith.constant 5 : index
    %c0_109 = arith.constant 0 : index
    %c0_110 = arith.constant 0 : index
    %161 = vector.load %arg6[%c5_108, %c0_109, %c0_110] : memref<8x32x4xbf16, #tpu.memory_space<vmem>>, vector<1x32x4xbf16>
    %162 = vector.shape_cast %161 : vector<1x32x4xbf16> to vector<32x4xbf16>
    %cst_111 = arith.constant dense<0.000000e+00> : vector<8x4xf32>
    %163 = tpu.matmul %3, %162, %cst_111 {dimension_numbers = #tpu.dot_dimension_numbers<[1], [0], [0], [1], [0, 0, 1, 1], [], []>} : vector<8x32xbf16>, vector<32x4xbf16>, vector<8x4xf32> -> vector<8x4xf32>
    %164 = arith.truncf %157 : vector<8x4xf32> to vector<8x4xbf16>
    %165 = arith.truncf %160 : vector<8x4xf32> to vector<8x4xbf16>
    %cst_112 = arith.constant dense<0.000000e+00> : vector<8x8xf32>
    %166 = tpu.matmul %164, %165, %cst_112 {dimension_numbers = #tpu.dot_dimension_numbers<[1], [1], [0], [0], [0, 0, 1, 0], [], []>} : vector<8x4xbf16>, vector<8x4xbf16>, vector<8x8xf32> -> vector<8x8xf32>
    %cst_113 = arith.constant dense<0xFF800000> : vector<8xf32>
    %167 = vector.multi_reduction <maximumf>, %166, %cst_113 [1] : vector<8x8xf32> to vector<8xf32>
    %168 = vector.shape_cast %167 : vector<8xf32> to vector<8x1xf32>
    %169 = vector.broadcast %168 : vector<8x1xf32> to vector<8x8xf32>
    %170 = arith.subf %166, %169 : vector<8x8xf32>
    %171 = math.exp %170 : vector<8x8xf32>
    %cst_114 = arith.constant dense<0.000000e+00> : vector<8xf32>
    %172 = vector.multi_reduction <add>, %171, %cst_114 [1] : vector<8x8xf32> to vector<8xf32>
    %173 = vector.shape_cast %172 : vector<8xf32> to vector<8x1xf32>
    %174 = tpu.reciprocal %173 {approx = true} : vector<8x1xf32> -> vector<8x1xf32>
    %175 = vector.broadcast %174 : vector<8x1xf32> to vector<8x8xf32>
    %176 = arith.mulf %171, %175 : vector<8x8xf32>
    %177 = arith.truncf %176 : vector<8x8xf32> to vector<8x8xbf16>
    %178 = arith.truncf %163 : vector<8x4xf32> to vector<8x4xbf16>
    %cst_115 = arith.constant dense<0.000000e+00> : vector<8x4xf32>
    %179 = tpu.matmul %177, %178, %cst_115 {dimension_numbers = #tpu.dot_dimension_numbers<[1], [0], [0], [1], [0, 0, 1, 1], [], []>} : vector<8x8xbf16>, vector<8x4xbf16>, vector<8x4xf32> -> vector<8x4xf32>
    %180 = arith.truncf %179 : vector<8x4xf32> to vector<8x4xbf16>
    %c5_116 = arith.constant 5 : index
    %c0_117 = arith.constant 0 : index
    %c0_118 = arith.constant 0 : index
    %181 = vector.load %arg7[%c5_116, %c0_117, %c0_118] : memref<8x4x32xbf16, #tpu.memory_space<vmem>>, vector<1x4x32xbf16>
    %182 = vector.shape_cast %181 : vector<1x4x32xbf16> to vector<4x32xbf16>
    %cst_119 = arith.constant dense<0.000000e+00> : vector<8x32xf32>
    %183 = tpu.matmul %180, %182, %cst_119 {dimension_numbers = #tpu.dot_dimension_numbers<[1], [0], [0], [1], [0, 0, 1, 1], [], []>} : vector<8x4xbf16>, vector<4x32xbf16>, vector<8x32xf32> -> vector<8x32xf32>
    %184 = arith.addf %154, %183 : vector<8x32xf32>
    %c6 = arith.constant 6 : index
    %c0_120 = arith.constant 0 : index
    %c0_121 = arith.constant 0 : index
    %185 = vector.load %arg4[%c6, %c0_120, %c0_121] : memref<8x32x4xbf16, #tpu.memory_space<vmem>>, vector<1x32x4xbf16>
    %186 = vector.shape_cast %185 : vector<1x32x4xbf16> to vector<32x4xbf16>
    %cst_122 = arith.constant dense<0.000000e+00> : vector<8x4xf32>
    %187 = tpu.matmul %1, %186, %cst_122 {dimension_numbers = #tpu.dot_dimension_numbers<[1], [0], [0], [1], [0, 0, 1, 1], [], []>} : vector<8x32xbf16>, vector<32x4xbf16>, vector<8x4xf32> -> vector<8x4xf32>
    %c6_123 = arith.constant 6 : index
    %c0_124 = arith.constant 0 : index
    %c0_125 = arith.constant 0 : index
    %188 = vector.load %arg5[%c6_123, %c0_124, %c0_125] : memref<8x32x4xbf16, #tpu.memory_space<vmem>>, vector<1x32x4xbf16>
    %189 = vector.shape_cast %188 : vector<1x32x4xbf16> to vector<32x4xbf16>
    %cst_126 = arith.constant dense<0.000000e+00> : vector<8x4xf32>
    %190 = tpu.matmul %3, %189, %cst_126 {dimension_numbers = #tpu.dot_dimension_numbers<[1], [0], [0], [1], [0, 0, 1, 1], [], []>} : vector<8x32xbf16>, vector<32x4xbf16>, vector<8x4xf32> -> vector<8x4xf32>
    %c6_127 = arith.constant 6 : index
    %c0_128 = arith.constant 0 : index
    %c0_129 = arith.constant 0 : index
    %191 = vector.load %arg6[%c6_127, %c0_128, %c0_129] : memref<8x32x4xbf16, #tpu.memory_space<vmem>>, vector<1x32x4xbf16>
    %192 = vector.shape_cast %191 : vector<1x32x4xbf16> to vector<32x4xbf16>
    %cst_130 = arith.constant dense<0.000000e+00> : vector<8x4xf32>
    %193 = tpu.matmul %3, %192, %cst_130 {dimension_numbers = #tpu.dot_dimension_numbers<[1], [0], [0], [1], [0, 0, 1, 1], [], []>} : vector<8x32xbf16>, vector<32x4xbf16>, vector<8x4xf32> -> vector<8x4xf32>
    %194 = arith.truncf %187 : vector<8x4xf32> to vector<8x4xbf16>
    %195 = arith.truncf %190 : vector<8x4xf32> to vector<8x4xbf16>
    %cst_131 = arith.constant dense<0.000000e+00> : vector<8x8xf32>
    %196 = tpu.matmul %194, %195, %cst_131 {dimension_numbers = #tpu.dot_dimension_numbers<[1], [1], [0], [0], [0, 0, 1, 0], [], []>} : vector<8x4xbf16>, vector<8x4xbf16>, vector<8x8xf32> -> vector<8x8xf32>
    %cst_132 = arith.constant dense<0xFF800000> : vector<8xf32>
    %197 = vector.multi_reduction <maximumf>, %196, %cst_132 [1] : vector<8x8xf32> to vector<8xf32>
    %198 = vector.shape_cast %197 : vector<8xf32> to vector<8x1xf32>
    %199 = vector.broadcast %198 : vector<8x1xf32> to vector<8x8xf32>
    %200 = arith.subf %196, %199 : vector<8x8xf32>
    %201 = math.exp %200 : vector<8x8xf32>
    %cst_133 = arith.constant dense<0.000000e+00> : vector<8xf32>
    %202 = vector.multi_reduction <add>, %201, %cst_133 [1] : vector<8x8xf32> to vector<8xf32>
    %203 = vector.shape_cast %202 : vector<8xf32> to vector<8x1xf32>
    %204 = tpu.reciprocal %203 {approx = true} : vector<8x1xf32> -> vector<8x1xf32>
    %205 = vector.broadcast %204 : vector<8x1xf32> to vector<8x8xf32>
    %206 = arith.mulf %201, %205 : vector<8x8xf32>
    %207 = arith.truncf %206 : vector<8x8xf32> to vector<8x8xbf16>
    %208 = arith.truncf %193 : vector<8x4xf32> to vector<8x4xbf16>
    %cst_134 = arith.constant dense<0.000000e+00> : vector<8x4xf32>
    %209 = tpu.matmul %207, %208, %cst_134 {dimension_numbers = #tpu.dot_dimension_numbers<[1], [0], [0], [1], [0, 0, 1, 1], [], []>} : vector<8x8xbf16>, vector<8x4xbf16>, vector<8x4xf32> -> vector<8x4xf32>
    %210 = arith.truncf %209 : vector<8x4xf32> to vector<8x4xbf16>
    %c6_135 = arith.constant 6 : index
    %c0_136 = arith.constant 0 : index
    %c0_137 = arith.constant 0 : index
    %211 = vector.load %arg7[%c6_135, %c0_136, %c0_137] : memref<8x4x32xbf16, #tpu.memory_space<vmem>>, vector<1x4x32xbf16>
    %212 = vector.shape_cast %211 : vector<1x4x32xbf16> to vector<4x32xbf16>
    %cst_138 = arith.constant dense<0.000000e+00> : vector<8x32xf32>
    %213 = tpu.matmul %210, %212, %cst_138 {dimension_numbers = #tpu.dot_dimension_numbers<[1], [0], [0], [1], [0, 0, 1, 1], [], []>} : vector<8x4xbf16>, vector<4x32xbf16>, vector<8x32xf32> -> vector<8x32xf32>
    %214 = arith.addf %184, %213 : vector<8x32xf32>
    %c7 = arith.constant 7 : index
    %c0_139 = arith.constant 0 : index
    %c0_140 = arith.constant 0 : index
    %215 = vector.load %arg4[%c7, %c0_139, %c0_140] : memref<8x32x4xbf16, #tpu.memory_space<vmem>>, vector<1x32x4xbf16>
    %216 = vector.shape_cast %215 : vector<1x32x4xbf16> to vector<32x4xbf16>
    %cst_141 = arith.constant dense<0.000000e+00> : vector<8x4xf32>
    %217 = tpu.matmul %1, %216, %cst_141 {dimension_numbers = #tpu.dot_dimension_numbers<[1], [0], [0], [1], [0, 0, 1, 1], [], []>} : vector<8x32xbf16>, vector<32x4xbf16>, vector<8x4xf32> -> vector<8x4xf32>
    %c7_142 = arith.constant 7 : index
    %c0_143 = arith.constant 0 : index
    %c0_144 = arith.constant 0 : index
    %218 = vector.load %arg5[%c7_142, %c0_143, %c0_144] : memref<8x32x4xbf16, #tpu.memory_space<vmem>>, vector<1x32x4xbf16>
    %219 = vector.shape_cast %218 : vector<1x32x4xbf16> to vector<32x4xbf16>
    %cst_145 = arith.constant dense<0.000000e+00> : vector<8x4xf32>
    %220 = tpu.matmul %3, %219, %cst_145 {dimension_numbers = #tpu.dot_dimension_numbers<[1], [0], [0], [1], [0, 0, 1, 1], [], []>} : vector<8x32xbf16>, vector<32x4xbf16>, vector<8x4xf32> -> vector<8x4xf32>
    %c7_146 = arith.constant 7 : index
    %c0_147 = arith.constant 0 : index
    %c0_148 = arith.constant 0 : index
    %221 = vector.load %arg6[%c7_146, %c0_147, %c0_148] : memref<8x32x4xbf16, #tpu.memory_space<vmem>>, vector<1x32x4xbf16>
    %222 = vector.shape_cast %221 : vector<1x32x4xbf16> to vector<32x4xbf16>
    %cst_149 = arith.constant dense<0.000000e+00> : vector<8x4xf32>
    %223 = tpu.matmul %3, %222, %cst_149 {dimension_numbers = #tpu.dot_dimension_numbers<[1], [0], [0], [1], [0, 0, 1, 1], [], []>} : vector<8x32xbf16>, vector<32x4xbf16>, vector<8x4xf32> -> vector<8x4xf32>
    %224 = arith.truncf %217 : vector<8x4xf32> to vector<8x4xbf16>
    %225 = arith.truncf %220 : vector<8x4xf32> to vector<8x4xbf16>
    %cst_150 = arith.constant dense<0.000000e+00> : vector<8x8xf32>
    %226 = tpu.matmul %224, %225, %cst_150 {dimension_numbers = #tpu.dot_dimension_numbers<[1], [1], [0], [0], [0, 0, 1, 0], [], []>} : vector<8x4xbf16>, vector<8x4xbf16>, vector<8x8xf32> -> vector<8x8xf32>
    %cst_151 = arith.constant dense<0xFF800000> : vector<8xf32>
    %227 = vector.multi_reduction <maximumf>, %226, %cst_151 [1] : vector<8x8xf32> to vector<8xf32>
    %228 = vector.shape_cast %227 : vector<8xf32> to vector<8x1xf32>
    %229 = vector.broadcast %228 : vector<8x1xf32> to vector<8x8xf32>
    %230 = arith.subf %226, %229 : vector<8x8xf32>
    %231 = math.exp %230 : vector<8x8xf32>
    %cst_152 = arith.constant dense<0.000000e+00> : vector<8xf32>
    %232 = vector.multi_reduction <add>, %231, %cst_152 [1] : vector<8x8xf32> to vector<8xf32>
    %233 = vector.shape_cast %232 : vector<8xf32> to vector<8x1xf32>
    %234 = tpu.reciprocal %233 {approx = true} : vector<8x1xf32> -> vector<8x1xf32>
    %235 = vector.broadcast %234 : vector<8x1xf32> to vector<8x8xf32>
    %236 = arith.mulf %231, %235 : vector<8x8xf32>
    %237 = arith.truncf %236 : vector<8x8xf32> to vector<8x8xbf16>
    %238 = arith.truncf %223 : vector<8x4xf32> to vector<8x4xbf16>
    %cst_153 = arith.constant dense<0.000000e+00> : vector<8x4xf32>
    %239 = tpu.matmul %237, %238, %cst_153 {dimension_numbers = #tpu.dot_dimension_numbers<[1], [0], [0], [1], [0, 0, 1, 1], [], []>} : vector<8x8xbf16>, vector<8x4xbf16>, vector<8x4xf32> -> vector<8x4xf32>
    %240 = arith.truncf %239 : vector<8x4xf32> to vector<8x4xbf16>
    %c7_154 = arith.constant 7 : index
    %c0_155 = arith.constant 0 : index
    %c0_156 = arith.constant 0 : index
    %241 = vector.load %arg7[%c7_154, %c0_155, %c0_156] : memref<8x4x32xbf16, #tpu.memory_space<vmem>>, vector<1x4x32xbf16>
    %242 = vector.shape_cast %241 : vector<1x4x32xbf16> to vector<4x32xbf16>
    %cst_157 = arith.constant dense<0.000000e+00> : vector<8x32xf32>
    %243 = tpu.matmul %240, %242, %cst_157 {dimension_numbers = #tpu.dot_dimension_numbers<[1], [0], [0], [1], [0, 0, 1, 1], [], []>} : vector<8x4xbf16>, vector<4x32xbf16>, vector<8x32xf32> -> vector<8x32xf32>
    %244 = arith.addf %214, %243 : vector<8x32xf32>
    %c0_158 = arith.constant 0 : index
    %c0_159 = arith.constant 0 : index
    %245 = vector.load %arg8[%c0_158, %c0_159] : memref<1x32xf32, #tpu.memory_space<vmem>>, vector<1x32xf32>
    %246 = vector.broadcast %245 : vector<1x32xf32> to vector<8x32xf32>
    %247 = arith.addf %244, %246 : vector<8x32xf32>
    %c0_160 = arith.constant 0 : index
    %c0_161 = arith.constant 0 : index
    %c0_162 = arith.constant 0 : index
    %248 = vector.load %arg9[%c0_160, %c0_161, %c0_162] : memref<1x8x32xf32, #tpu.memory_space<vmem>>, vector<1x8x32xf32>
    %249 = vector.shape_cast %248 : vector<1x8x32xf32> to vector<8x32xf32>
    %250 = vector.shape_cast %247 : vector<8x32xf32> to vector<1x8x32xf32>
    tpu.vector_store %arg9[%c0_160, %c0_161, %c0_162], %250 {strides = array<i32>} : memref<1x8x32xf32, #tpu.memory_space<vmem>>, vector<1x8x32xf32>,
    return
  }
  func.func @transform_0(%arg0: i32, %arg1: i32) -> (i32, i32, i32) {
    %c0_i32 = arith.constant 0 : i32
    %c0_i32_0 = arith.constant 0 : i32
    return %arg0, %arg1, %c0_i32 : i32, i32, i32
  }
  func.func @transform_1(%arg0: i32, %arg1: i32) -> (i32, i32, i32) {
    %c0_i32 = arith.constant 0 : i32
    %c0_i32_0 = arith.constant 0 : i32
    %c0_i32_1 = arith.constant 0 : i32
    return %arg0, %c0_i32, %c0_i32_0 : i32, i32, i32
  }
  func.func @transform_2(%arg0: i32, %arg1: i32) -> (i32, i32, i32) {
    %c0_i32 = arith.constant 0 : i32
    %c0_i32_0 = arith.constant 0 : i32
    %c0_i32_1 = arith.constant 0 : i32
    %c0_i32_2 = arith.constant 0 : i32
    return %c0_i32, %c0_i32_0, %c0_i32_1 : i32, i32, i32
  }
  func.func @transform_3(%arg0: i32, %arg1: i32) -> (i32, i32, i32) {
    %c0_i32 = arith.constant 0 : i32
    %c0_i32_0 = arith.constant 0 : i32
    %c0_i32_1 = arith.constant 0 : i32
    %c0_i32_2 = arith.constant 0 : i32
    return %c0_i32, %c0_i32_0, %c0_i32_1 : i32, i32, i32
  }
  func.func @transform_4(%arg0: i32, %arg1: i32) -> (i32, i32, i32) {
    %c0_i32 = arith.constant 0 : i32
    %c0_i32_0 = arith.constant 0 : i32
    %c0_i32_1 = arith.constant 0 : i32
    %c0_i32_2 = arith.constant 0 : i32
    return %c0_i32, %c0_i32_0, %c0_i32_1 : i32, i32, i32
  }
  func.func @transform_5(%arg0: i32, %arg1: i32) -> (i32, i32, i32) {
    %c0_i32 = arith.constant 0 : i32
    %c0_i32_0 = arith.constant 0 : i32
    %c0_i32_1 = arith.constant 0 : i32
    %c0_i32_2 = arith.constant 0 : i32
    return %c0_i32, %c0_i32_0, %c0_i32_1 : i32, i32, i32
  }
  func.func @transform_6(%arg0: i32, %arg1: i32) -> (i32, i32) {
    %c0_i32 = arith.constant 0 : i32
    %c0_i32_0 = arith.constant 0 : i32
    %c0_i32_1 = arith.constant 0 : i32
    return %c0_i32, %c0_i32_0 : i32, i32
  }
  func.func @transform_7(%arg0: i32, %arg1: i32) -> (i32, i32, i32) {
    %c0_i32 = arith.constant 0 : i32
    %c0_i32_0 = arith.constant 0 : i32
    return %arg0, %arg1, %c0_i32 : i32, i32, i32
  }
}

</mosaic_0001>

<llo_original>
// kernel: tpu_custom_call.1
$region0: #{tpu_custom_call.1}
  #allocation0 [shape = 'u32[]', space=smem, size = 0x4, offset = 0x4, fixed_abs, tag = 'smem constant byte address 0x4 - core index']
  #allocation1 [shape = 'u32[144,128]{1,0:T(1,128)}', space=vmem, size = 0x12000, scoped, tag = 'internal scratch']
  %s0 = inlined_call_operand.vmem [shape: bf16[2,8,32], index: 0, kind: input, shape index: {}]
  %s1 = inlined_call_operand.vmem [shape: bf16[2,8,32], index: 1, kind: input, shape index: {}]
  %s2 = inlined_call_operand.vmem [shape: bf16[8,32,4], index: 2, kind: input, shape index: {}]
  %s3 = inlined_call_operand.vmem [shape: bf16[8,32,4], index: 3, kind: input, shape index: {}]
  %s4 = inlined_call_operand.vmem [shape: bf16[8,32,4], index: 4, kind: input, shape index: {}]
  %s5 = inlined_call_operand.vmem [shape: bf16[8,4,32], index: 5, kind: input, shape index: {}]
  %s6 = inlined_call_operand.vmem [shape: f32[1,32], index: 6, kind: input, shape index: {}]
  %s7 = inlined_call_operand.hbm [shape: f32[2,8,32], index: 7, kind: output, shape index: {}]
  %s8 = sld [smem:[#allocation0]]
  $region61: #{tpu_custom_call.1} parent=0
    _
  %s10 = ssub.s32 1, %s8
  %s11 = scalar_select 0, %s10, %s8
  $region1: #{tpu_custom_call.1} parent=0
    #allocation2 [shape = 'u8[8192]{0}', space=vmem, size = 0x2000, scoped, tag = 'output window, operand 0']
    #allocation3 [shape = 's32[2]{0}', space=sflag, size = 0x8, scoped, tag = 'scoped memory for tpu_custom_call.1']
    %12 = vsyncpa [#allocation3], 0
    %s13 = scalar_lea.sflag [#allocation3], 1
    %14 = vsyncpa %s13, 0
    loop: start=0, step=1, limit=4
    $region2: #{tpu_custom_call.1} parent=1 // loop_pre_header
      _
    $region3: #{tpu_custom_call.1} parent=1 // loop_header
      %s16 = sphi 0, %s20
      %p17 = scmp.ge.s32.totalorder %s16, 4
      %s23 = sphi 0, %s35
      %s24 = sphi 0, %s31
      %s25 = sphi 0, %s23
      %s26 = sphi 0, %s24
      %s27 = sphi 0, %s25
      %s28 = sphi 0, %s26
      %s40 = sphi 0, %s42
      %s43 = sphi 0, %s40
      %s44 = sphi 0, %s43
      %s60 = sphi 0, %s44
      %s66 = sphi 0, %s68
      %s69 = sphi 0, %s66
      %s70 = sphi 0, %s69
      %s86 = sphi 0, %s70
      %s90 = sphi 0, %s90
      %s92 = sphi 0, %s90
      %s93 = sphi 0, %s92
      %s107 = sphi 0, %s93
      %s111 = sphi 0, %s111
      %s113 = sphi 0, %s111
      %s114 = sphi 0, %s113
      %s128 = sphi 0, %s114
      %s132 = sphi 0, %s132
      %s134 = sphi 0, %s132
      %s135 = sphi 0, %s134
      %s149 = sphi 0, %s135
      %s153 = sphi 0, %s153
      %s155 = sphi 0, %s153
      %s156 = sphi 0, %s155
      %s170 = sphi 0, %s156
      %s174 = sphi 0, %s174
      %s176 = sphi 0, %s174
      %s177 = sphi 0, %s176
      %s191 = sphi 0, %s177
      %s199 = sphi 0, %s201
      %s202 = sphi 0, %s199
      %s203 = sphi 0, %s202
      %s219 = sphi 0, %s203
    $region4: #{tpu_custom_call.1} parent=1 // loop_header_branch
      %19 = sbr.rel (%p17) target = $region8
    $region5: #{tpu_custom_call.1} parent=1 // loop_body
      %s21 = ssub.s32 %s16, 1
      %s22 = ssub.s32 %s16, 2
      %s29 = sadd.s32 1, %s24
      %p30 = scmp.ge.s32.totalorder %s29, 1
      %s31 = scalar_select %p30, 0, %s29
      %s32 = sadd.s32 1, %s23
      %s33 = scalar_select %p30, %s32, %s23
      %p34 = scmp.ge.s32.totalorder %s33, 2
      %s35 = scalar_select %p34, 0, %s33
      %s36 = ssub.s32 %s23, %s35
      %s37 = ssub.s32 %s24, %s31
      %s38 = sor.u32 %s36, %s37
      %p39 = scmp.eq.s32.totalorder %s38, 0
      %s41 = sadd.s32 %s40, 1
      %s42 = scalar_select %p39, %s40, %s41
      %p45 = pneg %p39
      %p46 = scmp.eq.s32.totalorder %s16, 1
      %p47 = por %p45, %p46
      %p48 = scmp.ne.s32.totalorder %s40, %s43
      %p49 = scmp.eq.s32.totalorder %s16, 0
      %p50 = por %p48, %p49
      %p51 = scmp.ne.s32.totalorder %s40, %s43
      %p52 = scmp.eq.s32.totalorder %s21, 1
      %p53 = por %p51, %p52
      %p54 = scmp.ne.s32.totalorder %s43, %s44
      %p55 = scmp.eq.s32.totalorder %s21, 0
      %p56 = por %p54, %p55
      %p57 = scmp.ne.s32.totalorder %s43, %s44
      %p58 = scmp.eq.s32.totalorder %s22, 1
      %p59 = por %p57, %p58
      %p61 = scmp.ne.s32.totalorder %s44, %s60
      %p62 = scmp.eq.s32.totalorder %s22, 0
      %p63 = por %p61, %p62
      %s64 = ssub.s32 %s23, %s35
      %p65 = scmp.eq.s32.totalorder %s64, 0
      %s67 = sadd.s32 %s66, 1
      %s68 = scalar_select %p65, %s66, %s67
      %p71 = pneg %p65
      %p72 = scmp.eq.s32.totalorder %s16, 1
      %p73 = por %p71, %p72
      %p74 = scmp.ne.s32.totalorder %s66, %s69
      %p75 = scmp.eq.s32.totalorder %s16, 0
      %p76 = por %p74, %p75
      %p77 = scmp.ne.s32.totalorder %s66, %s69
      %p78 = scmp.eq.s32.totalorder %s21, 1
      %p79 = por %p77, %p78
      %p80 = scmp.ne.s32.totalorder %s69, %s70
      %p81 = scmp.eq.s32.totalorder %s21, 0
      %p82 = por %p80, %p81
      %p83 = scmp.ne.s32.totalorder %s69, %s70
      %p84 = scmp.eq.s32.totalorder %s22, 1
      %p85 = por %p83, %p84
      %p87 = scmp.ne.s32.totalorder %s70, %s86
      %p88 = scmp.eq.s32.totalorder %s22, 0
      %p89 = por %p87, %p88
      %s91 = sadd.s32 %s90, 1
      %p94 = scmp.eq.s32.totalorder %s16, 1
      %p95 = scmp.ne.s32.totalorder %s90, %s92
      %p96 = scmp.eq.s32.totalorder %s16, 0
      %p97 = por %p95, %p96
      %p98 = scmp.ne.s32.totalorder %s90, %s92
      %p99 = scmp.eq.s32.totalorder %s21, 1
      %p100 = por %p98, %p99
      %p101 = scmp.ne.s32.totalorder %s92, %s93
      %p102 = scmp.eq.s32.totalorder %s21, 0
      %p103 = por %p101, %p102
      %p104 = scmp.ne.s32.totalorder %s92, %s93
      %p105 = scmp.eq.s32.totalorder %s22, 1
      %p106 = por %p104, %p105
      %p108 = scmp.ne.s32.totalorder %s93, %s107
      %p109 = scmp.eq.s32.totalorder %s22, 0
      %p110 = por %p108, %p109
      %s112 = sadd.s32 %s111, 1
      %p115 = scmp.eq.s32.totalorder %s16, 1
      %p116 = scmp.ne.s32.totalorder %s111, %s113
      %p117 = scmp.eq.s32.totalorder %s16, 0
      %p118 = por %p116, %p117
      %p119 = scmp.ne.s32.totalorder %s111, %s113
      %p120 = scmp.eq.s32.totalorder %s21, 1
      %p121 = por %p119, %p120
      %p122 = scmp.ne.s32.totalorder %s113, %s114
      %p123 = scmp.eq.s32.totalorder %s21, 0
      %p124 = por %p122, %p123
      %p125 = scmp.ne.s32.totalorder %s113, %s114
      %p126 = scmp.eq.s32.totalorder %s22, 1
      %p127 = por %p125, %p126
      %p129 = scmp.ne.s32.totalorder %s114, %s128
      %p130 = scmp.eq.s32.totalorder %s22, 0
      %p131 = por %p129, %p130
      %s133 = sadd.s32 %s132, 1
      %p136 = scmp.eq.s32.totalorder %s16, 1
      %p137 = scmp.ne.s32.totalorder %s132, %s134
      %p138 = scmp.eq.s32.totalorder %s16, 0
      %p139 = por %p137, %p138
      %p140 = scmp.ne.s32.totalorder %s132, %s134
      %p141 = scmp.eq.s32.totalorder %s21, 1
      %p142 = por %p140, %p141
      %p143 = scmp.ne.s32.totalorder %s134, %s135
      %p144 = scmp.eq.s32.totalorder %s21, 0
      %p145 = por %p143, %p144
      %p146 = scmp.ne.s32.totalorder %s134, %s135
      %p147 = scmp.eq.s32.totalorder %s22, 1
      %p148 = por %p146, %p147
      %p150 = scmp.ne.s32.totalorder %s135, %s149
      %p151 = scmp.eq.s32.totalorder %s22, 0
      %p152 = por %p150, %p151
      %s154 = sadd.s32 %s153, 1
      %p157 = scmp.eq.s32.totalorder %s16, 1
      %p158 = scmp.ne.s32.totalorder %s153, %s155
      %p159 = scmp.eq.s32.totalorder %s16, 0
      %p160 = por %p158, %p159
      %p161 = scmp.ne.s32.totalorder %s153, %s155
      %p162 = scmp.eq.s32.totalorder %s21, 1
      %p163 = por %p161, %p162
      %p164 = scmp.ne.s32.totalorder %s155, %s156
      %p165 = scmp.eq.s32.totalorder %s21, 0
      %p166 = por %p164, %p165
      %p167 = scmp.ne.s32.totalorder %s155, %s156
      %p168 = scmp.eq.s32.totalorder %s22, 1
      %p169 = por %p167, %p168
      %p171 = scmp.ne.s32.totalorder %s156, %s170
      %p172 = scmp.eq.s32.totalorder %s22, 0
      %p173 = por %p171, %p172
      %s175 = sadd.s32 %s174, 1
      %p178 = scmp.eq.s32.totalorder %s16, 1
      %p179 = scmp.ne.s32.totalorder %s174, %s176
      %p180 = scmp.eq.s32.totalorder %s16, 0
      %p181 = por %p179, %p180
      %p182 = scmp.ne.s32.totalorder %s174, %s176
      %p183 = scmp.eq.s32.totalorder %s21, 1
      %p184 = por %p182, %p183
      %p185 = scmp.ne.s32.totalorder %s176, %s177
      %p186 = scmp.eq.s32.totalorder %s21, 0
      %p187 = por %p185, %p186
      %p188 = scmp.ne.s32.totalorder %s176, %s177
      %p189 = scmp.eq.s32.totalorder %s22, 1
      %p190 = por %p188, %p189
      %p192 = scmp.ne.s32.totalorder %s177, %s191
      %p193 = scmp.eq.s32.totalorder %s22, 0
      %p194 = por %p192, %p193
      %s195 = ssub.s32 %s23, %s35
      %s196 = ssub.s32 %s24, %s31
      %s197 = sor.u32 %s195, %s196
      %p198 = scmp.eq.s32.totalorder %s197, 0
      %s200 = sadd.s32 %s199, 1
      %s201 = scalar_select %p198, %s199, %s200
      %p204 = pneg %p198
      %p205 = scmp.eq.s32.totalorder %s16, 1
      %p206 = por %p204, %p205
      %p207 = scmp.ne.s32.totalorder %s199, %s202
      %p208 = scmp.eq.s32.totalorder %s16, 0
      %p209 = por %p207, %p208
      %p210 = scmp.ne.s32.totalorder %s199, %s202
      %p211 = scmp.eq.s32.totalorder %s21, 1
      %p212 = por %p210, %p211
      %p213 = scmp.ne.s32.totalorder %s202, %s203
      %p214 = scmp.eq.s32.totalorder %s21, 0
      %p215 = por %p213, %p214
      %p216 = scmp.ne.s32.totalorder %s202, %s203
      %p217 = scmp.eq.s32.totalorder %s22, 1
      %p218 = por %p216, %p217
      %p220 = scmp.ne.s32.totalorder %s203, %s219
      %p221 = scmp.eq.s32.totalorder %s22, 0
      %p222 = por %p220, %p221
      %p223 = scmp.le.s32.totalorder 1, %s16
      %p224 = scmp.lt.s32.totalorder %s16, 3
      %p225 = pnand %p223, %p224
      %p226 = pneg %p225
      // Predicated region
      $region9: #{tpu_custom_call.1} parent=5 // pred_check
        _
      $region10: #{tpu_custom_call.1} parent=5 // pred_check_branch
        %228 = sbr.rel (%p225) target = $region12
      $region11: #{tpu_custom_call.1} parent=5 // pred_region
        %s229 = ssub.s32 %s16, 1
        // Predicated region
        $region13: #{tpu_custom_call.1} parent=11 // pred_check
          %p230 = pneg %p103
        $region14: #{tpu_custom_call.1} parent=11 // pred_check_branch
          %232 = sbr.rel (%p230) target = $region16
        $region15: #{tpu_custom_call.1} parent=11 // pred_region
          _
        $region16: #{tpu_custom_call.1} parent=11 // pred_fallthru
          _
        // Predicated region
        $region17: #{tpu_custom_call.1} parent=11 // pred_check
          %p233 = pneg %p124
        $region18: #{tpu_custom_call.1} parent=11 // pred_check_branch
          %235 = sbr.rel (%p233) target = $region20
        $region19: #{tpu_custom_call.1} parent=11 // pred_region
          _
        $region20: #{tpu_custom_call.1} parent=11 // pred_fallthru
          _
        // Predicated region
        $region21: #{tpu_custom_call.1} parent=11 // pred_check
          %p236 = pneg %p145
        $region22: #{tpu_custom_call.1} parent=11 // pred_check_branch
          %238 = sbr.rel (%p236) target = $region24
        $region23: #{tpu_custom_call.1} parent=11 // pred_region
          _
        $region24: #{tpu_custom_call.1} parent=11 // pred_fallthru
          _
        // Predicated region
        $region25: #{tpu_custom_call.1} parent=11 // pred_check
          %p239 = pneg %p166
        $region26: #{tpu_custom_call.1} parent=11 // pred_check_branch
          %241 = sbr.rel (%p239) target = $region28
        $region27: #{tpu_custom_call.1} parent=11 // pred_region
          _
        $region28: #{tpu_custom_call.1} parent=11 // pred_fallthru
          _
        // Predicated region
        $region29: #{tpu_custom_call.1} parent=11 // pred_check
          %p242 = pneg %p187
        $region30: #{tpu_custom_call.1} parent=11 // pred_check_branch
          %244 = sbr.rel (%p242) target = $region32
        $region31: #{tpu_custom_call.1} parent=11 // pred_region
          _
        $region32: #{tpu_custom_call.1} parent=11 // pred_fallthru
          _
      $region12: #{tpu_custom_call.1} parent=5 // pred_fallthru
        _
      %p245 = scmp.lt.s32.totalorder %s16, 2
      // Predicated region
      $region33: #{tpu_custom_call.1} parent=5 // pred_check
        %p246 = pneg %p245
      $region34: #{tpu_custom_call.1} parent=5 // pred_check_branch
        %248 = sbr.rel (%p246) target = $region36
      $region35: #{tpu_custom_call.1} parent=5 // pred_region
        // Predicated region
        $region37: #{tpu_custom_call.1} parent=35 // pred_check
          %p249 = pneg %p50
        $region38: #{tpu_custom_call.1} parent=35 // pred_check_branch
          %251 = sbr.rel (%p249) target = $region40
        $region39: #{tpu_custom_call.1} parent=35 // pred_region
          %p252 = scmp.lt.s32.totalorder %s23, 1
          %s253 = scalar_select %p252, %s23, 1
          %p254 = scmp.lt.s32.totalorder %s24, 0
          %s255 = scalar_select %p254, %s24, 0
          %s256 = sadd.s32 %s255, %s253
          %s257 = smul.addr %s256, 4
          %s258 = scalar_lea.vmem %s0, %s257
        $region40: #{tpu_custom_call.1} parent=35 // pred_fallthru
          _
        // Predicated region
        $region41: #{tpu_custom_call.1} parent=35 // pred_check
          %p259 = pneg %p76
        $region42: #{tpu_custom_call.1} parent=35 // pred_check_branch
          %261 = sbr.rel (%p259) target = $region44
        $region43: #{tpu_custom_call.1} parent=35 // pred_region
          %p262 = scmp.lt.s32.totalorder %s23, 1
          %s263 = scalar_select %p262, %s23, 1
          %s264 = smul.addr %s263, 4
          %s265 = scalar_lea.vmem %s1, %s264
        $region44: #{tpu_custom_call.1} parent=35 // pred_fallthru
          _
      $region36: #{tpu_custom_call.1} parent=5 // pred_fallthru
        _
      %p266 = scmp.le.s32.totalorder 1, %s16
      %p267 = scmp.lt.s32.totalorder %s16, 3
      %p268 = pnand %p266, %p267
      %p269 = pneg %p268
      // Predicated region
      $region45: #{tpu_custom_call.1} parent=5 // pred_check
        _
      $region46: #{tpu_custom_call.1} parent=5 // pred_check_branch
        %271 = sbr.rel (%p268) target = $region48
      $region47: #{tpu_custom_call.1} parent=5 // pred_region
        %s272 = ssub.s32 %s16, 1
        %p273 = scmp.lt.s32.totalorder %s25, 1
        %s274 = scalar_select %p273, %s25, 1
        %p275 = scmp.lt.s32.totalorder %s26, 0
        %s276 = scalar_select %p275, %s26, 0
        %s277 = sadd.s32 %s276, %s274
        %s278 = smul.addr %s277, 4
        %s279 = scalar_lea.vmem %s0, %s278
        %p280 = pneg %p56
        %p281 = pneg %p53
        %p282 = scmp.lt.s32.totalorder %s25, 1
        %s283 = scalar_select %p282, %s25, 1
        %s284 = smul.addr %s283, 4
        %s285 = scalar_lea.vmem %s1, %s284
        %p286 = pneg %p82
        %p287 = pneg %p79
        %p288 = pneg %p103
        %p289 = pneg %p100
        %p290 = pneg %p124
        %p291 = pneg %p121
        %p292 = pneg %p145
        %p293 = pneg %p142
        %p294 = pneg %p166
        %p295 = pneg %p163
        %p296 = pneg %p187
        %p297 = pneg %p184
        %p298 = pneg %p215
        %p299 = pneg %p212
        %s300 = sand.u32 %s202, 1
        %s301 = scalar_lea.sflag [#allocation3], %s300
        %s302 = sand.u32 %s202, 1
        %s303 = smul.addr %s302, 8
        %s304 = scalar_lea.vmem [#allocation2], %s303
        %p305 = scmp.lt.s32.totalorder %s25, 1
        %s306 = scalar_select %p305, %s25, 1
        %p307 = scmp.lt.s32.totalorder %s26, 0
        %s308 = scalar_select %p307, %s26, 0
        %s309 = sadd.s32 %s308, %s306
        %s310 = smul.addr %s309, 4
        %s311 = scalar_lea.vmem %s0, %s310
        %p312 = scmp.lt.s32.totalorder %s25, 1
        %s313 = scalar_select %p312, %s25, 1
        %s314 = smul.addr %s313, 4
        %s315 = scalar_lea.vmem %s1, %s314
        %v317 = vld [vmem:[%s311] sm:$0xf]
        %v318 = vld [vmem:[%s315] sm:$0xf]
        %v319 = vld [vmem:[%s2] sm:$0xf]
        %v320 = vld [vmem:[%s2 + $0x4] sm:$0xf]
        %v321 = vld [vmem:[%s2 + $0x8] sm:$0xf]
        %v322 = vld [vmem:[%s2 + $0xc] sm:$0xf]
        %v327 = vunpack.c.l.b16 %v319
        %v328 = vunpack.c.l.b16 %v320
        %v329 = vunpack.c.l.b16 %v321
        %v330 = vunpack.c.l.b16 %v322
        %v331 = vpack.c.b16 %v328, %v327
        %v332 = vpack.c.b16 %v330, %v329
        %vm335 = vcmask 261120
        %v337 = vsel %vm335, %v317, 0
        %339 = vmatprep.subr.bf16.mxu0 0
        %340 = vmatpush1.bf16.msra.mxu0 %v331
        %341 = vmatprep.subr.bf16.mxu0 0
        %342 = vmatpush1.bf16.msra.mxu0 %v332
        %343 = vmatprep.subr.bf16.mxu0 0
        %344 = vmatpush1.bf16.msra.mxu0 0
        %345 = vmatprep.subr.bf16.mxu0 0
        %346 = vmatpush1.bf16.msra.mxu0 0
        %347 = vmatprep.subr.bf16.mxu0 0
        %348 = vmatpush1.bf16.msra.mxu0 0
        %349 = vmatprep.subr.bf16.mxu0 0
        %350 = vmatpush1.bf16.msra.mxu0 0
        %351 = vmatprep.subr.bf16.mxu0 0
        %352 = vmatpush1.bf16.msra.mxu0 0
        %353 = vmatprep.subr.bf16.mxu0 0
        %354 = vmatpush1.bf16.msra.mxu0 0
        %355 = vmatprep.subr.bf16.mxu0 0
        %356 = vmatpush1.bf16.msra.mxu0 0
        %357 = vmatprep.subr.bf16.mxu0 0
        %358 = vmatpush1.bf16.msra.mxu0 0
        %359 = vmatprep.subr.bf16.mxu0 0
        %360 = vmatpush1.bf16.msra.mxu0 0
        %361 = vmatprep.subr.bf16.mxu0 0
        %362 = vmatpush1.bf16.msra.mxu0 0
        %363 = vmatprep.subr.bf16.mxu0 0
        %364 = vmatpush1.bf16.msra.mxu0 0
        %365 = vmatprep.subr.bf16.mxu0 0
        %366 = vmatpush1.bf16.msra.mxu0 0
        %367 = vmatprep.subr.bf16.mxu0 0
        %368 = vmatpush1.bf16.msra.mxu0 0
        %369 = vmatprep.subr.bf16.mxu0 0
        %370 = vmatpush1.bf16.msra.mxu0 0
        %371 = vmatprep.mubr.bf16.mxu0 0
        %372 = vmatmul.mubr.bf16.gmra.mrb[0].mxu0 %v337
        %v373 = vpop.f32.mrb[0].mxu0
        %v374 = vadd.f32 0.0, %v373
        %v375 = vpop.f32.mrb[0].mxu0
        %v376 = vpop.f32.mrb[0].mxu0
        %v377 = vpop.f32.mrb[0].mxu0
        %378 = vdwg.mxu0
        %v379 = vld [vmem:[%s3] sm:$0xf]
        %v380 = vld [vmem:[%s3 + $0x4] sm:$0xf]
        %v381 = vld [vmem:[%s3 + $0x8] sm:$0xf]
        %v382 = vld [vmem:[%s3 + $0xc] sm:$0xf]
        %v387 = vunpack.c.l.b16 %v379
        %v388 = vunpack.c.l.b16 %v380
        %v389 = vunpack.c.l.b16 %v381
        %v390 = vunpack.c.l.b16 %v382
        %v391 = vpack.c.b16 %v388, %v387
        %v392 = vpack.c.b16 %v390, %v389
        %v396 = vsel %vm335, %v318, 0
        %398 = vmatprep.subr.bf16.mxu0 0
        %399 = vmatpush1.bf16.msra.mxu0 %v391
        %400 = vmatprep.subr.bf16.mxu0 0
        %401 = vmatpush1.bf16.msra.mxu0 %v392
        %402 = vmatprep.subr.bf16.mxu0 0
        %403 = vmatpush1.bf16.msra.mxu0 0
        %404 = vmatprep.subr.bf16.mxu0 0
        %405 = vmatpush1.bf16.msra.mxu0 0
        %406 = vmatprep.subr.bf16.mxu0 0
        %407 = vmatpush1.bf16.msra.mxu0 0
        %408 = vmatprep.subr.bf16.mxu0 0
        %409 = vmatpush1.bf16.msra.mxu0 0
        %410 = vmatprep.subr.bf16.mxu0 0
        %411 = vmatpush1.bf16.msra.mxu0 0
        %412 = vmatprep.subr.bf16.mxu0 0
        %413 = vmatpush1.bf16.msra.mxu0 0
        %414 = vmatprep.subr.bf16.mxu0 0
        %415 = vmatpush1.bf16.msra.mxu0 0
        %416 = vmatprep.subr.bf16.mxu0 0
        %417 = vmatpush1.bf16.msra.mxu0 0
        %418 = vmatprep.subr.bf16.mxu0 0
        %419 = vmatpush1.bf16.msra.mxu0 0
        %420 = vmatprep.subr.bf16.mxu0 0
        %421 = vmatpush1.bf16.msra.mxu0 0
        %422 = vmatprep.subr.bf16.mxu0 0
        %423 = vmatpush1.bf16.msra.mxu0 0
        %424 = vmatprep.subr.bf16.mxu0 0
        %425 = vmatpush1.bf16.msra.mxu0 0
        %426 = vmatprep.subr.bf16.mxu0 0
        %427 = vmatpush1.bf16.msra.mxu0 0
        %428 = vmatprep.subr.bf16.mxu0 0
        %429 = vmatpush1.bf16.msra.mxu0 0
        %430 = vmatprep.mubr.bf16.mxu0 0
        %431 = vmatmul.mubr.bf16.gmra.mrb[0].mxu0 %v396
        %v432 = vpop.f32.mrb[0].mxu0
        %v433 = vadd.f32 0.0, %v432
        %v434 = vpop.f32.mrb[0].mxu0
        %v435 = vpop.f32.mrb[0].mxu0
        %v436 = vpop.f32.mrb[0].mxu0
        %437 = vdwg.mxu0
        %v438 = vld [vmem:[%s4] sm:$0xf]
        %v439 = vld [vmem:[%s4 + $0x4] sm:$0xf]
        %v440 = vld [vmem:[%s4 + $0x8] sm:$0xf]
        %v441 = vld [vmem:[%s4 + $0xc] sm:$0xf]
        %v446 = vunpack.c.l.b16 %v438
        %v447 = vunpack.c.l.b16 %v439
        %v448 = vunpack.c.l.b16 %v440
        %v449 = vunpack.c.l.b16 %v441
        %v450 = vpack.c.b16 %v447, %v446
        %v451 = vpack.c.b16 %v449, %v448
        %454 = vmatprep.subr.bf16.mxu0 0
        %455 = vmatpush1.bf16.msra.mxu0 %v450
        %456 = vmatprep.subr.bf16.mxu0 0
        %457 = vmatpush1.bf16.msra.mxu0 %v451
        %458 = vmatprep.subr.bf16.mxu0 0
        %459 = vmatpush1.bf16.msra.mxu0 0
        %460 = vmatprep.subr.bf16.mxu0 0
        %461 = vmatpush1.bf16.msra.mxu0 0
        %462 = vmatprep.subr.bf16.mxu0 0
        %463 = vmatpush1.bf16.msra.mxu0 0
        %464 = vmatprep.subr.bf16.mxu0 0
        %465 = vmatpush1.bf16.msra.mxu0 0
        %466 = vmatprep.subr.bf16.mxu0 0
        %467 = vmatpush1.bf16.msra.mxu0 0
        %468 = vmatprep.subr.bf16.mxu0 0
        %469 = vmatpush1.bf16.msra.mxu0 0
        %470 = vmatprep.subr.bf16.mxu0 0
        %471 = vmatpush1.bf16.msra.mxu0 0
        %472 = vmatprep.subr.bf16.mxu0 0
        %473 = vmatpush1.bf16.msra.mxu0 0
        %474 = vmatprep.subr.bf16.mxu0 0
        %475 = vmatpush1.bf16.msra.mxu0 0
        %476 = vmatprep.subr.bf16.mxu0 0
        %477 = vmatpush1.bf16.msra.mxu0 0
        %478 = vmatprep.subr.bf16.mxu0 0
        %479 = vmatpush1.bf16.msra.mxu0 0
        %480 = vmatprep.subr.bf16.mxu0 0
        %481 = vmatpush1.bf16.msra.mxu0 0
        %482 = vmatprep.subr.bf16.mxu0 0
        %483 = vmatpush1.bf16.msra.mxu0 0
        %484 = vmatprep.subr.bf16.mxu0 0
        %485 = vmatpush1.bf16.msra.mxu0 0
        %486 = vmatprep.mubr.bf16.mxu0 0
        %487 = vmatmul.mubr.bf16.gmra.mrb[0].mxu0 %v396
        %v488 = vpop.f32.mrb[0].mxu0
        %v489 = vadd.f32 0.0, %v488
        %v490 = vpop.f32.mrb[0].mxu0
        %v491 = vpop.f32.mrb[0].mxu0
        %v492 = vpop.f32.mrb[0].mxu0
        %493 = vdwg.mxu0
        %v494 = vpack.c.bf16 %v374, %v374
        %v495 = vpack.c.bf16 %v433, %v433
        %vm496 = vcmask 31744
        %v498 = vsel %vm496, %v494, 0
        %v501 = vsel %vm496, %v495, 0
        %503 = vmatprep.subr.bf16.mxu0 0
        %504 = vmatpush1.bf16.xpose.msra.mxu0 %v501
        %505 = vmatprep.subr.bf16.mxu0 0
        %506 = vmatpush1.bf16.xpose.msra.mxu0 0
        %507 = vmatprep.subr.bf16.mxu0 0
        %508 = vmatpush1.bf16.xpose.msra.mxu0 0
        %509 = vmatprep.subr.bf16.mxu0 0
        %510 = vmatpush1.bf16.xpose.msra.mxu0 0
        %511 = vmatprep.subr.bf16.mxu0 0
        %512 = vmatpush1.bf16.xpose.msra.mxu0 0
        %513 = vmatprep.subr.bf16.mxu0 0
        %514 = vmatpush1.bf16.xpose.msra.mxu0 0
        %515 = vmatprep.subr.bf16.mxu0 0
        %516 = vmatpush1.bf16.xpose.msra.mxu0 0
        %517 = vmatprep.subr.bf16.mxu0 0
        %518 = vmatpush1.bf16.xpose.msra.mxu0 0
        %519 = vmatprep.subr.bf16.mxu0 0
        %520 = vmatpush1.bf16.xpose.msra.mxu0 0
        %521 = vmatprep.subr.bf16.mxu0 0
        %522 = vmatpush1.bf16.xpose.msra.mxu0 0
        %523 = vmatprep.subr.bf16.mxu0 0
        %524 = vmatpush1.bf16.xpose.msra.mxu0 0
        %525 = vmatprep.subr.bf16.mxu0 0
        %526 = vmatpush1.bf16.xpose.msra.mxu0 0
        %527 = vmatprep.subr.bf16.mxu0 0
        %528 = vmatpush1.bf16.xpose.msra.mxu0 0
        %529 = vmatprep.subr.bf16.mxu0 0
        %530 = vmatpush1.bf16.xpose.msra.mxu0 0
        %531 = vmatprep.subr.bf16.mxu0 0
        %532 = vmatpush1.bf16.xpose.msra.mxu0 0
        %533 = vmatprep.subr.bf16.mxu0 0
        %534 = vmatpush1.bf16.xpose.msra.mxu0 0
        %535 = vmatprep.mubr.bf16.mxu0 0
        %536 = vmatmul.mubr.bf16.gmra.mrb[0].mxu0 %v498
        %v537 = vpop.f32.mrb[0].mxu0
        %v538 = vadd.f32 0.0, %v537
        %v539 = vpop.f32.mrb[0].mxu0
        %v540 = vpop.f32.mrb[0].mxu0
        %v541 = vpop.f32.mrb[0].mxu0
        %542 = vdwg.mxu0
        %vm543 = vcmask 64512
        %v544 = vsel %vm543, %v538, -inf
        %545 = vmax.xlane.f32.xlu0 %v544
        %v546 = vpop.xlane.xlu0 %545
        %v547 = vsub.f32 %v538, %v546
        %v548 = vmul.f32 %v547, 1.442695
        %v549 = vpow.pop %v548
        %v550 = vsel %vm543, %v549, 0.0
        %551 = vadd.xlane.f32.xlu0 %v550
        %v552 = vpop.xlane.xlu0 %551
        %v553 = vrcp.pop %v552
        %v554 = vmul.f32 %v549, %v553
        %v555 = vpack.c.bf16 %v554, %v554
        %v556 = vpack.c.bf16 %v489, %v489
        %v558 = vsel %vm543, %v555, 0
        %vm560 = vcmask 1043456
        %v562 = vsel %vm560, %v556, 0
        %564 = vmatprep.subr.bf16.mxu0 0
        %565 = vmatpush1.bf16.msra.mxu0 %v562
        %566 = vmatprep.subr.bf16.mxu0 0
        %567 = vmatpush1.bf16.msra.mxu0 0
        %568 = vmatprep.subr.bf16.mxu0 0
        %569 = vmatpush1.bf16.msra.mxu0 0
        %570 = vmatprep.subr.bf16.mxu0 0
        %571 = vmatpush1.bf16.msra.mxu0 0
        %572 = vmatprep.subr.bf16.mxu0 0
        %573 = vmatpush1.bf16.msra.mxu0 0
        %574 = vmatprep.subr.bf16.mxu0 0
        %575 = vmatpush1.bf16.msra.mxu0 0
        %576 = vmatprep.subr.bf16.mxu0 0
        %577 = vmatpush1.bf16.msra.mxu0 0
        %578 = vmatprep.subr.bf16.mxu0 0
        %579 = vmatpush1.bf16.msra.mxu0 0
        %580 = vmatprep.subr.bf16.mxu0 0
        %581 = vmatpush1.bf16.msra.mxu0 0
        %582 = vmatprep.subr.bf16.mxu0 0
        %583 = vmatpush1.bf16.msra.mxu0 0
        %584 = vmatprep.subr.bf16.mxu0 0
        %585 = vmatpush1.bf16.msra.mxu0 0
        %586 = vmatprep.subr.bf16.mxu0 0
        %587 = vmatpush1.bf16.msra.mxu0 0
        %588 = vmatprep.subr.bf16.mxu0 0
        %589 = vmatpush1.bf16.msra.mxu0 0
        %590 = vmatprep.subr.bf16.mxu0 0
        %591 = vmatpush1.bf16.msra.mxu0 0
        %592 = vmatprep.subr.bf16.mxu0 0
        %593 = vmatpush1.bf16.msra.mxu0 0
        %594 = vmatprep.subr.bf16.mxu0 0
        %595 = vmatpush1.bf16.msra.mxu0 0
        %596 = vmatprep.mubr.bf16.mxu0 0
        %597 = vmatmul.mubr.bf16.gmra.mrb[0].mxu0 %v558
        %v598 = vpop.f32.mrb[0].mxu0
        %v599 = vadd.f32 0.0, %v598
        %v600 = vpop.f32.mrb[0].mxu0
        %v601 = vpop.f32.mrb[0].mxu0
        %v602 = vpop.f32.mrb[0].mxu0
        %603 = vdwg.mxu0
        %v604 = vpack.c.bf16 %v599, %v599
        %v605 = vld [vmem:[%s5] sm:$0x3]
        %s606 = scalar_lea.vmem %s2, 16
        %v607 = vld [vmem:[%s606] sm:$0xf]
        %v608 = vld [vmem:[%s606 + $0x4] sm:$0xf]
        %v609 = vld [vmem:[%s606 + $0x8] sm:$0xf]
        %v610 = vld [vmem:[%s606 + $0xc] sm:$0xf]
        %v615 = vunpack.c.l.b16 %v607
        %v616 = vunpack.c.l.b16 %v608
        %v617 = vunpack.c.l.b16 %v609
        %v618 = vunpack.c.l.b16 %v610
        %v619 = vpack.c.b16 %v616, %v615
        %v620 = vpack.c.b16 %v618, %v617
        %623 = vmatprep.subr.bf16.mxu0 0
        %624 = vmatpush1.bf16.msra.mxu0 %v619
        %625 = vmatprep.subr.bf16.mxu0 0
        %626 = vmatpush1.bf16.msra.mxu0 %v620
        %627 = vmatprep.subr.bf16.mxu0 0
        %628 = vmatpush1.bf16.msra.mxu0 0
        %629 = vmatprep.subr.bf16.mxu0 0
        %630 = vmatpush1.bf16.msra.mxu0 0
        %631 = vmatprep.subr.bf16.mxu0 0
        %632 = vmatpush1.bf16.msra.mxu0 0
        %633 = vmatprep.subr.bf16.mxu0 0
        %634 = vmatpush1.bf16.msra.mxu0 0
        %635 = vmatprep.subr.bf16.mxu0 0
        %636 = vmatpush1.bf16.msra.mxu0 0
        %637 = vmatprep.subr.bf16.mxu0 0
        %638 = vmatpush1.bf16.msra.mxu0 0
        %639 = vmatprep.subr.bf16.mxu0 0
        %640 = vmatpush1.bf16.msra.mxu0 0
        %641 = vmatprep.subr.bf16.mxu0 0
        %642 = vmatpush1.bf16.msra.mxu0 0
        %643 = vmatprep.subr.bf16.mxu0 0
        %644 = vmatpush1.bf16.msra.mxu0 0
        %645 = vmatprep.subr.bf16.mxu0 0
        %646 = vmatpush1.bf16.msra.mxu0 0
        %647 = vmatprep.subr.bf16.mxu0 0
        %648 = vmatpush1.bf16.msra.mxu0 0
        %649 = vmatprep.subr.bf16.mxu0 0
        %650 = vmatpush1.bf16.msra.mxu0 0
        %651 = vmatprep.subr.bf16.mxu0 0
        %652 = vmatpush1.bf16.msra.mxu0 0
        %653 = vmatprep.subr.bf16.mxu0 0
        %654 = vmatpush1.bf16.msra.mxu0 0
        %655 = vmatprep.mubr.bf16.mxu0 0
        %656 = vmatmul.mubr.bf16.gmra.mrb[0].mxu0 %v337
        %v657 = vpop.f32.mrb[0].mxu0
        %v658 = vadd.f32 0.0, %v657
        %v659 = vpop.f32.mrb[0].mxu0
        %v660 = vpop.f32.mrb[0].mxu0
        %v661 = vpop.f32.mrb[0].mxu0
        %662 = vdwg.mxu0
        %s663 = scalar_lea.vmem %s3, 16
        %v664 = vld [vmem:[%s663] sm:$0xf]
        %v665 = vld [vmem:[%s663 + $0x4] sm:$0xf]
        %v666 = vld [vmem:[%s663 + $0x8] sm:$0xf]
        %v667 = vld [vmem:[%s663 + $0xc] sm:$0xf]
        %v672 = vunpack.c.l.b16 %v664
        %v673 = vunpack.c.l.b16 %v665
        %v674 = vunpack.c.l.b16 %v666
        %v675 = vunpack.c.l.b16 %v667
        %v676 = vpack.c.b16 %v673, %v672
        %v677 = vpack.c.b16 %v675, %v674
        %680 = vmatprep.subr.bf16.mxu0 0
        %681 = vmatpush1.bf16.msra.mxu0 %v676
        %682 = vmatprep.subr.bf16.mxu0 0
        %683 = vmatpush1.bf16.msra.mxu0 %v677
        %684 = vmatprep.subr.bf16.mxu0 0
        %685 = vmatpush1.bf16.msra.mxu0 0
        %686 = vmatprep.subr.bf16.mxu0 0
        %687 = vmatpush1.bf16.msra.mxu0 0
        %688 = vmatprep.subr.bf16.mxu0 0
        %689 = vmatpush1.bf16.msra.mxu0 0
        %690 = vmatprep.subr.bf16.mxu0 0
        %691 = vmatpush1.bf16.msra.mxu0 0
        %692 = vmatprep.subr.bf16.mxu0 0
        %693 = vmatpush1.bf16.msra.mxu0 0
        %694 = vmatprep.subr.bf16.mxu0 0
        %695 = vmatpush1.bf16.msra.mxu0 0
        %696 = vmatprep.subr.bf16.mxu0 0
        %697 = vmatpush1.bf16.msra.mxu0 0
        %698 = vmatprep.subr.bf16.mxu0 0
        %699 = vmatpush1.bf16.msra.mxu0 0
        %700 = vmatprep.subr.bf16.mxu0 0
        %701 = vmatpush1.bf16.msra.mxu0 0
        %702 = vmatprep.subr.bf16.mxu0 0
        %703 = vmatpush1.bf16.msra.mxu0 0
        %704 = vmatprep.subr.bf16.mxu0 0
        %705 = vmatpush1.bf16.msra.mxu0 0
        %706 = vmatprep.subr.bf16.mxu0 0
        %707 = vmatpush1.bf16.msra.mxu0 0
        %708 = vmatprep.subr.bf16.mxu0 0
        %709 = vmatpush1.bf16.msra.mxu0 0
        %710 = vmatprep.subr.bf16.mxu0 0
        %711 = vmatpush1.bf16.msra.mxu0 0
        %712 = vmatprep.mubr.bf16.mxu0 0
        %713 = vmatmul.mubr.bf16.gmra.mrb[0].mxu0 %v396
        %v714 = vpop.f32.mrb[0].mxu0
        %v715 = vadd.f32 0.0, %v714
        %v716 = vpop.f32.mrb[0].mxu0
        %v717 = vpop.f32.mrb[0].mxu0
        %v718 = vpop.f32.mrb[0].mxu0
        %719 = vdwg.mxu0
        %s720 = scalar_lea.vmem %s4, 16
        %v721 = vld [vmem:[%s720] sm:$0xf]
        %v722 = vld [vmem:[%s720 + $0x4] sm:$0xf]
        %v723 = vld [vmem:[%s720 + $0x8] sm:$0xf]
        %v724 = vld [vmem:[%s720 + $0xc] sm:$0xf]
        %v729 = vunpack.c.l.b16 %v721
        %v730 = vunpack.c.l.b16 %v722
        %v731 = vunpack.c.l.b16 %v723
        %v732 = vunpack.c.l.b16 %v724
        %v733 = vpack.c.b16 %v730, %v729
        %v734 = vpack.c.b16 %v732, %v731
        %737 = vmatprep.subr.bf16.mxu0 0
        %738 = vmatpush1.bf16.msra.mxu0 %v733
        %739 = vmatprep.subr.bf16.mxu0 0
        %740 = vmatpush1.bf16.msra.mxu0 %v734
        %741 = vmatprep.subr.bf16.mxu0 0
        %742 = vmatpush1.bf16.msra.mxu0 0
        %743 = vmatprep.subr.bf16.mxu0 0
        %744 = vmatpush1.bf16.msra.mxu0 0
        %745 = vmatprep.subr.bf16.mxu0 0
        %746 = vmatpush1.bf16.msra.mxu0 0
        %747 = vmatprep.subr.bf16.mxu0 0
        %748 = vmatpush1.bf16.msra.mxu0 0
        %749 = vmatprep.subr.bf16.mxu0 0
        %750 = vmatpush1.bf16.msra.mxu0 0
        %751 = vmatprep.subr.bf16.mxu0 0
        %752 = vmatpush1.bf16.msra.mxu0 0
        %753 = vmatprep.subr.bf16.mxu0 0
        %754 = vmatpush1.bf16.msra.mxu0 0
        %755 = vmatprep.subr.bf16.mxu0 0
        %756 = vmatpush1.bf16.msra.mxu0 0
        %757 = vmatprep.subr.bf16.mxu0 0
        %758 = vmatpush1.bf16.msra.mxu0 0
        %759 = vmatprep.subr.bf16.mxu0 0
        %760 = vmatpush1.bf16.msra.mxu0 0
        %761 = vmatprep.subr.bf16.mxu0 0
        %762 = vmatpush1.bf16.msra.mxu0 0
        %763 = vmatprep.subr.bf16.mxu0 0
        %764 = vmatpush1.bf16.msra.mxu0 0
        %765 = vmatprep.subr.bf16.mxu0 0
        %766 = vmatpush1.bf16.msra.mxu0 0
        %767 = vmatprep.subr.bf16.mxu0 0
        %768 = vmatpush1.bf16.msra.mxu0 0
        %769 = vmatprep.mubr.bf16.mxu0 0
        %770 = vmatmul.mubr.bf16.gmra.mrb[0].mxu0 %v396
        %v771 = vpop.f32.mrb[0].mxu0
        %v772 = vadd.f32 0.0, %v771
        %v773 = vpop.f32.mrb[0].mxu0
        %v774 = vpop.f32.mrb[0].mxu0
        %v775 = vpop.f32.mrb[0].mxu0
        %776 = vdwg.mxu0
        %v777 = vpack.c.bf16 %v658, %v658
        %v778 = vpack.c.bf16 %v715, %v715
        %v780 = vsel %vm496, %v777, 0
        %v783 = vsel %vm496, %v778, 0
        %785 = vmatprep.subr.bf16.mxu0 0
        %786 = vmatpush1.bf16.xpose.msra.mxu0 %v783
        %787 = vmatprep.subr.bf16.mxu0 0
        %788 = vmatpush1.bf16.xpose.msra.mxu0 0
        %789 = vmatprep.subr.bf16.mxu0 0
        %790 = vmatpush1.bf16.xpose.msra.mxu0 0
        %791 = vmatprep.subr.bf16.mxu0 0
        %792 = vmatpush1.bf16.xpose.msra.mxu0 0
        %793 = vmatprep.subr.bf16.mxu0 0
        %794 = vmatpush1.bf16.xpose.msra.mxu0 0
        %795 = vmatprep.subr.bf16.mxu0 0
        %796 = vmatpush1.bf16.xpose.msra.mxu0 0
        %797 = vmatprep.subr.bf16.mxu0 0
        %798 = vmatpush1.bf16.xpose.msra.mxu0 0
        %799 = vmatprep.subr.bf16.mxu0 0
        %800 = vmatpush1.bf16.xpose.msra.mxu0 0
        %801 = vmatprep.subr.bf16.mxu0 0
        %802 = vmatpush1.bf16.xpose.msra.mxu0 0
        %803 = vmatprep.subr.bf16.mxu0 0
        %804 = vmatpush1.bf16.xpose.msra.mxu0 0
        %805 = vmatprep.subr.bf16.mxu0 0
        %806 = vmatpush1.bf16.xpose.msra.mxu0 0
        %807 = vmatprep.subr.bf16.mxu0 0
        %808 = vmatpush1.bf16.xpose.msra.mxu0 0
        %809 = vmatprep.subr.bf16.mxu0 0
        %810 = vmatpush1.bf16.xpose.msra.mxu0 0
        %811 = vmatprep.subr.bf16.mxu0 0
        %812 = vmatpush1.bf16.xpose.msra.mxu0 0
        %813 = vmatprep.subr.bf16.mxu0 0
        %814 = vmatpush1.bf16.xpose.msra.mxu0 0
        %815 = vmatprep.subr.bf16.mxu0 0
        %816 = vmatpush1.bf16.xpose.msra.mxu0 0
        %817 = vmatprep.mubr.bf16.mxu0 0
        %818 = vmatmul.mubr.bf16.gmra.mrb[0].mxu0 %v780
        %v819 = vpop.f32.mrb[0].mxu0
        %v820 = vadd.f32 0.0, %v819
        %v821 = vpop.f32.mrb[0].mxu0
        %v822 = vpop.f32.mrb[0].mxu0
        %v823 = vpop.f32.mrb[0].mxu0
        %824 = vdwg.mxu0
        %v825 = vsel %vm543, %v820, -inf
        %826 = vmax.xlane.f32.xlu0 %v825
        %v827 = vpop.xlane.xlu0 %826
        %v828 = vsub.f32 %v820, %v827
        %v829 = vmul.f32 %v828, 1.442695
        %v830 = vpow.pop %v829
        %v831 = vsel %vm543, %v830, 0.0
        %832 = vadd.xlane.f32.xlu0 %v831
        %v833 = vpop.xlane.xlu0 %832
        %v834 = vrcp.pop %v833
        %v835 = vmul.f32 %v830, %v834
        %v836 = vpack.c.bf16 %v835, %v835
        %v837 = vpack.c.bf16 %v772, %v772
        %v839 = vsel %vm543, %v836, 0
        %v842 = vsel %vm560, %v837, 0
        %844 = vmatprep.subr.bf16.mxu0 0
        %845 = vmatpush1.bf16.msra.mxu0 %v842
        %846 = vmatprep.subr.bf16.mxu0 0
        %847 = vmatpush1.bf16.msra.mxu0 0
        %848 = vmatprep.subr.bf16.mxu0 0
        %849 = vmatpush1.bf16.msra.mxu0 0
        %850 = vmatprep.subr.bf16.mxu0 0
        %851 = vmatpush1.bf16.msra.mxu0 0
        %852 = vmatprep.subr.bf16.mxu0 0
        %853 = vmatpush1.bf16.msra.mxu0 0
        %854 = vmatprep.subr.bf16.mxu0 0
        %855 = vmatpush1.bf16.msra.mxu0 0
        %856 = vmatprep.subr.bf16.mxu0 0
        %857 = vmatpush1.bf16.msra.mxu0 0
        %858 = vmatprep.subr.bf16.mxu0 0
        %859 = vmatpush1.bf16.msra.mxu0 0
        %860 = vmatprep.subr.bf16.mxu0 0
        %861 = vmatpush1.bf16.msra.mxu0 0
        %862 = vmatprep.subr.bf16.mxu0 0
        %863 = vmatpush1.bf16.msra.mxu0 0
        %864 = vmatprep.subr.bf16.mxu0 0
        %865 = vmatpush1.bf16.msra.mxu0 0
        %866 = vmatprep.subr.bf16.mxu0 0
        %867 = vmatpush1.bf16.msra.mxu0 0
        %868 = vmatprep.subr.bf16.mxu0 0
        %869 = vmatpush1.bf16.msra.mxu0 0
        %870 = vmatprep.subr.bf16.mxu0 0
        %871 = vmatpush1.bf16.msra.mxu0 0
        %872 = vmatprep.subr.bf16.mxu0 0
        %873 = vmatpush1.bf16.msra.mxu0 0
        %874 = vmatprep.subr.bf16.mxu0 0
        %875 = vmatpush1.bf16.msra.mxu0 0
        %876 = vmatprep.mubr.bf16.mxu0 0
        %877 = vmatmul.mubr.bf16.gmra.mrb[0].mxu0 %v839
        %v878 = vpop.f32.mrb[0].mxu0
        %v879 = vadd.f32 0.0, %v878
        %v880 = vpop.f32.mrb[0].mxu0
        %v881 = vpop.f32.mrb[0].mxu0
        %v882 = vpop.f32.mrb[0].mxu0
        %883 = vdwg.mxu0
        %v884 = vpack.c.bf16 %v879, %v879
        %s885 = scalar_lea.vmem %s5, 2
        %v886 = vld [vmem:[%s885] sm:$0x3]
        %v888 = vsel %vm496, %v884, 0
        %vm890 = vcmask 1041408
        %v892 = vsel %vm890, %v886, 0
        %894 = vmatprep.subr.bf16.mxu0 0
        %895 = vmatpush1.bf16.msra.mxu0 %v892
        %896 = vmatprep.subr.bf16.mxu0 0
        %897 = vmatpush1.bf16.msra.mxu0 0
        %898 = vmatprep.subr.bf16.mxu0 0
        %899 = vmatpush1.bf16.msra.mxu0 0
        %900 = vmatprep.subr.bf16.mxu0 0
        %901 = vmatpush1.bf16.msra.mxu0 0
        %902 = vmatprep.subr.bf16.mxu0 0
        %903 = vmatpush1.bf16.msra.mxu0 0
        %904 = vmatprep.subr.bf16.mxu0 0
        %905 = vmatpush1.bf16.msra.mxu0 0
        %906 = vmatprep.subr.bf16.mxu0 0
        %907 = vmatpush1.bf16.msra.mxu0 0
        %908 = vmatprep.subr.bf16.mxu0 0
        %909 = vmatpush1.bf16.msra.mxu0 0
        %910 = vmatprep.subr.bf16.mxu0 0
        %911 = vmatpush1.bf16.msra.mxu0 0
        %912 = vmatprep.subr.bf16.mxu0 0
        %913 = vmatpush1.bf16.msra.mxu0 0
        %914 = vmatprep.subr.bf16.mxu0 0
        %915 = vmatpush1.bf16.msra.mxu0 0
        %916 = vmatprep.subr.bf16.mxu0 0
        %917 = vmatpush1.bf16.msra.mxu0 0
        %918 = vmatprep.subr.bf16.mxu0 0
        %919 = vmatpush1.bf16.msra.mxu0 0
        %920 = vmatprep.subr.bf16.mxu0 0
        %921 = vmatpush1.bf16.msra.mxu0 0
        %922 = vmatprep.subr.bf16.mxu0 0
        %923 = vmatpush1.bf16.msra.mxu0 0
        %924 = vmatprep.subr.bf16.mxu0 0
        %925 = vmatpush1.bf16.msra.mxu0 0
        %926 = vmatprep.mubr.bf16.mxu0 0
        %927 = vmatmul.mubr.bf16.gmra.mrb[0].mxu0 %v888
        %v928 = vpop.f32.mrb[0].mxu0
        %v929 = vadd.f32 0.0, %v928
        %v930 = vpop.f32.mrb[0].mxu0
        %v931 = vpop.f32.mrb[0].mxu0
        %v932 = vpop.f32.mrb[0].mxu0
        %933 = vdwg.mxu0
        %v935 = vsel %vm496, %v604, 0
        %v938 = vsel %vm890, %v605, 0
        %940 = vmatprep.subr.bf16.mxu0 0
        %941 = vmatpush1.bf16.msra.mxu0 %v938
        %942 = vmatprep.subr.bf16.mxu0 0
        %943 = vmatpush1.bf16.msra.mxu0 0
        %944 = vmatprep.subr.bf16.mxu0 0
        %945 = vmatpush1.bf16.msra.mxu0 0
        %946 = vmatprep.subr.bf16.mxu0 0
        %947 = vmatpush1.bf16.msra.mxu0 0
        %948 = vmatprep.subr.bf16.mxu0 0
        %949 = vmatpush1.bf16.msra.mxu0 0
        %950 = vmatprep.subr.bf16.mxu0 0
        %951 = vmatpush1.bf16.msra.mxu0 0
        %952 = vmatprep.subr.bf16.mxu0 0
        %953 = vmatpush1.bf16.msra.mxu0 0
        %954 = vmatprep.subr.bf16.mxu0 0
        %955 = vmatpush1.bf16.msra.mxu0 0
        %956 = vmatprep.subr.bf16.mxu0 0
        %957 = vmatpush1.bf16.msra.mxu0 0
        %958 = vmatprep.subr.bf16.mxu0 0
        %959 = vmatpush1.bf16.msra.mxu0 0
        %960 = vmatprep.subr.bf16.mxu0 0
        %961 = vmatpush1.bf16.msra.mxu0 0
        %962 = vmatprep.subr.bf16.mxu0 0
        %963 = vmatpush1.bf16.msra.mxu0 0
        %964 = vmatprep.subr.bf16.mxu0 0
        %965 = vmatpush1.bf16.msra.mxu0 0
        %966 = vmatprep.subr.bf16.mxu0 0
        %967 = vmatpush1.bf16.msra.mxu0 0
        %968 = vmatprep.subr.bf16.mxu0 0
        %969 = vmatpush1.bf16.msra.mxu0 0
        %970 = vmatprep.subr.bf16.mxu0 0
        %971 = vmatpush1.bf16.msra.mxu0 0
        %972 = vmatprep.mubr.bf16.mxu0 0
        %973 = vmatmul.mubr.bf16.gmra.mrb[0].mxu0 %v935
        %v974 = vpop.f32.mrb[0].mxu0
        %v975 = vadd.f32 %v929, %v974
        %v976 = vpop.f32.mrb[0].mxu0
        %v977 = vpop.f32.mrb[0].mxu0
        %v978 = vpop.f32.mrb[0].mxu0
        %979 = vdwg.mxu0
        %s980 = scalar_lea.vmem %s2, 32
        %v981 = vld [vmem:[%s980] sm:$0xf]
        %v982 = vld [vmem:[%s980 + $0x4] sm:$0xf]
        %v983 = vld [vmem:[%s980 + $0x8] sm:$0xf]
        %v984 = vld [vmem:[%s980 + $0xc] sm:$0xf]
        %v989 = vunpack.c.l.b16 %v981
        %v990 = vunpack.c.l.b16 %v982
        %v991 = vunpack.c.l.b16 %v983
        %v992 = vunpack.c.l.b16 %v984
        %v993 = vpack.c.b16 %v990, %v989
        %v994 = vpack.c.b16 %v992, %v991
        %997 = vmatprep.subr.bf16.mxu0 0
        %998 = vmatpush1.bf16.msra.mxu0 %v993
        %999 = vmatprep.subr.bf16.mxu0 0
        %1000 = vmatpush1.bf16.msra.mxu0 %v994
        %1001 = vmatprep.subr.bf16.mxu0 0
        %1002 = vmatpush1.bf16.msra.mxu0 0
        %1003 = vmatprep.subr.bf16.mxu0 0
        %1004 = vmatpush1.bf16.msra.mxu0 0
        %1005 = vmatprep.subr.bf16.mxu0 0
        %1006 = vmatpush1.bf16.msra.mxu0 0
        %1007 = vmatprep.subr.bf16.mxu0 0
        %1008 = vmatpush1.bf16.msra.mxu0 0
        %1009 = vmatprep.subr.bf16.mxu0 0
        %1010 = vmatpush1.bf16.msra.mxu0 0
        %1011 = vmatprep.subr.bf16.mxu0 0
        %1012 = vmatpush1.bf16.msra.mxu0 0
        %1013 = vmatprep.subr.bf16.mxu0 0
        %1014 = vmatpush1.bf16.msra.mxu0 0
        %1015 = vmatprep.subr.bf16.mxu0 0
        %1016 = vmatpush1.bf16.msra.mxu0 0
        %1017 = vmatprep.subr.bf16.mxu0 0
        %1018 = vmatpush1.bf16.msra.mxu0 0
        %1019 = vmatprep.subr.bf16.mxu0 0
        %1020 = vmatpush1.bf16.msra.mxu0 0
        %1021 = vmatprep.subr.bf16.mxu0 0
        %1022 = vmatpush1.bf16.msra.mxu0 0
        %1023 = vmatprep.subr.bf16.mxu0 0
        %1024 = vmatpush1.bf16.msra.mxu0 0
        %1025 = vmatprep.subr.bf16.mxu0 0
        %1026 = vmatpush1.bf16.msra.mxu0 0
        %1027 = vmatprep.subr.bf16.mxu0 0
        %1028 = vmatpush1.bf16.msra.mxu0 0
        %1029 = vmatprep.mubr.bf16.mxu0 0
        %1030 = vmatmul.mubr.bf16.gmra.mrb[0].mxu0 %v337
        %v1031 = vpop.f32.mrb[0].mxu0
        %v1032 = vadd.f32 0.0, %v1031
        %v1033 = vpop.f32.mrb[0].mxu0
        %v1034 = vpop.f32.mrb[0].mxu0
        %v1035 = vpop.f32.mrb[0].mxu0
        %1036 = vdwg.mxu0
        %s1037 = scalar_lea.vmem %s3, 32
        %v1038 = vld [vmem:[%s1037] sm:$0xf]
        %v1039 = vld [vmem:[%s1037 + $0x4] sm:$0xf]
        %v1040 = vld [vmem:[%s1037 + $0x8] sm:$0xf]
        %v1041 = vld [vmem:[%s1037 + $0xc] sm:$0xf]
        %v1046 = vunpack.c.l.b16 %v1038
        %v1047 = vunpack.c.l.b16 %v1039
        %v1048 = vunpack.c.l.b16 %v1040
        %v1049 = vunpack.c.l.b16 %v1041
        %v1050 = vpack.c.b16 %v1047, %v1046
        %v1051 = vpack.c.b16 %v1049, %v1048
        %1054 = vmatprep.subr.bf16.mxu0 0
        %1055 = vmatpush1.bf16.msra.mxu0 %v1050
        %1056 = vmatprep.subr.bf16.mxu0 0
        %1057 = vmatpush1.bf16.msra.mxu0 %v1051
        %1058 = vmatprep.subr.bf16.mxu0 0
        %1059 = vmatpush1.bf16.msra.mxu0 0
        %1060 = vmatprep.subr.bf16.mxu0 0
        %1061 = vmatpush1.bf16.msra.mxu0 0
        %1062 = vmatprep.subr.bf16.mxu0 0
        %1063 = vmatpush1.bf16.msra.mxu0 0
        %1064 = vmatprep.subr.bf16.mxu0 0
        %1065 = vmatpush1.bf16.msra.mxu0 0
        %1066 = vmatprep.subr.bf16.mxu0 0
        %1067 = vmatpush1.bf16.msra.mxu0 0
        %1068 = vmatprep.subr.bf16.mxu0 0
        %1069 = vmatpush1.bf16.msra.mxu0 0
        %1070 = vmatprep.subr.bf16.mxu0 0
        %1071 = vmatpush1.bf16.msra.mxu0 0
        %1072 = vmatprep.subr.bf16.mxu0 0
        %1073 = vmatpush1.bf16.msra.mxu0 0
        %1074 = vmatprep.subr.bf16.mxu0 0
        %1075 = vmatpush1.bf16.msra.mxu0 0
        %1076 = vmatprep.subr.bf16.mxu0 0
        %1077 = vmatpush1.bf16.msra.mxu0 0
        %1078 = vmatprep.subr.bf16.mxu0 0
        %1079 = vmatpush1.bf16.msra.mxu0 0
        %1080 = vmatprep.subr.bf16.mxu0 0
        %1081 = vmatpush1.bf16.msra.mxu0 0
        %1082 = vmatprep.subr.bf16.mxu0 0
        %1083 = vmatpush1.bf16.msra.mxu0 0
        %1084 = vmatprep.subr.bf16.mxu0 0
        %1085 = vmatpush1.bf16.msra.mxu0 0
        %1086 = vmatprep.mubr.bf16.mxu0 0
        %1087 = vmatmul.mubr.bf16.gmra.mrb[0].mxu0 %v396
        %v1088 = vpop.f32.mrb[0].mxu0
        %v1089 = vadd.f32 0.0, %v1088
        %v1090 = vpop.f32.mrb[0].mxu0
        %v1091 = vpop.f32.mrb[0].mxu0
        %v1092 = vpop.f32.mrb[0].mxu0
        %1093 = vdwg.mxu0
        %s1094 = scalar_lea.vmem %s4, 32
        %v1095 = vld [vmem:[%s1094] sm:$0xf]
        %v1096 = vld [vmem:[%s1094 + $0x4] sm:$0xf]
        %v1097 = vld [vmem:[%s1094 + $0x8] sm:$0xf]
        %v1098 = vld [vmem:[%s1094 + $0xc] sm:$0xf]
        %v1103 = vunpack.c.l.b16 %v1095
        %v1104 = vunpack.c.l.b16 %v1096
        %v1105 = vunpack.c.l.b16 %v1097
        %v1106 = vunpack.c.l.b16 %v1098
        %v1107 = vpack.c.b16 %v1104, %v1103
        %v1108 = vpack.c.b16 %v1106, %v1105
        %1111 = vmatprep.subr.bf16.mxu0 0
        %1112 = vmatpush1.bf16.msra.mxu0 %v1107
        %1113 = vmatprep.subr.bf16.mxu0 0
        %1114 = vmatpush1.bf16.msra.mxu0 %v1108
        %1115 = vmatprep.subr.bf16.mxu0 0
        %1116 = vmatpush1.bf16.msra.mxu0 0
        %1117 = vmatprep.subr.bf16.mxu0 0
        %1118 = vmatpush1.bf16.msra.mxu0 0
        %1119 = vmatprep.subr.bf16.mxu0 0
        %1120 = vmatpush1.bf16.msra.mxu0 0
        %1121 = vmatprep.subr.bf16.mxu0 0
        %1122 = vmatpush1.bf16.msra.mxu0 0
        %1123 = vmatprep.subr.bf16.mxu0 0
        %1124 = vmatpush1.bf16.msra.mxu0 0
        %1125 = vmatprep.subr.bf16.mxu0 0
        %1126 = vmatpush1.bf16.msra.mxu0 0
        %1127 = vmatprep.subr.bf16.mxu0 0
        %1128 = vmatpush1.bf16.msra.mxu0 0
        %1129 = vmatprep.subr.bf16.mxu0 0
        %1130 = vmatpush1.bf16.msra.mxu0 0
        %1131 = vmatprep.subr.bf16.mxu0 0
        %1132 = vmatpush1.bf16.msra.mxu0 0
        %1133 = vmatprep.subr.bf16.mxu0 0
        %1134 = vmatpush1.bf16.msra.mxu0 0
        %1135 = vmatprep.subr.bf16.mxu0 0
        %1136 = vmatpush1.bf16.msra.mxu0 0
        %1137 = vmatprep.subr.bf16.mxu0 0
        %1138 = vmatpush1.bf16.msra.mxu0 0
        %1139 = vmatprep.subr.bf16.mxu0 0
        %1140 = vmatpush1.bf16.msra.mxu0 0
        %1141 = vmatprep.subr.bf16.mxu0 0
        %1142 = vmatpush1.bf16.msra.mxu0 0
        %1143 = vmatprep.mubr.bf16.mxu0 0
        %1144 = vmatmul.mubr.bf16.gmra.mrb[0].mxu0 %v396
        %v1145 = vpop.f32.mrb[0].mxu0
        %v1146 = vadd.f32 0.0, %v1145
        %v1147 = vpop.f32.mrb[0].mxu0
        %v1148 = vpop.f32.mrb[0].mxu0
        %v1149 = vpop.f32.mrb[0].mxu0
        %1150 = vdwg.mxu0
        %v1151 = vpack.c.bf16 %v1032, %v1032
        %v1152 = vpack.c.bf16 %v1089, %v1089
        %v1154 = vsel %vm496, %v1151, 0
        %v1157 = vsel %vm496, %v1152, 0
        %1159 = vmatprep.subr.bf16.mxu0 0
        %1160 = vmatpush1.bf16.xpose.msra.mxu0 %v1157
        %1161 = vmatprep.subr.bf16.mxu0 0
        %1162 = vmatpush1.bf16.xpose.msra.mxu0 0
        %1163 = vmatprep.subr.bf16.mxu0 0
        %1164 = vmatpush1.bf16.xpose.msra.mxu0 0
        %1165 = vmatprep.subr.bf16.mxu0 0
        %1166 = vmatpush1.bf16.xpose.msra.mxu0 0
        %1167 = vmatprep.subr.bf16.mxu0 0
        %1168 = vmatpush1.bf16.xpose.msra.mxu0 0
        %1169 = vmatprep.subr.bf16.mxu0 0
        %1170 = vmatpush1.bf16.xpose.msra.mxu0 0
        %1171 = vmatprep.subr.bf16.mxu0 0
        %1172 = vmatpush1.bf16.xpose.msra.mxu0 0
        %1173 = vmatprep.subr.bf16.mxu0 0
        %1174 = vmatpush1.bf16.xpose.msra.mxu0 0
        %1175 = vmatprep.subr.bf16.mxu0 0
        %1176 = vmatpush1.bf16.xpose.msra.mxu0 0
        %1177 = vmatprep.subr.bf16.mxu0 0
        %1178 = vmatpush1.bf16.xpose.msra.mxu0 0
        %1179 = vmatprep.subr.bf16.mxu0 0
        %1180 = vmatpush1.bf16.xpose.msra.mxu0 0
        %1181 = vmatprep.subr.bf16.mxu0 0
        %1182 = vmatpush1.bf16.xpose.msra.mxu0 0
        %1183 = vmatprep.subr.bf16.mxu0 0
        %1184 = vmatpush1.bf16.xpose.msra.mxu0 0
        %1185 = vmatprep.subr.bf16.mxu0 0
        %1186 = vmatpush1.bf16.xpose.msra.mxu0 0
        %1187 = vmatprep.subr.bf16.mxu0 0
        %1188 = vmatpush1.bf16.xpose.msra.mxu0 0
        %1189 = vmatprep.subr.bf16.mxu0 0
        %1190 = vmatpush1.bf16.xpose.msra.mxu0 0
        %1191 = vmatprep.mubr.bf16.mxu0 0
        %1192 = vmatmul.mubr.bf16.gmra.mrb[0].mxu0 %v1154
        %v1193 = vpop.f32.mrb[0].mxu0
        %v1194 = vadd.f32 0.0, %v1193
        %v1195 = vpop.f32.mrb[0].mxu0
        %v1196 = vpop.f32.mrb[0].mxu0
        %v1197 = vpop.f32.mrb[0].mxu0
        %1198 = vdwg.mxu0
        %v1199 = vsel %vm543, %v1194, -inf
        %1200 = vmax.xlane.f32.xlu0 %v1199
        %v1201 = vpop.xlane.xlu0 %1200
        %v1202 = vsub.f32 %v1194, %v1201
        %v1203 = vmul.f32 %v1202, 1.442695
        %v1204 = vpow.pop %v1203
        %v1205 = vsel %vm543, %v1204, 0.0
        %1206 = vadd.xlane.f32.xlu0 %v1205
        %v1207 = vpop.xlane.xlu0 %1206
        %v1208 = vrcp.pop %v1207
        %v1209 = vmul.f32 %v1204, %v1208
        %v1210 = vpack.c.bf16 %v1209, %v1209
        %v1211 = vpack.c.bf16 %v1146, %v1146
        %v1213 = vsel %vm543, %v1210, 0
        %v1216 = vsel %vm560, %v1211, 0
        %1218 = vmatprep.subr.bf16.mxu0 0
        %1219 = vmatpush1.bf16.msra.mxu0 %v1216
        %1220 = vmatprep.subr.bf16.mxu0 0
        %1221 = vmatpush1.bf16.msra.mxu0 0
        %1222 = vmatprep.subr.bf16.mxu0 0
        %1223 = vmatpush1.bf16.msra.mxu0 0
        %1224 = vmatprep.subr.bf16.mxu0 0
        %1225 = vmatpush1.bf16.msra.mxu0 0
        %1226 = vmatprep.subr.bf16.mxu0 0
        %1227 = vmatpush1.bf16.msra.mxu0 0
        %1228 = vmatprep.subr.bf16.mxu0 0
        %1229 = vmatpush1.bf16.msra.mxu0 0
        %1230 = vmatprep.subr.bf16.mxu0 0
        %1231 = vmatpush1.bf16.msra.mxu0 0
        %1232 = vmatprep.subr.bf16.mxu0 0
        %1233 = vmatpush1.bf16.msra.mxu0 0
        %1234 = vmatprep.subr.bf16.mxu0 0
        %1235 = vmatpush1.bf16.msra.mxu0 0
        %1236 = vmatprep.subr.bf16.mxu0 0
        %1237 = vmatpush1.bf16.msra.mxu0 0
        %1238 = vmatprep.subr.bf16.mxu0 0
        %1239 = vmatpush1.bf16.msra.mxu0 0
        %1240 = vmatprep.subr.bf16.mxu0 0
        %1241 = vmatpush1.bf16.msra.mxu0 0
        %1242 = vmatprep.subr.bf16.mxu0 0
        %1243 = vmatpush1.bf16.msra.mxu0 0
        %1244 = vmatprep.subr.bf16.mxu0 0
        %1245 = vmatpush1.bf16.msra.mxu0 0
        %1246 = vmatprep.subr.bf16.mxu0 0
        %1247 = vmatpush1.bf16.msra.mxu0 0
        %1248 = vmatprep.subr.bf16.mxu0 0
        %1249 = vmatpush1.bf16.msra.mxu0 0
        %1250 = vmatprep.mubr.bf16.mxu0 0
        %1251 = vmatmul.mubr.bf16.gmra.mrb[0].mxu0 %v1213
        %v1252 = vpop.f32.mrb[0].mxu0
        %v1253 = vadd.f32 0.0, %v1252
        %v1254 = vpop.f32.mrb[0].mxu0
        %v1255 = vpop.f32.mrb[0].mxu0
        %v1256 = vpop.f32.mrb[0].mxu0
        %1257 = vdwg.mxu0
        %v1258 = vpack.c.bf16 %v1253, %v1253
        %s1259 = scalar_lea.vmem %s5, 4
        %v1260 = vld [vmem:[%s1259] sm:$0x3]
        %v1262 = vsel %vm496, %v1258, 0
        %v1265 = vsel %vm890, %v1260, 0
        %1267 = vmatprep.subr.bf16.mxu0 0
        %1268 = vmatpush1.bf16.msra.mxu0 %v1265
        %1269 = vmatprep.subr.bf16.mxu0 0
        %1270 = vmatpush1.bf16.msra.mxu0 0
        %1271 = vmatprep.subr.bf16.mxu0 0
        %1272 = vmatpush1.bf16.msra.mxu0 0
        %1273 = vmatprep.subr.bf16.mxu0 0
        %1274 = vmatpush1.bf16.msra.mxu0 0
        %1275 = vmatprep.subr.bf16.mxu0 0
        %1276 = vmatpush1.bf16.msra.mxu0 0
        %1277 = vmatprep.subr.bf16.mxu0 0
        %1278 = vmatpush1.bf16.msra.mxu0 0
        %1279 = vmatprep.subr.bf16.mxu0 0
        %1280 = vmatpush1.bf16.msra.mxu0 0
        %1281 = vmatprep.subr.bf16.mxu0 0
        %1282 = vmatpush1.bf16.msra.mxu0 0
        %1283 = vmatprep.subr.bf16.mxu0 0
        %1284 = vmatpush1.bf16.msra.mxu0 0
        %1285 = vmatprep.subr.bf16.mxu0 0
        %1286 = vmatpush1.bf16.msra.mxu0 0
        %1287 = vmatprep.subr.bf16.mxu0 0
        %1288 = vmatpush1.bf16.msra.mxu0 0
        %1289 = vmatprep.subr.bf16.mxu0 0
        %1290 = vmatpush1.bf16.msra.mxu0 0
        %1291 = vmatprep.subr.bf16.mxu0 0
        %1292 = vmatpush1.bf16.msra.mxu0 0
        %1293 = vmatprep.subr.bf16.mxu0 0
        %1294 = vmatpush1.bf16.msra.mxu0 0
        %1295 = vmatprep.subr.bf16.mxu0 0
        %1296 = vmatpush1.bf16.msra.mxu0 0
        %1297 = vmatprep.subr.bf16.mxu0 0
        %1298 = vmatpush1.bf16.msra.mxu0 0
        %1299 = vmatprep.mubr.bf16.mxu0 0
        %1300 = vmatmul.mubr.bf16.gmra.mrb[0].mxu0 %v1262
        %v1301 = vpop.f32.mrb[0].mxu0
        %v1302 = vadd.f32 0.0, %v1301
        %v1303 = vpop.f32.mrb[0].mxu0
        %v1304 = vpop.f32.mrb[0].mxu0
        %v1305 = vpop.f32.mrb[0].mxu0
        %1306 = vdwg.mxu0
        %v1307 = vadd.f32 %v975, %v1302
        %s1308 = scalar_lea.vmem %s2, 48
        %v1309 = vld [vmem:[%s1308] sm:$0xf]
        %v1310 = vld [vmem:[%s1308 + $0x4] sm:$0xf]
        %v1311 = vld [vmem:[%s1308 + $0x8] sm:$0xf]
        %v1312 = vld [vmem:[%s1308 + $0xc] sm:$0xf]
        %v1317 = vunpack.c.l.b16 %v1309
        %v1318 = vunpack.c.l.b16 %v1310
        %v1319 = vunpack.c.l.b16 %v1311
        %v1320 = vunpack.c.l.b16 %v1312
        %v1321 = vpack.c.b16 %v1318, %v1317
        %v1322 = vpack.c.b16 %v1320, %v1319
        %1325 = vmatprep.subr.bf16.mxu0 0
        %1326 = vmatpush1.bf16.msra.mxu0 %v1321
        %1327 = vmatprep.subr.bf16.mxu0 0
        %1328 = vmatpush1.bf16.msra.mxu0 %v1322
        %1329 = vmatprep.subr.bf16.mxu0 0
        %1330 = vmatpush1.bf16.msra.mxu0 0
        %1331 = vmatprep.subr.bf16.mxu0 0
        %1332 = vmatpush1.bf16.msra.mxu0 0
        %1333 = vmatprep.subr.bf16.mxu0 0
        %1334 = vmatpush1.bf16.msra.mxu0 0
        %1335 = vmatprep.subr.bf16.mxu0 0
        %1336 = vmatpush1.bf16.msra.mxu0 0
        %1337 = vmatprep.subr.bf16.mxu0 0
        %1338 = vmatpush1.bf16.msra.mxu0 0
        %1339 = vmatprep.subr.bf16.mxu0 0
        %1340 = vmatpush1.bf16.msra.mxu0 0
        %1341 = vmatprep.subr.bf16.mxu0 0
        %1342 = vmatpush1.bf16.msra.mxu0 0
        %1343 = vmatprep.subr.bf16.mxu0 0
        %1344 = vmatpush1.bf16.msra.mxu0 0
        %1345 = vmatprep.subr.bf16.mxu0 0
        %1346 = vmatpush1.bf16.msra.mxu0 0
        %1347 = vmatprep.subr.bf16.mxu0 0
        %1348 = vmatpush1.bf16.msra.mxu0 0
        %1349 = vmatprep.subr.bf16.mxu0 0
        %1350 = vmatpush1.bf16.msra.mxu0 0
        %1351 = vmatprep.subr.bf16.mxu0 0
        %1352 = vmatpush1.bf16.msra.mxu0 0
        %1353 = vmatprep.subr.bf16.mxu0 0
        %1354 = vmatpush1.bf16.msra.mxu0 0
        %1355 = vmatprep.subr.bf16.mxu0 0
        %1356 = vmatpush1.bf16.msra.mxu0 0
        %1357 = vmatprep.mubr.bf16.mxu0 0
        %1358 = vmatmul.mubr.bf16.gmra.mrb[0].mxu0 %v337
        %v1359 = vpop.f32.mrb[0].mxu0
        %v1360 = vadd.f32 0.0, %v1359
        %v1361 = vpop.f32.mrb[0].mxu0
        %v1362 = vpop.f32.mrb[0].mxu0
        %v1363 = vpop.f32.mrb[0].mxu0
        %1364 = vdwg.mxu0
        %s1365 = scalar_lea.vmem %s3, 48
        %v1366 = vld [vmem:[%s1365] sm:$0xf]
        %v1367 = vld [vmem:[%s1365 + $0x4] sm:$0xf]
        %v1368 = vld [vmem:[%s1365 + $0x8] sm:$0xf]
        %v1369 = vld [vmem:[%s1365 + $0xc] sm:$0xf]
        %v1374 = vunpack.c.l.b16 %v1366
        %v1375 = vunpack.c.l.b16 %v1367
        %v1376 = vunpack.c.l.b16 %v1368
        %v1377 = vunpack.c.l.b16 %v1369
        %v1378 = vpack.c.b16 %v1375, %v1374
        %v1379 = vpack.c.b16 %v1377, %v1376
        %1382 = vmatprep.subr.bf16.mxu0 0
        %1383 = vmatpush1.bf16.msra.mxu0 %v1378
        %1384 = vmatprep.subr.bf16.mxu0 0
        %1385 = vmatpush1.bf16.msra.mxu0 %v1379
        %1386 = vmatprep.subr.bf16.mxu0 0
        %1387 = vmatpush1.bf16.msra.mxu0 0
        %1388 = vmatprep.subr.bf16.mxu0 0
        %1389 = vmatpush1.bf16.msra.mxu0 0
        %1390 = vmatprep.subr.bf16.mxu0 0
        %1391 = vmatpush1.bf16.msra.mxu0 0
        %1392 = vmatprep.subr.bf16.mxu0 0
        %1393 = vmatpush1.bf16.msra.mxu0 0
        %1394 = vmatprep.subr.bf16.mxu0 0
        %1395 = vmatpush1.bf16.msra.mxu0 0
        %1396 = vmatprep.subr.bf16.mxu0 0
        %1397 = vmatpush1.bf16.msra.mxu0 0
        %1398 = vmatprep.subr.bf16.mxu0 0
        %1399 = vmatpush1.bf16.msra.mxu0 0
        %1400 = vmatprep.subr.bf16.mxu0 0
        %1401 = vmatpush1.bf16.msra.mxu0 0
        %1402 = vmatprep.subr.bf16.mxu0 0
        %1403 = vmatpush1.bf16.msra.mxu0 0
        %1404 = vmatprep.subr.bf16.mxu0 0
        %1405 = vmatpush1.bf16.msra.mxu0 0
        %1406 = vmatprep.subr.bf16.mxu0 0
        %1407 = vmatpush1.bf16.msra.mxu0 0
        %1408 = vmatprep.subr.bf16.mxu0 0
        %1409 = vmatpush1.bf16.msra.mxu0 0
        %1410 = vmatprep.subr.bf16.mxu0 0
        %1411 = vmatpush1.bf16.msra.mxu0 0
        %1412 = vmatprep.subr.bf16.mxu0 0
        %1413 = vmatpush1.bf16.msra.mxu0 0
        %1414 = vmatprep.mubr.bf16.mxu0 0
        %1415 = vmatmul.mubr.bf16.gmra.mrb[0].mxu0 %v396
        %v1416 = vpop.f32.mrb[0].mxu0
        %v1417 = vadd.f32 0.0, %v1416
        %v1418 = vpop.f32.mrb[0].mxu0
        %v1419 = vpop.f32.mrb[0].mxu0
        %v1420 = vpop.f32.mrb[0].mxu0
        %1421 = vdwg.mxu0
        %s1422 = scalar_lea.vmem %s4, 48
        %v1423 = vld [vmem:[%s1422] sm:$0xf]
        %v1424 = vld [vmem:[%s1422 + $0x4] sm:$0xf]
        %v1425 = vld [vmem:[%s1422 + $0x8] sm:$0xf]
        %v1426 = vld [vmem:[%s1422 + $0xc] sm:$0xf]
        %v1431 = vunpack.c.l.b16 %v1423
        %v1432 = vunpack.c.l.b16 %v1424
        %v1433 = vunpack.c.l.b16 %v1425
        %v1434 = vunpack.c.l.b16 %v1426
        %v1435 = vpack.c.b16 %v1432, %v1431
        %v1436 = vpack.c.b16 %v1434, %v1433
        %1439 = vmatprep.subr.bf16.mxu0 0
        %1440 = vmatpush1.bf16.msra.mxu0 %v1435
        %1441 = vmatprep.subr.bf16.mxu0 0
        %1442 = vmatpush1.bf16.msra.mxu0 %v1436
        %1443 = vmatprep.subr.bf16.mxu0 0
        %1444 = vmatpush1.bf16.msra.mxu0 0
        %1445 = vmatprep.subr.bf16.mxu0 0
        %1446 = vmatpush1.bf16.msra.mxu0 0
        %1447 = vmatprep.subr.bf16.mxu0 0
        %1448 = vmatpush1.bf16.msra.mxu0 0
        %1449 = vmatprep.subr.bf16.mxu0 0
        %1450 = vmatpush1.bf16.msra.mxu0 0
        %1451 = vmatprep.subr.bf16.mxu0 0
        %1452 = vmatpush1.bf16.msra.mxu0 0
        %1453 = vmatprep.subr.bf16.mxu0 0
        %1454 = vmatpush1.bf16.msra.mxu0 0
        %1455 = vmatprep.subr.bf16.mxu0 0
        %1456 = vmatpush1.bf16.msra.mxu0 0
        %1457 = vmatprep.subr.bf16.mxu0 0
        %1458 = vmatpush1.bf16.msra.mxu0 0
        %1459 = vmatprep.subr.bf16.mxu0 0
        %1460 = vmatpush1.bf16.msra.mxu0 0
        %1461 = vmatprep.subr.bf16.mxu0 0
        %1462 = vmatpush1.bf16.msra.mxu0 0
        %1463 = vmatprep.subr.bf16.mxu0 0
        %1464 = vmatpush1.bf16.msra.mxu0 0
        %1465 = vmatprep.subr.bf16.mxu0 0
        %1466 = vmatpush1.bf16.msra.mxu0 0
        %1467 = vmatprep.subr.bf16.mxu0 0
        %1468 = vmatpush1.bf16.msra.mxu0 0
        %1469 = vmatprep.subr.bf16.mxu0 0
        %1470 = vmatpush1.bf16.msra.mxu0 0
        %1471 = vmatprep.mubr.bf16.mxu0 0
        %1472 = vmatmul.mubr.bf16.gmra.mrb[0].mxu0 %v396
        %v1473 = vpop.f32.mrb[0].mxu0
        %v1474 = vadd.f32 0.0, %v1473
        %v1475 = vpop.f32.mrb[0].mxu0
        %v1476 = vpop.f32.mrb[0].mxu0
        %v1477 = vpop.f32.mrb[0].mxu0
        %1478 = vdwg.mxu0
        %v1479 = vpack.c.bf16 %v1360, %v1360
        %v1480 = vpack.c.bf16 %v1417, %v1417
        %v1482 = vsel %vm496, %v1479, 0
        %v1485 = vsel %vm496, %v1480, 0
        %1487 = vmatprep.subr.bf16.mxu0 0
        %1488 = vmatpush1.bf16.xpose.msra.mxu0 %v1485
        %1489 = vmatprep.subr.bf16.mxu0 0
        %1490 = vmatpush1.bf16.xpose.msra.mxu0 0
        %1491 = vmatprep.subr.bf16.mxu0 0
        %1492 = vmatpush1.bf16.xpose.msra.mxu0 0
        %1493 = vmatprep.subr.bf16.mxu0 0
        %1494 = vmatpush1.bf16.xpose.msra.mxu0 0
        %1495 = vmatprep.subr.bf16.mxu0 0
        %1496 = vmatpush1.bf16.xpose.msra.mxu0 0
        %1497 = vmatprep.subr.bf16.mxu0 0
        %1498 = vmatpush1.bf16.xpose.msra.mxu0 0
        %1499 = vmatprep.subr.bf16.mxu0 0
        %1500 = vmatpush1.bf16.xpose.msra.mxu0 0
        %1501 = vmatprep.subr.bf16.mxu0 0
        %1502 = vmatpush1.bf16.xpose.msra.mxu0 0
        %1503 = vmatprep.subr.bf16.mxu0 0
        %1504 = vmatpush1.bf16.xpose.msra.mxu0 0
        %1505 = vmatprep.subr.bf16.mxu0 0
        %1506 = vmatpush1.bf16.xpose.msra.mxu0 0
        %1507 = vmatprep.subr.bf16.mxu0 0
        %1508 = vmatpush1.bf16.xpose.msra.mxu0 0
        %1509 = vmatprep.subr.bf16.mxu0 0
        %1510 = vmatpush1.bf16.xpose.msra.mxu0 0
        %1511 = vmatprep.subr.bf16.mxu0 0
        %1512 = vmatpush1.bf16.xpose.msra.mxu0 0
        %1513 = vmatprep.subr.bf16.mxu0 0
        %1514 = vmatpush1.bf16.xpose.msra.mxu0 0
        %1515 = vmatprep.subr.bf16.mxu0 0
        %1516 = vmatpush1.bf16.xpose.msra.mxu0 0
        %1517 = vmatprep.subr.bf16.mxu0 0
        %1518 = vmatpush1.bf16.xpose.msra.mxu0 0
        %1519 = vmatprep.mubr.bf16.mxu0 0
        %1520 = vmatmul.mubr.bf16.gmra.mrb[0].mxu0 %v1482
        %v1521 = vpop.f32.mrb[0].mxu0
        %v1522 = vadd.f32 0.0, %v1521
        %v1523 = vpop.f32.mrb[0].mxu0
        %v1524 = vpop.f32.mrb[0].mxu0
        %v1525 = vpop.f32.mrb[0].mxu0
        %1526 = vdwg.mxu0
        %v1527 = vsel %vm543, %v1522, -inf
        %1528 = vmax.xlane.f32.xlu0 %v1527
        %v1529 = vpop.xlane.xlu0 %1528
        %v1530 = vsub.f32 %v1522, %v1529
        %v1531 = vmul.f32 %v1530, 1.442695
        %v1532 = vpow.pop %v1531
        %v1533 = vsel %vm543, %v1532, 0.0
        %1534 = vadd.xlane.f32.xlu0 %v1533
        %v1535 = vpop.xlane.xlu0 %1534
        %v1536 = vrcp.pop %v1535
        %v1537 = vmul.f32 %v1532, %v1536
        %v1538 = vpack.c.bf16 %v1537, %v1537
        %v1539 = vpack.c.bf16 %v1474, %v1474
        %v1541 = vsel %vm543, %v1538, 0
        %v1544 = vsel %vm560, %v1539, 0
        %1546 = vmatprep.subr.bf16.mxu0 0
        %1547 = vmatpush1.bf16.msra.mxu0 %v1544
        %1548 = vmatprep.subr.bf16.mxu0 0
        %1549 = vmatpush1.bf16.msra.mxu0 0
        %1550 = vmatprep.subr.bf16.mxu0 0
        %1551 = vmatpush1.bf16.msra.mxu0 0
        %1552 = vmatprep.subr.bf16.mxu0 0
        %1553 = vmatpush1.bf16.msra.mxu0 0
        %1554 = vmatprep.subr.bf16.mxu0 0
        %1555 = vmatpush1.bf16.msra.mxu0 0
        %1556 = vmatprep.subr.bf16.mxu0 0
        %1557 = vmatpush1.bf16.msra.mxu0 0
        %1558 = vmatprep.subr.bf16.mxu0 0
        %1559 = vmatpush1.bf16.msra.mxu0 0
        %1560 = vmatprep.subr.bf16.mxu0 0
        %1561 = vmatpush1.bf16.msra.mxu0 0
        %1562 = vmatprep.subr.bf16.mxu0 0
        %1563 = vmatpush1.bf16.msra.mxu0 0
        %1564 = vmatprep.subr.bf16.mxu0 0
        %1565 = vmatpush1.bf16.msra.mxu0 0
        %1566 = vmatprep.subr.bf16.mxu0 0
        %1567 = vmatpush1.bf16.msra.mxu0 0
        %1568 = vmatprep.subr.bf16.mxu0 0
        %1569 = vmatpush1.bf16.msra.mxu0 0
        %1570 = vmatprep.subr.bf16.mxu0 0
        %1571 = vmatpush1.bf16.msra.mxu0 0
        %1572 = vmatprep.subr.bf16.mxu0 0
        %1573 = vmatpush1.bf16.msra.mxu0 0
        %1574 = vmatprep.subr.bf16.mxu0 0
        %1575 = vmatpush1.bf16.msra.mxu0 0
        %1576 = vmatprep.subr.bf16.mxu0 0
        %1577 = vmatpush1.bf16.msra.mxu0 0
        %1578 = vmatprep.mubr.bf16.mxu0 0
        %1579 = vmatmul.mubr.bf16.gmra.mrb[0].mxu0 %v1541
        %v1580 = vpop.f32.mrb[0].mxu0
        %v1581 = vadd.f32 0.0, %v1580
        %v1582 = vpop.f32.mrb[0].mxu0
        %v1583 = vpop.f32.mrb[0].mxu0
        %v1584 = vpop.f32.mrb[0].mxu0
        %1585 = vdwg.mxu0
        %v1586 = vpack.c.bf16 %v1581, %v1581
        %s1587 = scalar_lea.vmem %s5, 6
        %v1588 = vld [vmem:[%s1587] sm:$0x3]
        %v1590 = vsel %vm496, %v1586, 0
        %v1593 = vsel %vm890, %v1588, 0
        %1595 = vmatprep.subr.bf16.mxu0 0
        %1596 = vmatpush1.bf16.msra.mxu0 %v1593
        %1597 = vmatprep.subr.bf16.mxu0 0
        %1598 = vmatpush1.bf16.msra.mxu0 0
        %1599 = vmatprep.subr.bf16.mxu0 0
        %1600 = vmatpush1.bf16.msra.mxu0 0
        %1601 = vmatprep.subr.bf16.mxu0 0
        %1602 = vmatpush1.bf16.msra.mxu0 0
        %1603 = vmatprep.subr.bf16.mxu0 0
        %1604 = vmatpush1.bf16.msra.mxu0 0
        %1605 = vmatprep.subr.bf16.mxu0 0
        %1606 = vmatpush1.bf16.msra.mxu0 0
        %1607 = vmatprep.subr.bf16.mxu0 0
        %1608 = vmatpush1.bf16.msra.mxu0 0
        %1609 = vmatprep.subr.bf16.mxu0 0
        %1610 = vmatpush1.bf16.msra.mxu0 0
        %1611 = vmatprep.subr.bf16.mxu0 0
        %1612 = vmatpush1.bf16.msra.mxu0 0
        %1613 = vmatprep.subr.bf16.mxu0 0
        %1614 = vmatpush1.bf16.msra.mxu0 0
        %1615 = vmatprep.subr.bf16.mxu0 0
        %1616 = vmatpush1.bf16.msra.mxu0 0
        %1617 = vmatprep.subr.bf16.mxu0 0
        %1618 = vmatpush1.bf16.msra.mxu0 0
        %1619 = vmatprep.subr.bf16.mxu0 0
        %1620 = vmatpush1.bf16.msra.mxu0 0
        %1621 = vmatprep.subr.bf16.mxu0 0
        %1622 = vmatpush1.bf16.msra.mxu0 0
        %1623 = vmatprep.subr.bf16.mxu0 0
        %1624 = vmatpush1.bf16.msra.mxu0 0
        %1625 = vmatprep.subr.bf16.mxu0 0
        %1626 = vmatpush1.bf16.msra.mxu0 0
        %1627 = vmatprep.mubr.bf16.mxu0 0
        %1628 = vmatmul.mubr.bf16.gmra.mrb[0].mxu0 %v1590
        %v1629 = vpop.f32.mrb[0].mxu0
        %v1630 = vadd.f32 0.0, %v1629
        %v1631 = vpop.f32.mrb[0].mxu0
        %v1632 = vpop.f32.mrb[0].mxu0
        %v1633 = vpop.f32.mrb[0].mxu0
        %1634 = vdwg.mxu0
        %v1635 = vadd.f32 %v1307, %v1630
        %s1636 = scalar_lea.vmem %s2, 64
        %v1637 = vld [vmem:[%s1636] sm:$0xf]
        %v1638 = vld [vmem:[%s1636 + $0x4] sm:$0xf]
        %v1639 = vld [vmem:[%s1636 + $0x8] sm:$0xf]
        %v1640 = vld [vmem:[%s1636 + $0xc] sm:$0xf]
        %v1645 = vunpack.c.l.b16 %v1637
        %v1646 = vunpack.c.l.b16 %v1638
        %v1647 = vunpack.c.l.b16 %v1639
        %v1648 = vunpack.c.l.b16 %v1640
        %v1649 = vpack.c.b16 %v1646, %v1645
        %v1650 = vpack.c.b16 %v1648, %v1647
        %1653 = vmatprep.subr.bf16.mxu0 0
        %1654 = vmatpush1.bf16.msra.mxu0 %v1649
        %1655 = vmatprep.subr.bf16.mxu0 0
        %1656 = vmatpush1.bf16.msra.mxu0 %v1650
        %1657 = vmatprep.subr.bf16.mxu0 0
        %1658 = vmatpush1.bf16.msra.mxu0 0
        %1659 = vmatprep.subr.bf16.mxu0 0
        %1660 = vmatpush1.bf16.msra.mxu0 0
        %1661 = vmatprep.subr.bf16.mxu0 0
        %1662 = vmatpush1.bf16.msra.mxu0 0
        %1663 = vmatprep.subr.bf16.mxu0 0
        %1664 = vmatpush1.bf16.msra.mxu0 0
        %1665 = vmatprep.subr.bf16.mxu0 0
        %1666 = vmatpush1.bf16.msra.mxu0 0
        %1667 = vmatprep.subr.bf16.mxu0 0
        %1668 = vmatpush1.bf16.msra.mxu0 0
        %1669 = vmatprep.subr.bf16.mxu0 0
        %1670 = vmatpush1.bf16.msra.mxu0 0
        %1671 = vmatprep.subr.bf16.mxu0 0
        %1672 = vmatpush1.bf16.msra.mxu0 0
        %1673 = vmatprep.subr.bf16.mxu0 0
        %1674 = vmatpush1.bf16.msra.mxu0 0
        %1675 = vmatprep.subr.bf16.mxu0 0
        %1676 = vmatpush1.bf16.msra.mxu0 0
        %1677 = vmatprep.subr.bf16.mxu0 0
        %1678 = vmatpush1.bf16.msra.mxu0 0
        %1679 = vmatprep.subr.bf16.mxu0 0
        %1680 = vmatpush1.bf16.msra.mxu0 0
        %1681 = vmatprep.subr.bf16.mxu0 0
        %1682 = vmatpush1.bf16.msra.mxu0 0
        %1683 = vmatprep.subr.bf16.mxu0 0
        %1684 = vmatpush1.bf16.msra.mxu0 0
        %1685 = vmatprep.mubr.bf16.mxu0 0
        %1686 = vmatmul.mubr.bf16.gmra.mrb[0].mxu0 %v337
        %v1687 = vpop.f32.mrb[0].mxu0
        %v1688 = vadd.f32 0.0, %v1687
        %v1689 = vpop.f32.mrb[0].mxu0
        %v1690 = vpop.f32.mrb[0].mxu0
        %v1691 = vpop.f32.mrb[0].mxu0
        %1692 = vdwg.mxu0
        %s1693 = scalar_lea.vmem %s3, 64
        %v1694 = vld [vmem:[%s1693] sm:$0xf]
        %v1695 = vld [vmem:[%s1693 + $0x4] sm:$0xf]
        %v1696 = vld [vmem:[%s1693 + $0x8] sm:$0xf]
        %v1697 = vld [vmem:[%s1693 + $0xc] sm:$0xf]
        %v1702 = vunpack.c.l.b16 %v1694
        %v1703 = vunpack.c.l.b16 %v1695
        %v1704 = vunpack.c.l.b16 %v1696
        %v1705 = vunpack.c.l.b16 %v1697
        %v1706 = vpack.c.b16 %v1703, %v1702
        %v1707 = vpack.c.b16 %v1705, %v1704
        %1710 = vmatprep.subr.bf16.mxu0 0
        %1711 = vmatpush1.bf16.msra.mxu0 %v1706
        %1712 = vmatprep.subr.bf16.mxu0 0
        %1713 = vmatpush1.bf16.msra.mxu0 %v1707
        %1714 = vmatprep.subr.bf16.mxu0 0
        %1715 = vmatpush1.bf16.msra.mxu0 0
        %1716 = vmatprep.subr.bf16.mxu0 0
        %1717 = vmatpush1.bf16.msra.mxu0 0
        %1718 = vmatprep.subr.bf16.mxu0 0
        %1719 = vmatpush1.bf16.msra.mxu0 0
        %1720 = vmatprep.subr.bf16.mxu0 0
        %1721 = vmatpush1.bf16.msra.mxu0 0
        %1722 = vmatprep.subr.bf16.mxu0 0
        %1723 = vmatpush1.bf16.msra.mxu0 0
        %1724 = vmatprep.subr.bf16.mxu0 0
        %1725 = vmatpush1.bf16.msra.mxu0 0
        %1726 = vmatprep.subr.bf16.mxu0 0
        %1727 = vmatpush1.bf16.msra.mxu0 0
        %1728 = vmatprep.subr.bf16.mxu0 0
        %1729 = vmatpush1.bf16.msra.mxu0 0
        %1730 = vmatprep.subr.bf16.mxu0 0
        %1731 = vmatpush1.bf16.msra.mxu0 0
        %1732 = vmatprep.subr.bf16.mxu0 0
        %1733 = vmatpush1.bf16.msra.mxu0 0
        %1734 = vmatprep.subr.bf16.mxu0 0
        %1735 = vmatpush1.bf16.msra.mxu0 0
        %1736 = vmatprep.subr.bf16.mxu0 0
        %1737 = vmatpush1.bf16.msra.mxu0 0
        %1738 = vmatprep.subr.bf16.mxu0 0
        %1739 = vmatpush1.bf16.msra.mxu0 0
        %1740 = vmatprep.subr.bf16.mxu0 0
        %1741 = vmatpush1.bf16.msra.mxu0 0
        %1742 = vmatprep.mubr.bf16.mxu0 0
        %1743 = vmatmul.mubr.bf16.gmra.mrb[0].mxu0 %v396
        %v1744 = vpop.f32.mrb[0].mxu0
        %v1745 = vadd.f32 0.0, %v1744
        %v1746 = vpop.f32.mrb[0].mxu0
        %v1747 = vpop.f32.mrb[0].mxu0
        %v1748 = vpop.f32.mrb[0].mxu0
        %1749 = vdwg.mxu0
        %s1750 = scalar_lea.vmem %s4, 64
        %v1751 = vld [vmem:[%s1750] sm:$0xf]
        %v1752 = vld [vmem:[%s1750 + $0x4] sm:$0xf]
        %v1753 = vld [vmem:[%s1750 + $0x8] sm:$0xf]
        %v1754 = vld [vmem:[%s1750 + $0xc] sm:$0xf]
        %v1759 = vunpack.c.l.b16 %v1751
        %v1760 = vunpack.c.l.b16 %v1752
        %v1761 = vunpack.c.l.b16 %v1753
        %v1762 = vunpack.c.l.b16 %v1754
        %v1763 = vpack.c.b16 %v1760, %v1759
        %v1764 = vpack.c.b16 %v1762, %v1761
        %1767 = vmatprep.subr.bf16.mxu0 0
        %1768 = vmatpush1.bf16.msra.mxu0 %v1763
        %1769 = vmatprep.subr.bf16.mxu0 0
        %1770 = vmatpush1.bf16.msra.mxu0 %v1764
        %1771 = vmatprep.subr.bf16.mxu0 0
        %1772 = vmatpush1.bf16.msra.mxu0 0
        %1773 = vmatprep.subr.bf16.mxu0 0
        %1774 = vmatpush1.bf16.msra.mxu0 0
        %1775 = vmatprep.subr.bf16.mxu0 0
        %1776 = vmatpush1.bf16.msra.mxu0 0
        %1777 = vmatprep.subr.bf16.mxu0 0
        %1778 = vmatpush1.bf16.msra.mxu0 0
        %1779 = vmatprep.subr.bf16.mxu0 0
        %1780 = vmatpush1.bf16.msra.mxu0 0
        %1781 = vmatprep.subr.bf16.mxu0 0
        %1782 = vmatpush1.bf16.msra.mxu0 0
        %1783 = vmatprep.subr.bf16.mxu0 0
        %1784 = vmatpush1.bf16.msra.mxu0 0
        %1785 = vmatprep.subr.bf16.mxu0 0
        %1786 = vmatpush1.bf16.msra.mxu0 0
        %1787 = vmatprep.subr.bf16.mxu0 0
        %1788 = vmatpush1.bf16.msra.mxu0 0
        %1789 = vmatprep.subr.bf16.mxu0 0
        %1790 = vmatpush1.bf16.msra.mxu0 0
        %1791 = vmatprep.subr.bf16.mxu0 0
        %1792 = vmatpush1.bf16.msra.mxu0 0
        %1793 = vmatprep.subr.bf16.mxu0 0
        %1794 = vmatpush1.bf16.msra.mxu0 0
        %1795 = vmatprep.subr.bf16.mxu0 0
        %1796 = vmatpush1.bf16.msra.mxu0 0
        %1797 = vmatprep.subr.bf16.mxu0 0
        %1798 = vmatpush1.bf16.msra.mxu0 0
        %1799 = vmatprep.mubr.bf16.mxu0 0
        %1800 = vmatmul.mubr.bf16.gmra.mrb[0].mxu0 %v396
        %v1801 = vpop.f32.mrb[0].mxu0
        %v1802 = vadd.f32 0.0, %v1801
        %v1803 = vpop.f32.mrb[0].mxu0
        %v1804 = vpop.f32.mrb[0].mxu0
        %v1805 = vpop.f32.mrb[0].mxu0
        %1806 = vdwg.mxu0
        %v1807 = vpack.c.bf16 %v1688, %v1688
        %v1808 = vpack.c.bf16 %v1745, %v1745
        %v1810 = vsel %vm496, %v1807, 0
        %v1813 = vsel %vm496, %v1808, 0
        %1815 = vmatprep.subr.bf16.mxu0 0
        %1816 = vmatpush1.bf16.xpose.msra.mxu0 %v1813
        %1817 = vmatprep.subr.bf16.mxu0 0
        %1818 = vmatpush1.bf16.xpose.msra.mxu0 0
        %1819 = vmatprep.subr.bf16.mxu0 0
        %1820 = vmatpush1.bf16.xpose.msra.mxu0 0
        %1821 = vmatprep.subr.bf16.mxu0 0
        %1822 = vmatpush1.bf16.xpose.msra.mxu0 0
        %1823 = vmatprep.subr.bf16.mxu0 0
        %1824 = vmatpush1.bf16.xpose.msra.mxu0 0
        %1825 = vmatprep.subr.bf16.mxu0 0
        %1826 = vmatpush1.bf16.xpose.msra.mxu0 0
        %1827 = vmatprep.subr.bf16.mxu0 0
        %1828 = vmatpush1.bf16.xpose.msra.mxu0 0
        %1829 = vmatprep.subr.bf16.mxu0 0
        %1830 = vmatpush1.bf16.xpose.msra.mxu0 0
        %1831 = vmatprep.subr.bf16.mxu0 0
        %1832 = vmatpush1.bf16.xpose.msra.mxu0 0
        %1833 = vmatprep.subr.bf16.mxu0 0
        %1834 = vmatpush1.bf16.xpose.msra.mxu0 0
        %1835 = vmatprep.subr.bf16.mxu0 0
        %1836 = vmatpush1.bf16.xpose.msra.mxu0 0
        %1837 = vmatprep.subr.bf16.mxu0 0
        %1838 = vmatpush1.bf16.xpose.msra.mxu0 0
        %1839 = vmatprep.subr.bf16.mxu0 0
        %1840 = vmatpush1.bf16.xpose.msra.mxu0 0
        %1841 = vmatprep.subr.bf16.mxu0 0
        %1842 = vmatpush1.bf16.xpose.msra.mxu0 0
        %1843 = vmatprep.subr.bf16.mxu0 0
        %1844 = vmatpush1.bf16.xpose.msra.mxu0 0
        %1845 = vmatprep.subr.bf16.mxu0 0
        %1846 = vmatpush1.bf16.xpose.msra.mxu0 0
        %1847 = vmatprep.mubr.bf16.mxu0 0
        %1848 = vmatmul.mubr.bf16.gmra.mrb[0].mxu0 %v1810
        %v1849 = vpop.f32.mrb[0].mxu0
        %v1850 = vadd.f32 0.0, %v1849
        %v1851 = vpop.f32.mrb[0].mxu0
        %v1852 = vpop.f32.mrb[0].mxu0
        %v1853 = vpop.f32.mrb[0].mxu0
        %1854 = vdwg.mxu0
        %v1855 = vsel %vm543, %v1850, -inf
        %1856 = vmax.xlane.f32.xlu0 %v1855
        %v1857 = vpop.xlane.xlu0 %1856
        %v1858 = vsub.f32 %v1850, %v1857
        %v1859 = vmul.f32 %v1858, 1.442695
        %v1860 = vpow.pop %v1859
        %v1861 = vsel %vm543, %v1860, 0.0
        %1862 = vadd.xlane.f32.xlu0 %v1861
        %v1863 = vpop.xlane.xlu0 %1862
        %v1864 = vrcp.pop %v1863
        %v1865 = vmul.f32 %v1860, %v1864
        %v1866 = vpack.c.bf16 %v1865, %v1865
        %v1867 = vpack.c.bf16 %v1802, %v1802
        %v1869 = vsel %vm543, %v1866, 0
        %v1872 = vsel %vm560, %v1867, 0
        %1874 = vmatprep.subr.bf16.mxu0 0
        %1875 = vmatpush1.bf16.msra.mxu0 %v1872
        %1876 = vmatprep.subr.bf16.mxu0 0
        %1877 = vmatpush1.bf16.msra.mxu0 0
        %1878 = vmatprep.subr.bf16.mxu0 0
        %1879 = vmatpush1.bf16.msra.mxu0 0
        %1880 = vmatprep.subr.bf16.mxu0 0
        %1881 = vmatpush1.bf16.msra.mxu0 0
        %1882 = vmatprep.subr.bf16.mxu0 0
        %1883 = vmatpush1.bf16.msra.mxu0 0
        %1884 = vmatprep.subr.bf16.mxu0 0
        %1885 = vmatpush1.bf16.msra.mxu0 0
        %1886 = vmatprep.subr.bf16.mxu0 0
        %1887 = vmatpush1.bf16.msra.mxu0 0
        %1888 = vmatprep.subr.bf16.mxu0 0
        %1889 = vmatpush1.bf16.msra.mxu0 0
        %1890 = vmatprep.subr.bf16.mxu0 0
        %1891 = vmatpush1.bf16.msra.mxu0 0
        %1892 = vmatprep.subr.bf16.mxu0 0
        %1893 = vmatpush1.bf16.msra.mxu0 0
        %1894 = vmatprep.subr.bf16.mxu0 0
        %1895 = vmatpush1.bf16.msra.mxu0 0
        %1896 = vmatprep.subr.bf16.mxu0 0
        %1897 = vmatpush1.bf16.msra.mxu0 0
        %1898 = vmatprep.subr.bf16.mxu0 0
        %1899 = vmatpush1.bf16.msra.mxu0 0
        %1900 = vmatprep.subr.bf16.mxu0 0
        %1901 = vmatpush1.bf16.msra.mxu0 0
        %1902 = vmatprep.subr.bf16.mxu0 0
        %1903 = vmatpush1.bf16.msra.mxu0 0
        %1904 = vmatprep.subr.bf16.mxu0 0
        %1905 = vmatpush1.bf16.msra.mxu0 0
        %1906 = vmatprep.mubr.bf16.mxu0 0
        %1907 = vmatmul.mubr.bf16.gmra.mrb[0].mxu0 %v1869
        %v1908 = vpop.f32.mrb[0].mxu0
        %v1909 = vadd.f32 0.0, %v1908
        %v1910 = vpop.f32.mrb[0].mxu0
        %v1911 = vpop.f32.mrb[0].mxu0
        %v1912 = vpop.f32.mrb[0].mxu0
        %1913 = vdwg.mxu0
        %v1914 = vpack.c.bf16 %v1909, %v1909
        %s1915 = scalar_lea.vmem %s5, 8
        %v1916 = vld [vmem:[%s1915] sm:$0x3]
        %v1918 = vsel %vm496, %v1914, 0
        %v1921 = vsel %vm890, %v1916, 0
        %1923 = vmatprep.subr.bf16.mxu0 0
        %1924 = vmatpush1.bf16.msra.mxu0 %v1921
        %1925 = vmatprep.subr.bf16.mxu0 0
        %1926 = vmatpush1.bf16.msra.mxu0 0
        %1927 = vmatprep.subr.bf16.mxu0 0
        %1928 = vmatpush1.bf16.msra.mxu0 0
        %1929 = vmatprep.subr.bf16.mxu0 0
        %1930 = vmatpush1.bf16.msra.mxu0 0
        %1931 = vmatprep.subr.bf16.mxu0 0
        %1932 = vmatpush1.bf16.msra.mxu0 0
        %1933 = vmatprep.subr.bf16.mxu0 0
        %1934 = vmatpush1.bf16.msra.mxu0 0
        %1935 = vmatprep.subr.bf16.mxu0 0
        %1936 = vmatpush1.bf16.msra.mxu0 0
        %1937 = vmatprep.subr.bf16.mxu0 0
        %1938 = vmatpush1.bf16.msra.mxu0 0
        %1939 = vmatprep.subr.bf16.mxu0 0
        %1940 = vmatpush1.bf16.msra.mxu0 0
        %1941 = vmatprep.subr.bf16.mxu0 0
        %1942 = vmatpush1.bf16.msra.mxu0 0
        %1943 = vmatprep.subr.bf16.mxu0 0
        %1944 = vmatpush1.bf16.msra.mxu0 0
        %1945 = vmatprep.subr.bf16.mxu0 0
        %1946 = vmatpush1.bf16.msra.mxu0 0
        %1947 = vmatprep.subr.bf16.mxu0 0
        %1948 = vmatpush1.bf16.msra.mxu0 0
        %1949 = vmatprep.subr.bf16.mxu0 0
        %1950 = vmatpush1.bf16.msra.mxu0 0
        %1951 = vmatprep.subr.bf16.mxu0 0
        %1952 = vmatpush1.bf16.msra.mxu0 0
        %1953 = vmatprep.subr.bf16.mxu0 0
        %1954 = vmatpush1.bf16.msra.mxu0 0
        %1955 = vmatprep.mubr.bf16.mxu0 0
        %1956 = vmatmul.mubr.bf16.gmra.mrb[0].mxu0 %v1918
        %v1957 = vpop.f32.mrb[0].mxu0
        %v1958 = vadd.f32 0.0, %v1957
        %v1959 = vpop.f32.mrb[0].mxu0
        %v1960 = vpop.f32.mrb[0].mxu0
        %v1961 = vpop.f32.mrb[0].mxu0
        %1962 = vdwg.mxu0
        %v1963 = vadd.f32 %v1635, %v1958
        %s1964 = scalar_lea.vmem %s2, 80
        %v1965 = vld [vmem:[%s1964] sm:$0xf]
        %v1966 = vld [vmem:[%s1964 + $0x4] sm:$0xf]
        %v1967 = vld [vmem:[%s1964 + $0x8] sm:$0xf]
        %v1968 = vld [vmem:[%s1964 + $0xc] sm:$0xf]
        %v1973 = vunpack.c.l.b16 %v1965
        %v1974 = vunpack.c.l.b16 %v1966
        %v1975 = vunpack.c.l.b16 %v1967
        %v1976 = vunpack.c.l.b16 %v1968
        %v1977 = vpack.c.b16 %v1974, %v1973
        %v1978 = vpack.c.b16 %v1976, %v1975
        %1981 = vmatprep.subr.bf16.mxu0 0
        %1982 = vmatpush1.bf16.msra.mxu0 %v1977
        %1983 = vmatprep.subr.bf16.mxu0 0
        %1984 = vmatpush1.bf16.msra.mxu0 %v1978
        %1985 = vmatprep.subr.bf16.mxu0 0
        %1986 = vmatpush1.bf16.msra.mxu0 0
        %1987 = vmatprep.subr.bf16.mxu0 0
        %1988 = vmatpush1.bf16.msra.mxu0 0
        %1989 = vmatprep.subr.bf16.mxu0 0
        %1990 = vmatpush1.bf16.msra.mxu0 0
        %1991 = vmatprep.subr.bf16.mxu0 0
        %1992 = vmatpush1.bf16.msra.mxu0 0
        %1993 = vmatprep.subr.bf16.mxu0 0
        %1994 = vmatpush1.bf16.msra.mxu0 0
        %1995 = vmatprep.subr.bf16.mxu0 0
        %1996 = vmatpush1.bf16.msra.mxu0 0
        %1997 = vmatprep.subr.bf16.mxu0 0
        %1998 = vmatpush1.bf16.msra.mxu0 0
        %1999 = vmatprep.subr.bf16.mxu0 0
        %2000 = vmatpush1.bf16.msra.mxu0 0
        %2001 = vmatprep.subr.bf16.mxu0 0
        %2002 = vmatpush1.bf16.msra.mxu0 0
        %2003 = vmatprep.subr.bf16.mxu0 0
        %2004 = vmatpush1.bf16.msra.mxu0 0
        %2005 = vmatprep.subr.bf16.mxu0 0
        %2006 = vmatpush1.bf16.msra.mxu0 0
        %2007 = vmatprep.subr.bf16.mxu0 0
        %2008 = vmatpush1.bf16.msra.mxu0 0
        %2009 = vmatprep.subr.bf16.mxu0 0
        %2010 = vmatpush1.bf16.msra.mxu0 0
        %2011 = vmatprep.subr.bf16.mxu0 0
        %2012 = vmatpush1.bf16.msra.mxu0 0
        %2013 = vmatprep.mubr.bf16.mxu0 0
        %2014 = vmatmul.mubr.bf16.gmra.mrb[0].mxu0 %v337
        %v2015 = vpop.f32.mrb[0].mxu0
        %v2016 = vadd.f32 0.0, %v2015
        %v2017 = vpop.f32.mrb[0].mxu0
        %v2018 = vpop.f32.mrb[0].mxu0
        %v2019 = vpop.f32.mrb[0].mxu0
        %2020 = vdwg.mxu0
        %s2021 = scalar_lea.vmem %s3, 80
        %v2022 = vld [vmem:[%s2021] sm:$0xf]
        %v2023 = vld [vmem:[%s2021 + $0x4] sm:$0xf]
        %v2024 = vld [vmem:[%s2021 + $0x8] sm:$0xf]
        %v2025 = vld [vmem:[%s2021 + $0xc] sm:$0xf]
        %v2030 = vunpack.c.l.b16 %v2022
        %v2031 = vunpack.c.l.b16 %v2023
        %v2032 = vunpack.c.l.b16 %v2024
        %v2033 = vunpack.c.l.b16 %v2025
        %v2034 = vpack.c.b16 %v2031, %v2030
        %v2035 = vpack.c.b16 %v2033, %v2032
        %2038 = vmatprep.subr.bf16.mxu0 0
        %2039 = vmatpush1.bf16.msra.mxu0 %v2034
        %2040 = vmatprep.subr.bf16.mxu0 0
        %2041 = vmatpush1.bf16.msra.mxu0 %v2035
        %2042 = vmatprep.subr.bf16.mxu0 0
        %2043 = vmatpush1.bf16.msra.mxu0 0
        %2044 = vmatprep.subr.bf16.mxu0 0
        %2045 = vmatpush1.bf16.msra.mxu0 0
        %2046 = vmatprep.subr.bf16.mxu0 0
        %2047 = vmatpush1.bf16.msra.mxu0 0
        %2048 = vmatprep.subr.bf16.mxu0 0
        %2049 = vmatpush1.bf16.msra.mxu0 0
        %2050 = vmatprep.subr.bf16.mxu0 0
        %2051 = vmatpush1.bf16.msra.mxu0 0
        %2052 = vmatprep.subr.bf16.mxu0 0
        %2053 = vmatpush1.bf16.msra.mxu0 0
        %2054 = vmatprep.subr.bf16.mxu0 0
        %2055 = vmatpush1.bf16.msra.mxu0 0
        %2056 = vmatprep.subr.bf16.mxu0 0
        %2057 = vmatpush1.bf16.msra.mxu0 0
        %2058 = vmatprep.subr.bf16.mxu0 0
        %2059 = vmatpush1.bf16.msra.mxu0 0
        %2060 = vmatprep.subr.bf16.mxu0 0
        %2061 = vmatpush1.bf16.msra.mxu0 0
        %2062 = vmatprep.subr.bf16.mxu0 0
        %2063 = vmatpush1.bf16.msra.mxu0 0
        %2064 = vmatprep.subr.bf16.mxu0 0
        %2065 = vmatpush1.bf16.msra.mxu0 0
        %2066 = vmatprep.subr.bf16.mxu0 0
        %2067 = vmatpush1.bf16.msra.mxu0 0
        %2068 = vmatprep.subr.bf16.mxu0 0
        %2069 = vmatpush1.bf16.msra.mxu0 0
        %2070 = vmatprep.mubr.bf16.mxu0 0
        %2071 = vmatmul.mubr.bf16.gmra.mrb[0].mxu0 %v396
        %v2072 = vpop.f32.mrb[0].mxu0
        %v2073 = vadd.f32 0.0, %v2072
        %v2074 = vpop.f32.mrb[0].mxu0
        %v2075 = vpop.f32.mrb[0].mxu0
        %v2076 = vpop.f32.mrb[0].mxu0
        %2077 = vdwg.mxu0
        %s2078 = scalar_lea.vmem %s4, 80
        %v2079 = vld [vmem:[%s2078] sm:$0xf]
        %v2080 = vld [vmem:[%s2078 + $0x4] sm:$0xf]
        %v2081 = vld [vmem:[%s2078 + $0x8] sm:$0xf]
        %v2082 = vld [vmem:[%s2078 + $0xc] sm:$0xf]
        %v2087 = vunpack.c.l.b16 %v2079
        %v2088 = vunpack.c.l.b16 %v2080
        %v2089 = vunpack.c.l.b16 %v2081
        %v2090 = vunpack.c.l.b16 %v2082
        %v2091 = vpack.c.b16 %v2088, %v2087
        %v2092 = vpack.c.b16 %v2090, %v2089
        %2095 = vmatprep.subr.bf16.mxu0 0
        %2096 = vmatpush1.bf16.msra.mxu0 %v2091
        %2097 = vmatprep.subr.bf16.mxu0 0
        %2098 = vmatpush1.bf16.msra.mxu0 %v2092
        %2099 = vmatprep.subr.bf16.mxu0 0
        %2100 = vmatpush1.bf16.msra.mxu0 0
        %2101 = vmatprep.subr.bf16.mxu0 0
        %2102 = vmatpush1.bf16.msra.mxu0 0
        %2103 = vmatprep.subr.bf16.mxu0 0
        %2104 = vmatpush1.bf16.msra.mxu0 0
        %2105 = vmatprep.subr.bf16.mxu0 0
        %2106 = vmatpush1.bf16.msra.mxu0 0
        %2107 = vmatprep.subr.bf16.mxu0 0
        %2108 = vmatpush1.bf16.msra.mxu0 0
        %2109 = vmatprep.subr.bf16.mxu0 0
        %2110 = vmatpush1.bf16.msra.mxu0 0
        %2111 = vmatprep.subr.bf16.mxu0 0
        %2112 = vmatpush1.bf16.msra.mxu0 0
        %2113 = vmatprep.subr.bf16.mxu0 0
        %2114 = vmatpush1.bf16.msra.mxu0 0
        %2115 = vmatprep.subr.bf16.mxu0 0
        %2116 = vmatpush1.bf16.msra.mxu0 0
        %2117 = vmatprep.subr.bf16.mxu0 0
        %2118 = vmatpush1.bf16.msra.mxu0 0
        %2119 = vmatprep.subr.bf16.mxu0 0
        %2120 = vmatpush1.bf16.msra.mxu0 0
        %2121 = vmatprep.subr.bf16.mxu0 0
        %2122 = vmatpush1.bf16.msra.mxu0 0
        %2123 = vmatprep.subr.bf16.mxu0 0
        %2124 = vmatpush1.bf16.msra.mxu0 0
        %2125 = vmatprep.subr.bf16.mxu0 0
        %2126 = vmatpush1.bf16.msra.mxu0 0
        %2127 = vmatprep.mubr.bf16.mxu0 0
        %2128 = vmatmul.mubr.bf16.gmra.mrb[0].mxu0 %v396
        %v2129 = vpop.f32.mrb[0].mxu0
        %v2130 = vadd.f32 0.0, %v2129
        %v2131 = vpop.f32.mrb[0].mxu0
        %v2132 = vpop.f32.mrb[0].mxu0
        %v2133 = vpop.f32.mrb[0].mxu0
        %2134 = vdwg.mxu0
        %v2135 = vpack.c.bf16 %v2016, %v2016
        %v2136 = vpack.c.bf16 %v2073, %v2073
        %v2138 = vsel %vm496, %v2135, 0
        %v2141 = vsel %vm496, %v2136, 0
        %2143 = vmatprep.subr.bf16.mxu0 0
        %2144 = vmatpush1.bf16.xpose.msra.mxu0 %v2141
        %2145 = vmatprep.subr.bf16.mxu0 0
        %2146 = vmatpush1.bf16.xpose.msra.mxu0 0
        %2147 = vmatprep.subr.bf16.mxu0 0
        %2148 = vmatpush1.bf16.xpose.msra.mxu0 0
        %2149 = vmatprep.subr.bf16.mxu0 0
        %2150 = vmatpush1.bf16.xpose.msra.mxu0 0
        %2151 = vmatprep.subr.bf16.mxu0 0
        %2152 = vmatpush1.bf16.xpose.msra.mxu0 0
        %2153 = vmatprep.subr.bf16.mxu0 0
        %2154 = vmatpush1.bf16.xpose.msra.mxu0 0
        %2155 = vmatprep.subr.bf16.mxu0 0
        %2156 = vmatpush1.bf16.xpose.msra.mxu0 0
        %2157 = vmatprep.subr.bf16.mxu0 0
        %2158 = vmatpush1.bf16.xpose.msra.mxu0 0
        %2159 = vmatprep.subr.bf16.mxu0 0
        %2160 = vmatpush1.bf16.xpose.msra.mxu0 0
        %2161 = vmatprep.subr.bf16.mxu0 0
        %2162 = vmatpush1.bf16.xpose.msra.mxu0 0
        %2163 = vmatprep.subr.bf16.mxu0 0
        %2164 = vmatpush1.bf16.xpose.msra.mxu0 0
        %2165 = vmatprep.subr.bf16.mxu0 0
        %2166 = vmatpush1.bf16.xpose.msra.mxu0 0
        %2167 = vmatprep.subr.bf16.mxu0 0
        %2168 = vmatpush1.bf16.xpose.msra.mxu0 0
        %2169 = vmatprep.subr.bf16.mxu0 0
        %2170 = vmatpush1.bf16.xpose.msra.mxu0 0
        %2171 = vmatprep.subr.bf16.mxu0 0
        %2172 = vmatpush1.bf16.xpose.msra.mxu0 0
        %2173 = vmatprep.subr.bf16.mxu0 0
        %2174 = vmatpush1.bf16.xpose.msra.mxu0 0
        %2175 = vmatprep.mubr.bf16.mxu0 0
        %2176 = vmatmul.mubr.bf16.gmra.mrb[0].mxu0 %v2138
        %v2177 = vpop.f32.mrb[0].mxu0
        %v2178 = vadd.f32 0.0, %v2177
        %v2179 = vpop.f32.mrb[0].mxu0
        %v2180 = vpop.f32.mrb[0].mxu0
        %v2181 = vpop.f32.mrb[0].mxu0
        %2182 = vdwg.mxu0
        %v2183 = vsel %vm543, %v2178, -inf
        %2184 = vmax.xlane.f32.xlu0 %v2183
        %v2185 = vpop.xlane.xlu0 %2184
        %v2186 = vsub.f32 %v2178, %v2185
        %v2187 = vmul.f32 %v2186, 1.442695
        %v2188 = vpow.pop %v2187
        %v2189 = vsel %vm543, %v2188, 0.0
        %2190 = vadd.xlane.f32.xlu0 %v2189
        %v2191 = vpop.xlane.xlu0 %2190
        %v2192 = vrcp.pop %v2191
        %v2193 = vmul.f32 %v2188, %v2192
        %v2194 = vpack.c.bf16 %v2193, %v2193
        %v2195 = vpack.c.bf16 %v2130, %v2130
        %v2197 = vsel %vm543, %v2194, 0
        %v2200 = vsel %vm560, %v2195, 0
        %2202 = vmatprep.subr.bf16.mxu0 0
        %2203 = vmatpush1.bf16.msra.mxu0 %v2200
        %2204 = vmatprep.subr.bf16.mxu0 0
        %2205 = vmatpush1.bf16.msra.mxu0 0
        %2206 = vmatprep.subr.bf16.mxu0 0
        %2207 = vmatpush1.bf16.msra.mxu0 0
        %2208 = vmatprep.subr.bf16.mxu0 0
        %2209 = vmatpush1.bf16.msra.mxu0 0
        %2210 = vmatprep.subr.bf16.mxu0 0
        %2211 = vmatpush1.bf16.msra.mxu0 0
        %2212 = vmatprep.subr.bf16.mxu0 0
        %2213 = vmatpush1.bf16.msra.mxu0 0
        %2214 = vmatprep.subr.bf16.mxu0 0
        %2215 = vmatpush1.bf16.msra.mxu0 0
        %2216 = vmatprep.subr.bf16.mxu0 0
        %2217 = vmatpush1.bf16.msra.mxu0 0
        %2218 = vmatprep.subr.bf16.mxu0 0
        %2219 = vmatpush1.bf16.msra.mxu0 0
        %2220 = vmatprep.subr.bf16.mxu0 0
        %2221 = vmatpush1.bf16.msra.mxu0 0
        %2222 = vmatprep.subr.bf16.mxu0 0
        %2223 = vmatpush1.bf16.msra.mxu0 0
        %2224 = vmatprep.subr.bf16.mxu0 0
        %2225 = vmatpush1.bf16.msra.mxu0 0
        %2226 = vmatprep.subr.bf16.mxu0 0
        %2227 = vmatpush1.bf16.msra.mxu0 0
        %2228 = vmatprep.subr.bf16.mxu0 0
        %2229 = vmatpush1.bf16.msra.mxu0 0
        %2230 = vmatprep.subr.bf16.mxu0 0
        %2231 = vmatpush1.bf16.msra.mxu0 0
        %2232 = vmatprep.subr.bf16.mxu0 0
        %2233 = vmatpush1.bf16.msra.mxu0 0
        %2234 = vmatprep.mubr.bf16.mxu0 0
        %2235 = vmatmul.mubr.bf16.gmra.mrb[0].mxu0 %v2197
        %v2236 = vpop.f32.mrb[0].mxu0
        %v2237 = vadd.f32 0.0, %v2236
        %v2238 = vpop.f32.mrb[0].mxu0
        %v2239 = vpop.f32.mrb[0].mxu0
        %v2240 = vpop.f32.mrb[0].mxu0
        %2241 = vdwg.mxu0
        %v2242 = vpack.c.bf16 %v2237, %v2237
        %s2243 = scalar_lea.vmem %s5, 10
        %v2244 = vld [vmem:[%s2243] sm:$0x3]
        %v2246 = vsel %vm496, %v2242, 0
        %v2249 = vsel %vm890, %v2244, 0
        %2251 = vmatprep.subr.bf16.mxu0 0
        %2252 = vmatpush1.bf16.msra.mxu0 %v2249
        %2253 = vmatprep.subr.bf16.mxu0 0
        %2254 = vmatpush1.bf16.msra.mxu0 0
        %2255 = vmatprep.subr.bf16.mxu0 0
        %2256 = vmatpush1.bf16.msra.mxu0 0
        %2257 = vmatprep.subr.bf16.mxu0 0
        %2258 = vmatpush1.bf16.msra.mxu0 0
        %2259 = vmatprep.subr.bf16.mxu0 0
        %2260 = vmatpush1.bf16.msra.mxu0 0
        %2261 = vmatprep.subr.bf16.mxu0 0
        %2262 = vmatpush1.bf16.msra.mxu0 0
        %2263 = vmatprep.subr.bf16.mxu0 0
        %2264 = vmatpush1.bf16.msra.mxu0 0
        %2265 = vmatprep.subr.bf16.mxu0 0
        %2266 = vmatpush1.bf16.msra.mxu0 0
        %2267 = vmatprep.subr.bf16.mxu0 0
        %2268 = vmatpush1.bf16.msra.mxu0 0
        %2269 = vmatprep.subr.bf16.mxu0 0
        %2270 = vmatpush1.bf16.msra.mxu0 0
        %2271 = vmatprep.subr.bf16.mxu0 0
        %2272 = vmatpush1.bf16.msra.mxu0 0
        %2273 = vmatprep.subr.bf16.mxu0 0
        %2274 = vmatpush1.bf16.msra.mxu0 0
        %2275 = vmatprep.subr.bf16.mxu0 0
        %2276 = vmatpush1.bf16.msra.mxu0 0
        %2277 = vmatprep.subr.bf16.mxu0 0
        %2278 = vmatpush1.bf16.msra.mxu0 0
        %2279 = vmatprep.subr.bf16.mxu0 0
        %2280 = vmatpush1.bf16.msra.mxu0 0
        %2281 = vmatprep.subr.bf16.mxu0 0
        %2282 = vmatpush1.bf16.msra.mxu0 0
        %2283 = vmatprep.mubr.bf16.mxu0 0
        %2284 = vmatmul.mubr.bf16.gmra.mrb[0].mxu0 %v2246
        %v2285 = vpop.f32.mrb[0].mxu0
        %v2286 = vadd.f32 0.0, %v2285
        %v2287 = vpop.f32.mrb[0].mxu0
        %v2288 = vpop.f32.mrb[0].mxu0
        %v2289 = vpop.f32.mrb[0].mxu0
        %2290 = vdwg.mxu0
        %v2291 = vadd.f32 %v1963, %v2286
        %s2292 = scalar_lea.vmem %s2, 96
        %v2293 = vld [vmem:[%s2292] sm:$0xf]
        %v2294 = vld [vmem:[%s2292 + $0x4] sm:$0xf]
        %v2295 = vld [vmem:[%s2292 + $0x8] sm:$0xf]
        %v2296 = vld [vmem:[%s2292 + $0xc] sm:$0xf]
        %v2301 = vunpack.c.l.b16 %v2293
        %v2302 = vunpack.c.l.b16 %v2294
        %v2303 = vunpack.c.l.b16 %v2295
        %v2304 = vunpack.c.l.b16 %v2296
        %v2305 = vpack.c.b16 %v2302, %v2301
        %v2306 = vpack.c.b16 %v2304, %v2303
        %2309 = vmatprep.subr.bf16.mxu0 0
        %2310 = vmatpush1.bf16.msra.mxu0 %v2305
        %2311 = vmatprep.subr.bf16.mxu0 0
        %2312 = vmatpush1.bf16.msra.mxu0 %v2306
        %2313 = vmatprep.subr.bf16.mxu0 0
        %2314 = vmatpush1.bf16.msra.mxu0 0
        %2315 = vmatprep.subr.bf16.mxu0 0
        %2316 = vmatpush1.bf16.msra.mxu0 0
        %2317 = vmatprep.subr.bf16.mxu0 0
        %2318 = vmatpush1.bf16.msra.mxu0 0
        %2319 = vmatprep.subr.bf16.mxu0 0
        %2320 = vmatpush1.bf16.msra.mxu0 0
        %2321 = vmatprep.subr.bf16.mxu0 0
        %2322 = vmatpush1.bf16.msra.mxu0 0
        %2323 = vmatprep.subr.bf16.mxu0 0
        %2324 = vmatpush1.bf16.msra.mxu0 0
        %2325 = vmatprep.subr.bf16.mxu0 0
        %2326 = vmatpush1.bf16.msra.mxu0 0
        %2327 = vmatprep.subr.bf16.mxu0 0
        %2328 = vmatpush1.bf16.msra.mxu0 0
        %2329 = vmatprep.subr.bf16.mxu0 0
        %2330 = vmatpush1.bf16.msra.mxu0 0
        %2331 = vmatprep.subr.bf16.mxu0 0
        %2332 = vmatpush1.bf16.msra.mxu0 0
        %2333 = vmatprep.subr.bf16.mxu0 0
        %2334 = vmatpush1.bf16.msra.mxu0 0
        %2335 = vmatprep.subr.bf16.mxu0 0
        %2336 = vmatpush1.bf16.msra.mxu0 0
        %2337 = vmatprep.subr.bf16.mxu0 0
        %2338 = vmatpush1.bf16.msra.mxu0 0
        %2339 = vmatprep.subr.bf16.mxu0 0
        %2340 = vmatpush1.bf16.msra.mxu0 0
        %2341 = vmatprep.mubr.bf16.mxu0 0
        %2342 = vmatmul.mubr.bf16.gmra.mrb[0].mxu0 %v337
        %v2343 = vpop.f32.mrb[0].mxu0
        %v2344 = vadd.f32 0.0, %v2343
        %v2345 = vpop.f32.mrb[0].mxu0
        %v2346 = vpop.f32.mrb[0].mxu0
        %v2347 = vpop.f32.mrb[0].mxu0
        %2348 = vdwg.mxu0
        %s2349 = scalar_lea.vmem %s3, 96
        %v2350 = vld [vmem:[%s2349] sm:$0xf]
        %v2351 = vld [vmem:[%s2349 + $0x4] sm:$0xf]
        %v2352 = vld [vmem:[%s2349 + $0x8] sm:$0xf]
        %v2353 = vld [vmem:[%s2349 + $0xc] sm:$0xf]
        %v2358 = vunpack.c.l.b16 %v2350
        %v2359 = vunpack.c.l.b16 %v2351
        %v2360 = vunpack.c.l.b16 %v2352
        %v2361 = vunpack.c.l.b16 %v2353
        %v2362 = vpack.c.b16 %v2359, %v2358
        %v2363 = vpack.c.b16 %v2361, %v2360
        %2366 = vmatprep.subr.bf16.mxu0 0
        %2367 = vmatpush1.bf16.msra.mxu0 %v2362
        %2368 = vmatprep.subr.bf16.mxu0 0
        %2369 = vmatpush1.bf16.msra.mxu0 %v2363
        %2370 = vmatprep.subr.bf16.mxu0 0
        %2371 = vmatpush1.bf16.msra.mxu0 0
        %2372 = vmatprep.subr.bf16.mxu0 0
        %2373 = vmatpush1.bf16.msra.mxu0 0
        %2374 = vmatprep.subr.bf16.mxu0 0
        %2375 = vmatpush1.bf16.msra.mxu0 0
        %2376 = vmatprep.subr.bf16.mxu0 0
        %2377 = vmatpush1.bf16.msra.mxu0 0
        %2378 = vmatprep.subr.bf16.mxu0 0
        %2379 = vmatpush1.bf16.msra.mxu0 0
        %2380 = vmatprep.subr.bf16.mxu0 0
        %2381 = vmatpush1.bf16.msra.mxu0 0
        %2382 = vmatprep.subr.bf16.mxu0 0
        %2383 = vmatpush1.bf16.msra.mxu0 0
        %2384 = vmatprep.subr.bf16.mxu0 0
        %2385 = vmatpush1.bf16.msra.mxu0 0
        %2386 = vmatprep.subr.bf16.mxu0 0
        %2387 = vmatpush1.bf16.msra.mxu0 0
        %2388 = vmatprep.subr.bf16.mxu0 0
        %2389 = vmatpush1.bf16.msra.mxu0 0
        %2390 = vmatprep.subr.bf16.mxu0 0
        %2391 = vmatpush1.bf16.msra.mxu0 0
        %2392 = vmatprep.subr.bf16.mxu0 0
        %2393 = vmatpush1.bf16.msra.mxu0 0
        %2394 = vmatprep.subr.bf16.mxu0 0
        %2395 = vmatpush1.bf16.msra.mxu0 0
        %2396 = vmatprep.subr.bf16.mxu0 0
        %2397 = vmatpush1.bf16.msra.mxu0 0
        %2398 = vmatprep.mubr.bf16.mxu0 0
        %2399 = vmatmul.mubr.bf16.gmra.mrb[0].mxu0 %v396
        %v2400 = vpop.f32.mrb[0].mxu0
        %v2401 = vadd.f32 0.0, %v2400
        %v2402 = vpop.f32.mrb[0].mxu0
        %v2403 = vpop.f32.mrb[0].mxu0
        %v2404 = vpop.f32.mrb[0].mxu0
        %2405 = vdwg.mxu0
        %s2406 = scalar_lea.vmem %s4, 96
        %v2407 = vld [vmem:[%s2406] sm:$0xf]
        %v2408 = vld [vmem:[%s2406 + $0x4] sm:$0xf]
        %v2409 = vld [vmem:[%s2406 + $0x8] sm:$0xf]
        %v2410 = vld [vmem:[%s2406 + $0xc] sm:$0xf]
        %v2415 = vunpack.c.l.b16 %v2407
        %v2416 = vunpack.c.l.b16 %v2408
        %v2417 = vunpack.c.l.b16 %v2409
        %v2418 = vunpack.c.l.b16 %v2410
        %v2419 = vpack.c.b16 %v2416, %v2415
        %v2420 = vpack.c.b16 %v2418, %v2417
        %2423 = vmatprep.subr.bf16.mxu0 0
        %2424 = vmatpush1.bf16.msra.mxu0 %v2419
        %2425 = vmatprep.subr.bf16.mxu0 0
        %2426 = vmatpush1.bf16.msra.mxu0 %v2420
        %2427 = vmatprep.subr.bf16.mxu0 0
        %2428 = vmatpush1.bf16.msra.mxu0 0
        %2429 = vmatprep.subr.bf16.mxu0 0
        %2430 = vmatpush1.bf16.msra.mxu0 0
        %2431 = vmatprep.subr.bf16.mxu0 0
        %2432 = vmatpush1.bf16.msra.mxu0 0
        %2433 = vmatprep.subr.bf16.mxu0 0
        %2434 = vmatpush1.bf16.msra.mxu0 0
        %2435 = vmatprep.subr.bf16.mxu0 0
        %2436 = vmatpush1.bf16.msra.mxu0 0
        %2437 = vmatprep.subr.bf16.mxu0 0
        %2438 = vmatpush1.bf16.msra.mxu0 0
        %2439 = vmatprep.subr.bf16.mxu0 0
        %2440 = vmatpush1.bf16.msra.mxu0 0
        %2441 = vmatprep.subr.bf16.mxu0 0
        %2442 = vmatpush1.bf16.msra.mxu0 0
        %2443 = vmatprep.subr.bf16.mxu0 0
        %2444 = vmatpush1.bf16.msra.mxu0 0
        %2445 = vmatprep.subr.bf16.mxu0 0
        %2446 = vmatpush1.bf16.msra.mxu0 0
        %2447 = vmatprep.subr.bf16.mxu0 0
        %2448 = vmatpush1.bf16.msra.mxu0 0
        %2449 = vmatprep.subr.bf16.mxu0 0
        %2450 = vmatpush1.bf16.msra.mxu0 0
        %2451 = vmatprep.subr.bf16.mxu0 0
        %2452 = vmatpush1.bf16.msra.mxu0 0
        %2453 = vmatprep.subr.bf16.mxu0 0
        %2454 = vmatpush1.bf16.msra.mxu0 0
        %2455 = vmatprep.mubr.bf16.mxu0 0
        %2456 = vmatmul.mubr.bf16.gmra.mrb[0].mxu0 %v396
        %v2457 = vpop.f32.mrb[0].mxu0
        %v2458 = vadd.f32 0.0, %v2457
        %v2459 = vpop.f32.mrb[0].mxu0
        %v2460 = vpop.f32.mrb[0].mxu0
        %v2461 = vpop.f32.mrb[0].mxu0
        %2462 = vdwg.mxu0
        %v2463 = vpack.c.bf16 %v2344, %v2344
        %v2464 = vpack.c.bf16 %v2401, %v2401
        %v2466 = vsel %vm496, %v2463, 0
        %v2469 = vsel %vm496, %v2464, 0
        %2471 = vmatprep.subr.bf16.mxu0 0
        %2472 = vmatpush1.bf16.xpose.msra.mxu0 %v2469
        %2473 = vmatprep.subr.bf16.mxu0 0
        %2474 = vmatpush1.bf16.xpose.msra.mxu0 0
        %2475 = vmatprep.subr.bf16.mxu0 0
        %2476 = vmatpush1.bf16.xpose.msra.mxu0 0
        %2477 = vmatprep.subr.bf16.mxu0 0
        %2478 = vmatpush1.bf16.xpose.msra.mxu0 0
        %2479 = vmatprep.subr.bf16.mxu0 0
        %2480 = vmatpush1.bf16.xpose.msra.mxu0 0
        %2481 = vmatprep.subr.bf16.mxu0 0
        %2482 = vmatpush1.bf16.xpose.msra.mxu0 0
        %2483 = vmatprep.subr.bf16.mxu0 0
        %2484 = vmatpush1.bf16.xpose.msra.mxu0 0
        %2485 = vmatprep.subr.bf16.mxu0 0
        %2486 = vmatpush1.bf16.xpose.msra.mxu0 0
        %2487 = vmatprep.subr.bf16.mxu0 0
        %2488 = vmatpush1.bf16.xpose.msra.mxu0 0
        %2489 = vmatprep.subr.bf16.mxu0 0
        %2490 = vmatpush1.bf16.xpose.msra.mxu0 0
        %2491 = vmatprep.subr.bf16.mxu0 0
        %2492 = vmatpush1.bf16.xpose.msra.mxu0 0
        %2493 = vmatprep.subr.bf16.mxu0 0
        %2494 = vmatpush1.bf16.xpose.msra.mxu0 0
        %2495 = vmatprep.subr.bf16.mxu0 0
        %2496 = vmatpush1.bf16.xpose.msra.mxu0 0
        %2497 = vmatprep.subr.bf16.mxu0 0
        %2498 = vmatpush1.bf16.xpose.msra.mxu0 0
        %2499 = vmatprep.subr.bf16.mxu0 0
        %2500 = vmatpush1.bf16.xpose.msra.mxu0 0
        %2501 = vmatprep.subr.bf16.mxu0 0
        %2502 = vmatpush1.bf16.xpose.msra.mxu0 0
        %2503 = vmatprep.mubr.bf16.mxu0 0
        %2504 = vmatmul.mubr.bf16.gmra.mrb[0].mxu0 %v2466
        %v2505 = vpop.f32.mrb[0].mxu0
        %v2506 = vadd.f32 0.0, %v2505
        %v2507 = vpop.f32.mrb[0].mxu0
        %v2508 = vpop.f32.mrb[0].mxu0
        %v2509 = vpop.f32.mrb[0].mxu0
        %2510 = vdwg.mxu0
        %v2511 = vsel %vm543, %v2506, -inf
        %2512 = vmax.xlane.f32.xlu0 %v2511
        %v2513 = vpop.xlane.xlu0 %2512
        %v2514 = vsub.f32 %v2506, %v2513
        %v2515 = vmul.f32 %v2514, 1.442695
        %v2516 = vpow.pop %v2515
        %v2517 = vsel %vm543, %v2516, 0.0
        %2518 = vadd.xlane.f32.xlu0 %v2517
        %v2519 = vpop.xlane.xlu0 %2518
        %v2520 = vrcp.pop %v2519
        %v2521 = vmul.f32 %v2516, %v2520
        %v2522 = vpack.c.bf16 %v2521, %v2521
        %v2523 = vpack.c.bf16 %v2458, %v2458
        %v2525 = vsel %vm543, %v2522, 0
        %v2528 = vsel %vm560, %v2523, 0
        %2530 = vmatprep.subr.bf16.mxu0 0
        %2531 = vmatpush1.bf16.msra.mxu0 %v2528
        %2532 = vmatprep.subr.bf16.mxu0 0
        %2533 = vmatpush1.bf16.msra.mxu0 0
        %2534 = vmatprep.subr.bf16.mxu0 0
        %2535 = vmatpush1.bf16.msra.mxu0 0
        %2536 = vmatprep.subr.bf16.mxu0 0
        %2537 = vmatpush1.bf16.msra.mxu0 0
        %2538 = vmatprep.subr.bf16.mxu0 0
        %2539 = vmatpush1.bf16.msra.mxu0 0
        %2540 = vmatprep.subr.bf16.mxu0 0
        %2541 = vmatpush1.bf16.msra.mxu0 0
        %2542 = vmatprep.subr.bf16.mxu0 0
        %2543 = vmatpush1.bf16.msra.mxu0 0
        %2544 = vmatprep.subr.bf16.mxu0 0
        %2545 = vmatpush1.bf16.msra.mxu0 0
        %2546 = vmatprep.subr.bf16.mxu0 0
        %2547 = vmatpush1.bf16.msra.mxu0 0
        %2548 = vmatprep.subr.bf16.mxu0 0
        %2549 = vmatpush1.bf16.msra.mxu0 0
        %2550 = vmatprep.subr.bf16.mxu0 0
        %2551 = vmatpush1.bf16.msra.mxu0 0
        %2552 = vmatprep.subr.bf16.mxu0 0
        %2553 = vmatpush1.bf16.msra.mxu0 0
        %2554 = vmatprep.subr.bf16.mxu0 0
        %2555 = vmatpush1.bf16.msra.mxu0 0
        %2556 = vmatprep.subr.bf16.mxu0 0
        %2557 = vmatpush1.bf16.msra.mxu0 0
        %2558 = vmatprep.subr.bf16.mxu0 0
        %2559 = vmatpush1.bf16.msra.mxu0 0
        %2560 = vmatprep.subr.bf16.mxu0 0
        %2561 = vmatpush1.bf16.msra.mxu0 0
        %2562 = vmatprep.mubr.bf16.mxu0 0
        %2563 = vmatmul.mubr.bf16.gmra.mrb[0].mxu0 %v2525
        %v2564 = vpop.f32.mrb[0].mxu0
        %v2565 = vadd.f32 0.0, %v2564
        %v2566 = vpop.f32.mrb[0].mxu0
        %v2567 = vpop.f32.mrb[0].mxu0
        %v2568 = vpop.f32.mrb[0].mxu0
        %2569 = vdwg.mxu0
        %v2570 = vpack.c.bf16 %v2565, %v2565
        %s2571 = scalar_lea.vmem %s5, 12
        %v2572 = vld [vmem:[%s2571] sm:$0x3]
        %v2574 = vsel %vm496, %v2570, 0
        %v2577 = vsel %vm890, %v2572, 0
        %2579 = vmatprep.subr.bf16.mxu0 0
        %2580 = vmatpush1.bf16.msra.mxu0 %v2577
        %2581 = vmatprep.subr.bf16.mxu0 0
        %2582 = vmatpush1.bf16.msra.mxu0 0
        %2583 = vmatprep.subr.bf16.mxu0 0
        %2584 = vmatpush1.bf16.msra.mxu0 0
        %2585 = vmatprep.subr.bf16.mxu0 0
        %2586 = vmatpush1.bf16.msra.mxu0 0
        %2587 = vmatprep.subr.bf16.mxu0 0
        %2588 = vmatpush1.bf16.msra.mxu0 0
        %2589 = vmatprep.subr.bf16.mxu0 0
        %2590 = vmatpush1.bf16.msra.mxu0 0
        %2591 = vmatprep.subr.bf16.mxu0 0
        %2592 = vmatpush1.bf16.msra.mxu0 0
        %2593 = vmatprep.subr.bf16.mxu0 0
        %2594 = vmatpush1.bf16.msra.mxu0 0
        %2595 = vmatprep.subr.bf16.mxu0 0
        %2596 = vmatpush1.bf16.msra.mxu0 0
        %2597 = vmatprep.subr.bf16.mxu0 0
        %2598 = vmatpush1.bf16.msra.mxu0 0
        %2599 = vmatprep.subr.bf16.mxu0 0
        %2600 = vmatpush1.bf16.msra.mxu0 0
        %2601 = vmatprep.subr.bf16.mxu0 0
        %2602 = vmatpush1.bf16.msra.mxu0 0
        %2603 = vmatprep.subr.bf16.mxu0 0
        %2604 = vmatpush1.bf16.msra.mxu0 0
        %2605 = vmatprep.subr.bf16.mxu0 0
        %2606 = vmatpush1.bf16.msra.mxu0 0
        %2607 = vmatprep.subr.bf16.mxu0 0
        %2608 = vmatpush1.bf16.msra.mxu0 0
        %2609 = vmatprep.subr.bf16.mxu0 0
        %2610 = vmatpush1.bf16.msra.mxu0 0
        %2611 = vmatprep.mubr.bf16.mxu0 0
        %2612 = vmatmul.mubr.bf16.gmra.mrb[0].mxu0 %v2574
        %v2613 = vpop.f32.mrb[0].mxu0
        %v2614 = vadd.f32 0.0, %v2613
        %v2615 = vpop.f32.mrb[0].mxu0
        %v2616 = vpop.f32.mrb[0].mxu0
        %v2617 = vpop.f32.mrb[0].mxu0
        %2618 = vdwg.mxu0
        %v2619 = vadd.f32 %v2291, %v2614
        %s2620 = scalar_lea.vmem %s2, 112
        %v2621 = vld [vmem:[%s2620] sm:$0xf]
        %v2622 = vld [vmem:[%s2620 + $0x4] sm:$0xf]
        %v2623 = vld [vmem:[%s2620 + $0x8] sm:$0xf]
        %v2624 = vld [vmem:[%s2620 + $0xc] sm:$0xf]
        %v2629 = vunpack.c.l.b16 %v2621
        %v2630 = vunpack.c.l.b16 %v2622
        %v2631 = vunpack.c.l.b16 %v2623
        %v2632 = vunpack.c.l.b16 %v2624
        %v2633 = vpack.c.b16 %v2630, %v2629
        %v2634 = vpack.c.b16 %v2632, %v2631
        %2637 = vmatprep.subr.bf16.mxu0 0
        %2638 = vmatpush1.bf16.msra.mxu0 %v2633
        %2639 = vmatprep.subr.bf16.mxu0 0
        %2640 = vmatpush1.bf16.msra.mxu0 %v2634
        %2641 = vmatprep.subr.bf16.mxu0 0
        %2642 = vmatpush1.bf16.msra.mxu0 0
        %2643 = vmatprep.subr.bf16.mxu0 0
        %2644 = vmatpush1.bf16.msra.mxu0 0
        %2645 = vmatprep.subr.bf16.mxu0 0
        %2646 = vmatpush1.bf16.msra.mxu0 0
        %2647 = vmatprep.subr.bf16.mxu0 0
        %2648 = vmatpush1.bf16.msra.mxu0 0
        %2649 = vmatprep.subr.bf16.mxu0 0
        %2650 = vmatpush1.bf16.msra.mxu0 0
        %2651 = vmatprep.subr.bf16.mxu0 0
        %2652 = vmatpush1.bf16.msra.mxu0 0
        %2653 = vmatprep.subr.bf16.mxu0 0
        %2654 = vmatpush1.bf16.msra.mxu0 0
        %2655 = vmatprep.subr.bf16.mxu0 0
        %2656 = vmatpush1.bf16.msra.mxu0 0
        %2657 = vmatprep.subr.bf16.mxu0 0
        %2658 = vmatpush1.bf16.msra.mxu0 0
        %2659 = vmatprep.subr.bf16.mxu0 0
        %2660 = vmatpush1.bf16.msra.mxu0 0
        %2661 = vmatprep.subr.bf16.mxu0 0
        %2662 = vmatpush1.bf16.msra.mxu0 0
        %2663 = vmatprep.subr.bf16.mxu0 0
        %2664 = vmatpush1.bf16.msra.mxu0 0
        %2665 = vmatprep.subr.bf16.mxu0 0
        %2666 = vmatpush1.bf16.msra.mxu0 0
        %2667 = vmatprep.subr.bf16.mxu0 0
        %2668 = vmatpush1.bf16.msra.mxu0 0
        %2669 = vmatprep.mubr.bf16.mxu0 0
        %2670 = vmatmul.mubr.bf16.gmra.mrb[0].mxu0 %v337
        %v2671 = vpop.f32.mrb[0].mxu0
        %v2672 = vadd.f32 0.0, %v2671
        %v2673 = vpop.f32.mrb[0].mxu0
        %v2674 = vpop.f32.mrb[0].mxu0
        %v2675 = vpop.f32.mrb[0].mxu0
        %2676 = vdwg.mxu0
        %s2677 = scalar_lea.vmem %s3, 112
        %v2678 = vld [vmem:[%s2677] sm:$0xf]
        %v2679 = vld [vmem:[%s2677 + $0x4] sm:$0xf]
        %v2680 = vld [vmem:[%s2677 + $0x8] sm:$0xf]
        %v2681 = vld [vmem:[%s2677 + $0xc] sm:$0xf]
        %v2686 = vunpack.c.l.b16 %v2678
        %v2687 = vunpack.c.l.b16 %v2679
        %v2688 = vunpack.c.l.b16 %v2680
        %v2689 = vunpack.c.l.b16 %v2681
        %v2690 = vpack.c.b16 %v2687, %v2686
        %v2691 = vpack.c.b16 %v2689, %v2688
        %2694 = vmatprep.subr.bf16.mxu0 0
        %2695 = vmatpush1.bf16.msra.mxu0 %v2690
        %2696 = vmatprep.subr.bf16.mxu0 0
        %2697 = vmatpush1.bf16.msra.mxu0 %v2691
        %2698 = vmatprep.subr.bf16.mxu0 0
        %2699 = vmatpush1.bf16.msra.mxu0 0
        %2700 = vmatprep.subr.bf16.mxu0 0
        %2701 = vmatpush1.bf16.msra.mxu0 0
        %2702 = vmatprep.subr.bf16.mxu0 0
        %2703 = vmatpush1.bf16.msra.mxu0 0
        %2704 = vmatprep.subr.bf16.mxu0 0
        %2705 = vmatpush1.bf16.msra.mxu0 0
        %2706 = vmatprep.subr.bf16.mxu0 0
        %2707 = vmatpush1.bf16.msra.mxu0 0
        %2708 = vmatprep.subr.bf16.mxu0 0
        %2709 = vmatpush1.bf16.msra.mxu0 0
        %2710 = vmatprep.subr.bf16.mxu0 0
        %2711 = vmatpush1.bf16.msra.mxu0 0
        %2712 = vmatprep.subr.bf16.mxu0 0
        %2713 = vmatpush1.bf16.msra.mxu0 0
        %2714 = vmatprep.subr.bf16.mxu0 0
        %2715 = vmatpush1.bf16.msra.mxu0 0
        %2716 = vmatprep.subr.bf16.mxu0 0
        %2717 = vmatpush1.bf16.msra.mxu0 0
        %2718 = vmatprep.subr.bf16.mxu0 0
        %2719 = vmatpush1.bf16.msra.mxu0 0
        %2720 = vmatprep.subr.bf16.mxu0 0
        %2721 = vmatpush1.bf16.msra.mxu0 0
        %2722 = vmatprep.subr.bf16.mxu0 0
        %2723 = vmatpush1.bf16.msra.mxu0 0
        %2724 = vmatprep.subr.bf16.mxu0 0
        %2725 = vmatpush1.bf16.msra.mxu0 0
        %2726 = vmatprep.mubr.bf16.mxu0 0
        %2727 = vmatmul.mubr.bf16.gmra.mrb[0].mxu0 %v396
        %v2728 = vpop.f32.mrb[0].mxu0
        %v2729 = vadd.f32 0.0, %v2728
        %v2730 = vpop.f32.mrb[0].mxu0
        %v2731 = vpop.f32.mrb[0].mxu0
        %v2732 = vpop.f32.mrb[0].mxu0
        %2733 = vdwg.mxu0
        %s2734 = scalar_lea.vmem %s4, 112
        %v2735 = vld [vmem:[%s2734] sm:$0xf]
        %v2736 = vld [vmem:[%s2734 + $0x4] sm:$0xf]
        %v2737 = vld [vmem:[%s2734 + $0x8] sm:$0xf]
        %v2738 = vld [vmem:[%s2734 + $0xc] sm:$0xf]
        %v2743 = vunpack.c.l.b16 %v2735
        %v2744 = vunpack.c.l.b16 %v2736
        %v2745 = vunpack.c.l.b16 %v2737
        %v2746 = vunpack.c.l.b16 %v2738
        %v2747 = vpack.c.b16 %v2744, %v2743
        %v2748 = vpack.c.b16 %v2746, %v2745
        %2751 = vmatprep.subr.bf16.mxu0 0
        %2752 = vmatpush1.bf16.msra.mxu0 %v2747
        %2753 = vmatprep.subr.bf16.mxu0 0
        %2754 = vmatpush1.bf16.msra.mxu0 %v2748
        %2755 = vmatprep.subr.bf16.mxu0 0
        %2756 = vmatpush1.bf16.msra.mxu0 0
        %2757 = vmatprep.subr.bf16.mxu0 0
        %2758 = vmatpush1.bf16.msra.mxu0 0
        %2759 = vmatprep.subr.bf16.mxu0 0
        %2760 = vmatpush1.bf16.msra.mxu0 0
        %2761 = vmatprep.subr.bf16.mxu0 0
        %2762 = vmatpush1.bf16.msra.mxu0 0
        %2763 = vmatprep.subr.bf16.mxu0 0
        %2764 = vmatpush1.bf16.msra.mxu0 0
        %2765 = vmatprep.subr.bf16.mxu0 0
        %2766 = vmatpush1.bf16.msra.mxu0 0
        %2767 = vmatprep.subr.bf16.mxu0 0
        %2768 = vmatpush1.bf16.msra.mxu0 0
        %2769 = vmatprep.subr.bf16.mxu0 0
        %2770 = vmatpush1.bf16.msra.mxu0 0
        %2771 = vmatprep.subr.bf16.mxu0 0
        %2772 = vmatpush1.bf16.msra.mxu0 0
        %2773 = vmatprep.subr.bf16.mxu0 0
        %2774 = vmatpush1.bf16.msra.mxu0 0
        %2775 = vmatprep.subr.bf16.mxu0 0
        %2776 = vmatpush1.bf16.msra.mxu0 0
        %2777 = vmatprep.subr.bf16.mxu0 0
        %2778 = vmatpush1.bf16.msra.mxu0 0
        %2779 = vmatprep.subr.bf16.mxu0 0
        %2780 = vmatpush1.bf16.msra.mxu0 0
        %2781 = vmatprep.subr.bf16.mxu0 0
        %2782 = vmatpush1.bf16.msra.mxu0 0
        %2783 = vmatprep.mubr.bf16.mxu0 0
        %2784 = vmatmul.mubr.bf16.gmra.mrb[0].mxu0 %v396
        %v2785 = vpop.f32.mrb[0].mxu0
        %v2786 = vadd.f32 0.0, %v2785
        %v2787 = vpop.f32.mrb[0].mxu0
        %v2788 = vpop.f32.mrb[0].mxu0
        %v2789 = vpop.f32.mrb[0].mxu0
        %2790 = vdwg.mxu0
        %v2791 = vpack.c.bf16 %v2672, %v2672
        %v2792 = vpack.c.bf16 %v2729, %v2729
        %v2794 = vsel %vm496, %v2791, 0
        %v2797 = vsel %vm496, %v2792, 0
        %2799 = vmatprep.subr.bf16.mxu0 0
        %2800 = vmatpush1.bf16.xpose.msra.mxu0 %v2797
        %2801 = vmatprep.subr.bf16.mxu0 0
        %2802 = vmatpush1.bf16.xpose.msra.mxu0 0
        %2803 = vmatprep.subr.bf16.mxu0 0
        %2804 = vmatpush1.bf16.xpose.msra.mxu0 0
        %2805 = vmatprep.subr.bf16.mxu0 0
        %2806 = vmatpush1.bf16.xpose.msra.mxu0 0
        %2807 = vmatprep.subr.bf16.mxu0 0
        %2808 = vmatpush1.bf16.xpose.msra.mxu0 0
        %2809 = vmatprep.subr.bf16.mxu0 0
        %2810 = vmatpush1.bf16.xpose.msra.mxu0 0
        %2811 = vmatprep.subr.bf16.mxu0 0
        %2812 = vmatpush1.bf16.xpose.msra.mxu0 0
        %2813 = vmatprep.subr.bf16.mxu0 0
        %2814 = vmatpush1.bf16.xpose.msra.mxu0 0
        %2815 = vmatprep.subr.bf16.mxu0 0
        %2816 = vmatpush1.bf16.xpose.msra.mxu0 0
        %2817 = vmatprep.subr.bf16.mxu0 0
        %2818 = vmatpush1.bf16.xpose.msra.mxu0 0
        %2819 = vmatprep.subr.bf16.mxu0 0
        %2820 = vmatpush1.bf16.xpose.msra.mxu0 0
        %2821 = vmatprep.subr.bf16.mxu0 0
        %2822 = vmatpush1.bf16.xpose.msra.mxu0 0
        %2823 = vmatprep.subr.bf16.mxu0 0
        %2824 = vmatpush1.bf16.xpose.msra.mxu0 0
        %2825 = vmatprep.subr.bf16.mxu0 0
        %2826 = vmatpush1.bf16.xpose.msra.mxu0 0
        %2827 = vmatprep.subr.bf16.mxu0 0
        %2828 = vmatpush1.bf16.xpose.msra.mxu0 0
        %2829 = vmatprep.subr.bf16.mxu0 0
        %2830 = vmatpush1.bf16.xpose.msra.mxu0 0
        %2831 = vmatprep.mubr.bf16.mxu0 0
        %2832 = vmatmul.mubr.bf16.gmra.mrb[0].mxu0 %v2794
        %v2833 = vpop.f32.mrb[0].mxu0
        %v2834 = vadd.f32 0.0, %v2833
        %v2835 = vpop.f32.mrb[0].mxu0
        %v2836 = vpop.f32.mrb[0].mxu0
        %v2837 = vpop.f32.mrb[0].mxu0
        %2838 = vdwg.mxu0
        %v2839 = vsel %vm543, %v2834, -inf
        %2840 = vmax.xlane.f32.xlu0 %v2839
        %v2841 = vpop.xlane.xlu0 %2840
        %v2842 = vsub.f32 %v2834, %v2841
        %v2843 = vmul.f32 %v2842, 1.442695
        %v2844 = vpow.pop %v2843
        %v2845 = vsel %vm543, %v2844, 0.0
        %2846 = vadd.xlane.f32.xlu0 %v2845
        %v2847 = vpop.xlane.xlu0 %2846
        %v2848 = vrcp.pop %v2847
        %v2849 = vmul.f32 %v2844, %v2848
        %v2850 = vpack.c.bf16 %v2849, %v2849
        %v2851 = vpack.c.bf16 %v2786, %v2786
        %v2853 = vsel %vm543, %v2850, 0
        %v2856 = vsel %vm560, %v2851, 0
        %2858 = vmatprep.subr.bf16.mxu0 0
        %2859 = vmatpush1.bf16.msra.mxu0 %v2856
        %2860 = vmatprep.subr.bf16.mxu0 0
        %2861 = vmatpush1.bf16.msra.mxu0 0
        %2862 = vmatprep.subr.bf16.mxu0 0
        %2863 = vmatpush1.bf16.msra.mxu0 0
        %2864 = vmatprep.subr.bf16.mxu0 0
        %2865 = vmatpush1.bf16.msra.mxu0 0
        %2866 = vmatprep.subr.bf16.mxu0 0
        %2867 = vmatpush1.bf16.msra.mxu0 0
        %2868 = vmatprep.subr.bf16.mxu0 0
        %2869 = vmatpush1.bf16.msra.mxu0 0
        %2870 = vmatprep.subr.bf16.mxu0 0
        %2871 = vmatpush1.bf16.msra.mxu0 0
        %2872 = vmatprep.subr.bf16.mxu0 0
        %2873 = vmatpush1.bf16.msra.mxu0 0
        %2874 = vmatprep.subr.bf16.mxu0 0
        %2875 = vmatpush1.bf16.msra.mxu0 0
        %2876 = vmatprep.subr.bf16.mxu0 0
        %2877 = vmatpush1.bf16.msra.mxu0 0
        %2878 = vmatprep.subr.bf16.mxu0 0
        %2879 = vmatpush1.bf16.msra.mxu0 0
        %2880 = vmatprep.subr.bf16.mxu0 0
        %2881 = vmatpush1.bf16.msra.mxu0 0
        %2882 = vmatprep.subr.bf16.mxu0 0
        %2883 = vmatpush1.bf16.msra.mxu0 0
        %2884 = vmatprep.subr.bf16.mxu0 0
        %2885 = vmatpush1.bf16.msra.mxu0 0
        %2886 = vmatprep.subr.bf16.mxu0 0
        %2887 = vmatpush1.bf16.msra.mxu0 0
        %2888 = vmatprep.subr.bf16.mxu0 0
        %2889 = vmatpush1.bf16.msra.mxu0 0
        %2890 = vmatprep.mubr.bf16.mxu0 0
        %2891 = vmatmul.mubr.bf16.gmra.mrb[0].mxu0 %v2853
        %v2892 = vpop.f32.mrb[0].mxu0
        %v2893 = vadd.f32 0.0, %v2892
        %v2894 = vpop.f32.mrb[0].mxu0
        %v2895 = vpop.f32.mrb[0].mxu0
        %v2896 = vpop.f32.mrb[0].mxu0
        %2897 = vdwg.mxu0
        %v2898 = vpack.c.bf16 %v2893, %v2893
        %s2899 = scalar_lea.vmem %s5, 14
        %v2900 = vld [vmem:[%s2899] sm:$0x3]
        %v2902 = vsel %vm496, %v2898, 0
        %v2905 = vsel %vm890, %v2900, 0
        %2907 = vmatprep.subr.bf16.mxu0 0
        %2908 = vmatpush1.bf16.msra.mxu0 %v2905
        %2909 = vmatprep.subr.bf16.mxu0 0
        %2910 = vmatpush1.bf16.msra.mxu0 0
        %2911 = vmatprep.subr.bf16.mxu0 0
        %2912 = vmatpush1.bf16.msra.mxu0 0
        %2913 = vmatprep.subr.bf16.mxu0 0
        %2914 = vmatpush1.bf16.msra.mxu0 0
        %2915 = vmatprep.subr.bf16.mxu0 0
        %2916 = vmatpush1.bf16.msra.mxu0 0
        %2917 = vmatprep.subr.bf16.mxu0 0
        %2918 = vmatpush1.bf16.msra.mxu0 0
        %2919 = vmatprep.subr.bf16.mxu0 0
        %2920 = vmatpush1.bf16.msra.mxu0 0
        %2921 = vmatprep.subr.bf16.mxu0 0
        %2922 = vmatpush1.bf16.msra.mxu0 0
        %2923 = vmatprep.subr.bf16.mxu0 0
        %2924 = vmatpush1.bf16.msra.mxu0 0
        %2925 = vmatprep.subr.bf16.mxu0 0
        %2926 = vmatpush1.bf16.msra.mxu0 0
        %2927 = vmatprep.subr.bf16.mxu0 0
        %2928 = vmatpush1.bf16.msra.mxu0 0
        %2929 = vmatprep.subr.bf16.mxu0 0
        %2930 = vmatpush1.bf16.msra.mxu0 0
        %2931 = vmatprep.subr.bf16.mxu0 0
        %2932 = vmatpush1.bf16.msra.mxu0 0
        %2933 = vmatprep.subr.bf16.mxu0 0
        %2934 = vmatpush1.bf16.msra.mxu0 0
        %2935 = vmatprep.subr.bf16.mxu0 0
        %2936 = vmatpush1.bf16.msra.mxu0 0
        %2937 = vmatprep.subr.bf16.mxu0 0
        %2938 = vmatpush1.bf16.msra.mxu0 0
        %2939 = vmatprep.mubr.bf16.mxu0 0
        %2940 = vmatmul.mubr.bf16.gmra.mrb[0].mxu0 %v2902
        %v2941 = vpop.f32.mrb[0].mxu0
        %v2942 = vadd.f32 0.0, %v2941
        %v2943 = vpop.f32.mrb[0].mxu0
        %v2944 = vpop.f32.mrb[0].mxu0
        %v2945 = vpop.f32.mrb[0].mxu0
        %2946 = vdwg.mxu0
        %v2947 = vadd.f32 %v2619, %v2942
        %v2948 = vld [vmem:[%s6] sm:$0x1]
        %v2950 = vlaneseq
        %v2951 = vshrl.u32 %v2950, 7
        %v2952 = vsub.s32 0, %v2951
        %v2953 = vrot.slane %v2948, %v2952
        %v2955 = vadd.f32 %v2947, %v2953
        %2956 = vst.msk [vmem:[%s304] sm:$0xff] %vm335, %v2955
        %s2957 = sand.u32 %s202, 1
        %s2958 = scalar_lea.sflag [#allocation3], %s2957
        %s2959 = sand.u32 %s202, 1
        %s2960 = smul.addr %s2959, 8
        %s2961 = scalar_lea.vmem [#allocation2], %s2960
        // Predicated region
        $region49: #{tpu_custom_call.1} parent=47 // pred_check
          %p2962 = pneg %p212
        $region50: #{tpu_custom_call.1} parent=47 // pred_check_branch
          %2964 = sbr.rel (%p2962) target = $region52
        $region51: #{tpu_custom_call.1} parent=47 // pred_region
          %s2966 = ssub.s32 128, 128
          %2967 = vsyncadd %s2958, %s2966
          %s2968 = sadd.s32 %s26, %s25
          %s2969 = smul.addr %s2968, 128
          %s2970 = scalar_lea.hbm %s7, %s2969
          %s2972 = sshll.u32 %s2961, 4
          %s2973 = int_to_ptr.vmem [resolvable:$true] %s2972
          %2975 = dma.vmem_to_hbm [thread:$0]  %s2973, 128, %s2970, %s2958
        $region52: #{tpu_custom_call.1} parent=47 // pred_fallthru
          _
      $region48: #{tpu_custom_call.1} parent=5 // pred_fallthru
        _
      %p2976 = scmp.le.s32.totalorder 2, %s16
      // Predicated region
      $region53: #{tpu_custom_call.1} parent=5 // pred_check
        %p2977 = pneg %p2976
      $region54: #{tpu_custom_call.1} parent=5 // pred_check_branch
        %2979 = sbr.rel (%p2977) target = $region56
      $region55: #{tpu_custom_call.1} parent=5 // pred_region
        %s2980 = ssub.s32 %s16, 2
        // Predicated region
        $region57: #{tpu_custom_call.1} parent=55 // pred_check
          %p2981 = pneg %p218
        $region58: #{tpu_custom_call.1} parent=55 // pred_check_branch
          %2983 = sbr.rel (%p2981) target = $region60
        $region59: #{tpu_custom_call.1} parent=55 // pred_region
          %s2984 = sand.u32 %s203, 1
          %s2985 = scalar_lea.sflag [#allocation3], %s2984
          %s2986 = sand.u32 %s203, 1
          %s2987 = smul.addr %s2986, 8
          %s2988 = scalar_lea.vmem [#allocation2], %s2987
          %2989 = dma.done %s2985, 128
        $region60: #{tpu_custom_call.1} parent=55 // pred_fallthru
          _
      $region56: #{tpu_custom_call.1} parent=5 // pred_fallthru
        _
    $region6: #{tpu_custom_call.1} parent=1 // loop_footer
      %s20 = sadd.s32 1, %s16
    $region7: #{tpu_custom_call.1} parent=1 // loop_footer_branch
      %15 = sbr.rel target = $region3
    $region8: #{tpu_custom_call.1} parent=1 // loop_exit
      _
    %2990 = vsyncpa [#allocation3], 1
    %s2991 = scalar_lea.sflag [#allocation3], 1
    %2992 = vsyncpa %s2991, 1

</llo_original>
